<compile_context>
chip_gen: v6e
topology: v6e:2x2x1
jax: 0.10.0
libtpu: 0.0.40
codegen_flags: <defaults>
</compile_context>

<pallas_src>
import jax
import jax.numpy as jnp
from jax.experimental import pallas as pl
from jax.experimental.pallas import tpu as pltpu

HIDDEN = 768   # bert-base hidden size (input to fc1)
FC1 = 512      # fc1 output size
NCLS = 2       # fc2 output size (num classes)
NPAD = 128     # lane-dense padded logit width
NEG = -1e30    # effective -inf for padded logit lanes (avoids inf arithmetic)
SUB = 16       # bf16 sublane packing (batch tile granularity)
MAX_TB = 512   # batch tile cap (fits v5e's 16 MiB scoped-VMEM default)


def _bert_head_kernel(x_ref, wp_ref, bp_ref, w1_ref, b1_ref, w2_ref, b2_ref,
                      out_ref):
    """Fused: pooler(dense+tanh) -> fc1 -> relu -> fc2(padded) -> log_softmax."""
    x = x_ref[...]                                                # [TB, 768] bf16

    # BERT pooler: tanh(x @ Wp + bp)  -> "pooler_output"          [TB, 768] f32
    pooled = jnp.tanh(
        jnp.dot(x, wp_ref[...], preferred_element_type=jnp.float32) + bp_ref[...])

    # fc1 + ReLU                                                  [TB, 512] f32
    h = jnp.dot(pooled.astype(jnp.bfloat16), w1_ref[...],
                preferred_element_type=jnp.float32) + b1_ref[...]
    h = jnp.maximum(h, 0.0)

    # nn.Dropout(p=0.1): identity at inference time (module.eval()).

    # fc2 (padded to 128 lanes; padded cols have zero weights, -1e30 bias)
    logits = jnp.dot(h.astype(jnp.bfloat16), w2_ref[...],
                     preferred_element_type=jnp.float32) + b2_ref[...]  # [TB,128]

    # LogSoftmax over dim=1 (padded lanes contribute exp(.)==0 exactly)
    m = jnp.max(logits, axis=-1, keepdims=True)
    z = logits - m
    lse = jnp.log(jnp.sum(jnp.exp(z), axis=-1, keepdims=True))
    out_ref[...] = z - lse                                        # lane-dense store


def _round_up(x, m):
    return (x + m - 1) // m * m


def _pick_tiling(batch):
    """Padded batch / tile / num-tiles.  Tile is a multiple of 16 (bf16 packing),
    capped at 512, and chosen so there are >=2 grid steps when the batch allows
    it (lets the 'parallel' axis shard across v7x's two TensorCores)."""
    b_pad = _round_up(batch, SUB)
    if b_pad >= 2 * SUB:
        tb = min(MAX_TB, _round_up(b_pad // 2, SUB))
    else:
        tb = b_pad
    b_pad = _round_up(b_pad, tb)
    return b_pad, tb, b_pad // tb


def bert_arch_forward(sent_id, mask, params):
    """Mirrors BERT_Arch.forward(sent_id, mask) -> log-probs [B, 2]."""
    # ---- glue (plain JAX): synthetic BERT body producing the CLS hidden ----
    emb = params["tok_emb"][sent_id]                              # [B, S, 768]
    emb = emb + params["pos_emb"][None, : sent_id.shape[1], :]
    m = mask.astype(jnp.float32)[..., None]                       # [B, S, 1]
    denom = jnp.maximum(jnp.sum(m, axis=1), 1.0)                  # [B, 1]
    ctx = jnp.sum(emb * m, axis=1) / denom                        # [B, 768]
    cls_in = emb[:, 0, :] + ctx                                   # [B, 768]

    B = cls_in.shape[0]
    b_pad, tb, nb = _pick_tiling(B)
    if b_pad != B:
        cls_in = jnp.pad(cls_in, ((0, b_pad - B), (0, 0)))
    # bf16 at the pallas_call boundary: halves activation DMA; the cast fuses
    # into the XLA pooling reduction.  MXU still accumulates in f32.
    cls_in = cls_in.astype(jnp.bfloat16)

    def w_spec(shape):
        # Constant block index -> weights stay VMEM-resident across batch tiles;
        # single-buffered (no point double-buffering a block that never moves).
        return pl.BlockSpec(shape, lambda i: (0, 0), pipeline_mode=pl.Buffered(1))

    # Advisory cost so XLA overlaps the one-off weight DMA with the glue above.
    weight_bytes = ((HIDDEN * HIDDEN + HIDDEN * FC1 + FC1 * NPAD) * 2
                    + (HIDDEN + FC1 + NPAD) * 4)
    cost = pl.CostEstimate(
        flops=2 * b_pad * (HIDDEN * HIDDEN + HIDDEN * FC1 + FC1 * NPAD),
        transcendentals=b_pad * (HIDDEN + NPAD + 1),
        bytes_accessed=weight_bytes + b_pad * HIDDEN * 2 + b_pad * NPAD * 4)

    out_full = pl.pallas_call(
        _bert_head_kernel,
        out_shape=jax.ShapeDtypeStruct((b_pad, NPAD), jnp.float32),
        grid=(nb,),
        in_specs=[
            pl.BlockSpec((tb, HIDDEN), lambda i: (i, 0)),   # activations (bf16)
            w_spec((HIDDEN, HIDDEN)),                       # wp (bf16)
            w_spec((1, HIDDEN)),                            # bp (f32)
            w_spec((HIDDEN, FC1)),                          # w1 (bf16)
            w_spec((1, FC1)),                               # b1 (f32)
            w_spec((FC1, NPAD)),                            # w2 padded (bf16)
            w_spec((1, NPAD)),                              # b2 padded (f32)
        ],
        out_specs=pl.BlockSpec((tb, NPAD), lambda i: (i, 0)),
        compiler_params=pltpu.CompilerParams(
            dimension_semantics=("parallel",)),
        cost_estimate=cost,
    )(cls_in, params["wp"], params["bp"], params["w1"], params["b1"],
      params["w2p"], params["b2p"])

    return out_full[:B, :NCLS]


def init_params(key, vocab_size=1000, max_seq=16):
    ks = jax.random.split(key, 7)
    s = 0.02
    w2 = jax.random.normal(ks[5], (FC1, NCLS), jnp.float32) * s
    b2 = jax.random.normal(ks[6], (1, NCLS), jnp.float32) * s
    # fc2 padded to 128 output lanes: zero weights / -1e30 bias outside [:2].
    w2p = (jnp.zeros((FC1, NPAD), jnp.float32)
           .at[:, :NCLS].set(w2).astype(jnp.bfloat16))
    b2p = jnp.full((1, NPAD), NEG, jnp.float32).at[:, :NCLS].set(b2)
    return {
        "tok_emb": jax.random.normal(ks[0], (vocab_size, HIDDEN), jnp.float32) * s,
        "pos_emb": jax.random.normal(ks[1], (max_seq, HIDDEN), jnp.float32) * s,
        # BERT pooler dense (768 -> 768), weights bf16
        "wp": (jax.random.normal(ks[2], (HIDDEN, HIDDEN), jnp.float32) * s
               ).astype(jnp.bfloat16),
        "bp": jnp.zeros((1, HIDDEN), jnp.float32),
        # fc1: Linear(768, 512), weights bf16
        "w1": (jax.random.normal(ks[3], (HIDDEN, FC1), jnp.float32) * s
               ).astype(jnp.bfloat16),
        "b1": jax.random.normal(ks[4], (1, FC1), jnp.float32) * s,
        # fc2 (padded): Linear(512, 2) -> (512, 128)
        "w2p": w2p,
        "b2p": b2p,
    }


def _reference_forward(sent_id, mask, params):
    """Pure-JAX reference of the same (bf16-weight/activation) math."""
    emb = params["tok_emb"][sent_id]
    emb = emb + params["pos_emb"][None, : sent_id.shape[1], :]
    m = mask.astype(jnp.float32)[..., None]
    ctx = jnp.sum(emb * m, axis=1) / jnp.maximum(jnp.sum(m, axis=1), 1.0)
    cls_in = (emb[:, 0, :] + ctx).astype(jnp.bfloat16)
    pooled = jnp.tanh(
        jnp.dot(cls_in, params["wp"],
                preferred_element_type=jnp.float32) + params["bp"])
    h = jnp.maximum(
        jnp.dot(pooled.astype(jnp.bfloat16), params["w1"],
                preferred_element_type=jnp.float32) + params["b1"], 0.0)
    logits = (jnp.dot(h.astype(jnp.bfloat16), params["w2p"],
                      preferred_element_type=jnp.float32)
              + params["b2p"])[:, :NCLS]
    return jax.nn.log_softmax(logits, axis=1)


if __name__ == "__main__":
    B, S = 2, 8
    key = jax.random.PRNGKey(0)
    k_params, k_ids = jax.random.split(key)

    params = init_params(k_params)
    sent_id = jax.random.randint(k_ids, (B, S), 0, 1000, dtype=jnp.int32)
    # attention mask: second example has 2 padding tokens
    mask = jnp.array([[1, 1, 1, 1, 1, 1, 1, 1],
                      [1, 1, 1, 1, 1, 1, 0, 0]], dtype=jnp.int32)

    out = bert_arch_forward(sent_id, mask, params)
    out = jax.block_until_ready(out)

    ref = _reference_forward(sent_id, mask, params)
    assert out.shape == (B, NCLS) and out.dtype == jnp.float32
    assert jnp.allclose(out, ref, atol=2e-3, rtol=2e-3), "mismatch vs reference"

    print("KERNEL_OK")
</pallas_src>

<mosaic_0001>
module attributes {stable_mosaic.version = 11 : i64} {
  func.func @_bert_head_kernel(%arg0: i32, %arg1: memref<16x768xbf16, #tpu.memory_space<vmem>>, %arg2: memref<768x768xbf16, #tpu.memory_space<vmem>>, %arg3: memref<1x768xf32, #tpu.memory_space<vmem>>, %arg4: memref<768x512xbf16, #tpu.memory_space<vmem>>, %arg5: memref<1x512xf32, #tpu.memory_space<vmem>>, %arg6: memref<512x128xbf16, #tpu.memory_space<vmem>>, %arg7: memref<1x128xf32, #tpu.memory_space<vmem>>, %arg8: memref<16x128xf32, #tpu.memory_space<vmem>>) attributes {dimension_semantics = [#tpu.dimension_semantics<parallel>], iteration_bounds = array<i64: 1>, scalar_prefetch = 0 : i64, scratch_operands = 0 : i64, tpu.core_type = #tpu.core_type<tc>, window_params = [{transform_indices = @transform_0, window_bounds = array<i64: 16, 768>}, {pipeline_mode = #tpu.pipeline_mode<synchronous>, transform_indices = @transform_1, window_bounds = array<i64: 768, 768>}, {pipeline_mode = #tpu.pipeline_mode<synchronous>, transform_indices = @transform_2, window_bounds = array<i64: 1, 768>}, {pipeline_mode = #tpu.pipeline_mode<synchronous>, transform_indices = @transform_3, window_bounds = array<i64: 768, 512>}, {pipeline_mode = #tpu.pipeline_mode<synchronous>, transform_indices = @transform_4, window_bounds = array<i64: 1, 512>}, {pipeline_mode = #tpu.pipeline_mode<synchronous>, transform_indices = @transform_5, window_bounds = array<i64: 512, 128>}, {pipeline_mode = #tpu.pipeline_mode<synchronous>, transform_indices = @transform_6, window_bounds = array<i64: 1, 128>}, {transform_indices = @transform_7, window_bounds = array<i64: 16, 128>}]} {
    %c0 = arith.constant 0 : index
    %c0_0 = arith.constant 0 : index
    %0 = vector.load %arg1[%c0, %c0_0] : memref<16x768xbf16, #tpu.memory_space<vmem>>, vector<16x768xbf16>
    %c0_1 = arith.constant 0 : index
    %c0_2 = arith.constant 0 : index
    %1 = vector.load %arg2[%c0_1, %c0_2] : memref<768x768xbf16, #tpu.memory_space<vmem>>, vector<768x768xbf16>
    %cst = arith.constant dense<0.000000e+00> : vector<16x768xf32>
    %2 = tpu.matmul %0, %1, %cst {dimension_numbers = #tpu.dot_dimension_numbers<[1], [0], [0], [1], [0, 0, 1, 1], [], []>} : vector<16x768xbf16>, vector<768x768xbf16>, vector<16x768xf32> -> vector<16x768xf32>
    %c0_3 = arith.constant 0 : index
    %c0_4 = arith.constant 0 : index
    %3 = vector.load %arg3[%c0_3, %c0_4] : memref<1x768xf32, #tpu.memory_space<vmem>>, vector<1x768xf32>
    %4 = vector.broadcast %3 : vector<1x768xf32> to vector<16x768xf32>
    %5 = arith.addf %2, %4 : vector<16x768xf32>
    %6 = math.tanh %5 : vector<16x768xf32>
    %7 = arith.truncf %6 : vector<16x768xf32> to vector<16x768xbf16>
    %c0_5 = arith.constant 0 : index
    %c0_6 = arith.constant 0 : index
    %8 = vector.load %arg4[%c0_5, %c0_6] : memref<768x512xbf16, #tpu.memory_space<vmem>>, vector<768x512xbf16>
    %cst_7 = arith.constant dense<0.000000e+00> : vector<16x512xf32>
    %9 = tpu.matmul %7, %8, %cst_7 {dimension_numbers = #tpu.dot_dimension_numbers<[1], [0], [0], [1], [0, 0, 1, 1], [], []>} : vector<16x768xbf16>, vector<768x512xbf16>, vector<16x512xf32> -> vector<16x512xf32>
    %c0_8 = arith.constant 0 : index
    %c0_9 = arith.constant 0 : index
    %10 = vector.load %arg5[%c0_8, %c0_9] : memref<1x512xf32, #tpu.memory_space<vmem>>, vector<1x512xf32>
    %11 = vector.broadcast %10 : vector<1x512xf32> to vector<16x512xf32>
    %12 = arith.addf %9, %11 : vector<16x512xf32>
    %cst_10 = arith.constant 0.000000e+00 : f32
    %13 = vector.broadcast %cst_10 : f32 to vector<16x512xf32>
    %14 = arith.maximumf %12, %13 : vector<16x512xf32>
    %15 = arith.truncf %14 : vector<16x512xf32> to vector<16x512xbf16>
    %c0_11 = arith.constant 0 : index
    %c0_12 = arith.constant 0 : index
    %16 = vector.load %arg6[%c0_11, %c0_12] : memref<512x128xbf16, #tpu.memory_space<vmem>>, vector<512x128xbf16>
    %cst_13 = arith.constant dense<0.000000e+00> : vector<16x128xf32>
    %17 = tpu.matmul %15, %16, %cst_13 {dimension_numbers = #tpu.dot_dimension_numbers<[1], [0], [0], [1], [0, 0, 1, 1], [], []>} : vector<16x512xbf16>, vector<512x128xbf16>, vector<16x128xf32> -> vector<16x128xf32>
    %c0_14 = arith.constant 0 : index
    %c0_15 = arith.constant 0 : index
    %18 = vector.load %arg7[%c0_14, %c0_15] : memref<1x128xf32, #tpu.memory_space<vmem>>, vector<1x128xf32>
    %19 = vector.broadcast %18 : vector<1x128xf32> to vector<16x128xf32>
    %20 = arith.addf %17, %19 : vector<16x128xf32>
    %cst_16 = arith.constant dense<0xFF800000> : vector<16xf32>
    %21 = vector.multi_reduction <maximumf>, %20, %cst_16 [1] : vector<16x128xf32> to vector<16xf32>
    %22 = vector.shape_cast %21 : vector<16xf32> to vector<16x1xf32>
    %23 = vector.broadcast %22 : vector<16x1xf32> to vector<16x128xf32>
    %24 = arith.subf %20, %23 : vector<16x128xf32>
    %25 = math.exp %24 : vector<16x128xf32>
    %cst_17 = arith.constant dense<0.000000e+00> : vector<16xf32>
    %26 = vector.multi_reduction <add>, %25, %cst_17 [1] : vector<16x128xf32> to vector<16xf32>
    %27 = vector.shape_cast %26 : vector<16xf32> to vector<16x1xf32>
    %28 = math.log %27 : vector<16x1xf32>
    %29 = vector.broadcast %28 : vector<16x1xf32> to vector<16x128xf32>
    %30 = arith.subf %24, %29 : vector<16x128xf32>
    %c0_18 = arith.constant 0 : index
    %c0_19 = arith.constant 0 : index
    %31 = vector.load %arg8[%c0_18, %c0_19] : memref<16x128xf32, #tpu.memory_space<vmem>>, vector<16x128xf32>
    tpu.vector_store %arg8[%c0_18, %c0_19], %30 {strides = array<i32>} : memref<16x128xf32, #tpu.memory_space<vmem>>, vector<16x128xf32>,
    return
  }
  func.func @transform_0(%arg0: i32) -> (i32, i32) {
    %c0_i32 = arith.constant 0 : i32
    %c0_i32_0 = arith.constant 0 : i32
    return %arg0, %c0_i32 : i32, i32
  }
  func.func @transform_1(%arg0: i32) -> (i32, i32) {
    %c0_i32 = arith.constant 0 : i32
    %c0_i32_0 = arith.constant 0 : i32
    %c0_i32_1 = arith.constant 0 : i32
    return %c0_i32, %c0_i32_0 : i32, i32
  }
  func.func @transform_2(%arg0: i32) -> (i32, i32) {
    %c0_i32 = arith.constant 0 : i32
    %c0_i32_0 = arith.constant 0 : i32
    %c0_i32_1 = arith.constant 0 : i32
    return %c0_i32, %c0_i32_0 : i32, i32
  }
  func.func @transform_3(%arg0: i32) -> (i32, i32) {
    %c0_i32 = arith.constant 0 : i32
    %c0_i32_0 = arith.constant 0 : i32
    %c0_i32_1 = arith.constant 0 : i32
    return %c0_i32, %c0_i32_0 : i32, i32
  }
  func.func @transform_4(%arg0: i32) -> (i32, i32) {
    %c0_i32 = arith.constant 0 : i32
    %c0_i32_0 = arith.constant 0 : i32
    %c0_i32_1 = arith.constant 0 : i32
    return %c0_i32, %c0_i32_0 : i32, i32
  }
  func.func @transform_5(%arg0: i32) -> (i32, i32) {
    %c0_i32 = arith.constant 0 : i32
    %c0_i32_0 = arith.constant 0 : i32
    %c0_i32_1 = arith.constant 0 : i32
    return %c0_i32, %c0_i32_0 : i32, i32
  }
  func.func @transform_6(%arg0: i32) -> (i32, i32) {
    %c0_i32 = arith.constant 0 : i32
    %c0_i32_0 = arith.constant 0 : i32
    %c0_i32_1 = arith.constant 0 : i32
    return %c0_i32, %c0_i32_0 : i32, i32
  }
  func.func @transform_7(%arg0: i32) -> (i32, i32) {
    %c0_i32 = arith.constant 0 : i32
    %c0_i32_0 = arith.constant 0 : i32
    return %arg0, %c0_i32 : i32, i32
  }
}

</mosaic_0001>

<llo_original>
// kernel: tpu_custom_call.1
$region0: #{tpu_custom_call.1}
  #allocation0 [shape = 'u32[]', space=smem, size = 0x4, offset = 0x4, fixed_abs, tag = 'smem constant byte address 0x4 - core index']
  #allocation1 [shape = 'u32[144,128]{1,0:T(1,128)}', space=vmem, size = 0x12000, scoped, tag = 'internal scratch']
  %s0 = inlined_call_operand.hbm [shape: bf16[16,768], index: 0, kind: input, shape index: {}]
  %s1 = inlined_call_operand.hbm [shape: bf16[768,768], index: 1, kind: input, shape index: {}]
  %s2 = inlined_call_operand.hbm [shape: f32[1,768], index: 2, kind: input, shape index: {}]
  %s3 = inlined_call_operand.hbm [shape: bf16[768,512], index: 3, kind: input, shape index: {}]
  %s4 = inlined_call_operand.hbm [shape: f32[1,512], index: 4, kind: input, shape index: {}]
  %s5 = inlined_call_operand.hbm [shape: bf16[512,128], index: 5, kind: input, shape index: {}]
  %s6 = inlined_call_operand.hbm [shape: f32[1,128], index: 6, kind: input, shape index: {}]
  %s7 = inlined_call_operand.hbm [shape: f32[16,128], index: 7, kind: output, shape index: {}]
  %s8 = sld [smem:[#allocation0]]
  $region66: #{tpu_custom_call.1} parent=0
    _
  %s10 = ssub.s32 1, %s8
  %s11 = scalar_select 0, %s10, %s8
  $region1: #{tpu_custom_call.1} parent=0
    #allocation2 [shape = 'u8[24576]{0}', space=vmem, size = 0x6000, scoped, tag = 'input window, operand 0, single buffered']
    #allocation3 [shape = 's32[1]{0}', space=sflag, size = 0x4, scoped, tag = 'scoped memory for tpu_custom_call.1']
    #allocation4 [shape = 's32[1]{0}', space=sflag, size = 0x4, scoped, tag = 'scoped memory for tpu_custom_call.1']
    #allocation5 [shape = 'u8[1179648]{0}', space=vmem, size = 0x120000, scoped, tag = 'input window, operand 1, single buffered']
    #allocation6 [shape = 's32[1]{0}', space=sflag, size = 0x4, scoped, tag = 'scoped memory for tpu_custom_call.1']
    #allocation7 [shape = 'u8[3072]{0}', space=vmem, size = 0xc00, scoped, tag = 'input window, operand 2, single buffered']
    #allocation8 [shape = 'u8[786432]{0}', space=vmem, size = 0xc0000, scoped, tag = 'input window, operand 3, single buffered']
    #allocation9 [shape = 's32[1]{0}', space=sflag, size = 0x4, scoped, tag = 'scoped memory for tpu_custom_call.1']
    #allocation10 [shape = 'u8[2048]{0}', space=vmem, size = 0x800, scoped, tag = 'input window, operand 4, single buffered']
    #allocation11 [shape = 'u8[131072]{0}', space=vmem, size = 0x20000, scoped, tag = 'input window, operand 5, single buffered']
    #allocation12 [shape = 's32[1]{0}', space=sflag, size = 0x4, scoped, tag = 'scoped memory for tpu_custom_call.1']
    #allocation13 [shape = 'u8[512]{0}', space=vmem, size = 0x400, scoped, tag = 'input window, operand 6, single buffered']
    #allocation14 [shape = 'u8[8192]{0}', space=vmem, size = 0x2000, scoped, tag = 'output window, operand 0, single buffered']
    %12 = vsyncpa [#allocation3], 0
    %13 = vsyncpa [#allocation6], 0
    %14 = vsyncpa [#allocation9], 0
    %15 = vsyncpa [#allocation12], 0
    %16 = vsyncpa [#allocation4], 0
    // Predicated region
    $region2: #{tpu_custom_call.1} parent=1 // pred_check
      _
    $region3: #{tpu_custom_call.1} parent=1 // pred_check_branch
      %18 = sbr.rel (0) target = $region5
    $region4: #{tpu_custom_call.1} parent=1 // pred_region
      %s20 = ssub.s32 768, 768
      %21 = vsyncadd [#allocation3], %s20
      %s22 = sshll.u32 [#allocation2], 4
      %s23 = int_to_ptr.vmem [resolvable:$true] %s22
      %28 = dma.hbm_to_vmem [thread:$0]  %s0, 768, %s23, [#allocation3], 384, 384, 24
    $region5: #{tpu_custom_call.1} parent=1 // pred_fallthru
      _
    // Predicated region
    $region6: #{tpu_custom_call.1} parent=1 // pred_check
      _
    $region7: #{tpu_custom_call.1} parent=1 // pred_check_branch
      %30 = sbr.rel (0) target = $region9
    $region8: #{tpu_custom_call.1} parent=1 // pred_region
      %s32 = ssub.s32 36864, 36864
      %33 = vsyncadd [#allocation6], %s32
      %s34 = sshll.u32 [#allocation5], 4
      %s35 = int_to_ptr.vmem [resolvable:$true] %s34
      %40 = dma.hbm_to_vmem [thread:$0]  %s1, 36864, %s35, [#allocation6], 384, 384, 24
    $region9: #{tpu_custom_call.1} parent=1 // pred_fallthru
      _
    // Predicated region
    $region10: #{tpu_custom_call.1} parent=1 // pred_check
      _
    $region11: #{tpu_custom_call.1} parent=1 // pred_check_branch
      %42 = sbr.rel (0) target = $region13
    $region12: #{tpu_custom_call.1} parent=1 // pred_region
      %s44 = ssub.s32 96, 96
      %45 = vsyncadd [#allocation6], %s44
      %s47 = sshll.u32 [#allocation7], 4
      %s48 = int_to_ptr.vmem [resolvable:$true] %s47
      %50 = dma.hbm_to_vmem [thread:$0]  %s2, 96, %s48, [#allocation6]
    $region13: #{tpu_custom_call.1} parent=1 // pred_fallthru
      _
    // Predicated region
    $region14: #{tpu_custom_call.1} parent=1 // pred_check
      _
    $region15: #{tpu_custom_call.1} parent=1 // pred_check_branch
      %52 = sbr.rel (0) target = $region17
    $region16: #{tpu_custom_call.1} parent=1 // pred_region
      %s54 = ssub.s32 24576, 24576
      %55 = vsyncadd [#allocation9], %s54
      %s56 = sshll.u32 [#allocation8], 4
      %s57 = int_to_ptr.vmem [resolvable:$true] %s56
      %62 = dma.hbm_to_vmem [thread:$0]  %s3, 24576, %s57, [#allocation9], 256, 256, 16
    $region17: #{tpu_custom_call.1} parent=1 // pred_fallthru
      _
    // Predicated region
    $region18: #{tpu_custom_call.1} parent=1 // pred_check
      _
    $region19: #{tpu_custom_call.1} parent=1 // pred_check_branch
      %64 = sbr.rel (0) target = $region21
    $region20: #{tpu_custom_call.1} parent=1 // pred_region
      %s66 = ssub.s32 64, 64
      %67 = vsyncadd [#allocation9], %s66
      %s69 = sshll.u32 [#allocation10], 4
      %s70 = int_to_ptr.vmem [resolvable:$true] %s69
      %72 = dma.hbm_to_vmem [thread:$0]  %s4, 64, %s70, [#allocation9]
    $region21: #{tpu_custom_call.1} parent=1 // pred_fallthru
      _
    // Predicated region
    $region22: #{tpu_custom_call.1} parent=1 // pred_check
      _
    $region23: #{tpu_custom_call.1} parent=1 // pred_check_branch
      %74 = sbr.rel (0) target = $region25
    $region24: #{tpu_custom_call.1} parent=1 // pred_region
      %s76 = ssub.s32 4096, 4096
      %77 = vsyncadd [#allocation12], %s76
      %s78 = sshll.u32 [#allocation11], 4
      %s79 = int_to_ptr.vmem [resolvable:$true] %s78
      %84 = dma.hbm_to_vmem [thread:$0]  %s5, 4096, %s79, [#allocation12], 64, 64, 4
    $region25: #{tpu_custom_call.1} parent=1 // pred_fallthru
      _
    // Predicated region
    $region26: #{tpu_custom_call.1} parent=1 // pred_check
      _
    $region27: #{tpu_custom_call.1} parent=1 // pred_check_branch
      %86 = sbr.rel (0) target = $region29
    $region28: #{tpu_custom_call.1} parent=1 // pred_region
      %s88 = ssub.s32 16, 16
      %89 = vsyncadd [#allocation12], %s88
      %s91 = sshll.u32 [#allocation13], 4
      %s92 = int_to_ptr.vmem [resolvable:$true] %s91
      %94 = dma.hbm_to_vmem [thread:$0]  %s6, 16, %s92, [#allocation12]
    $region29: #{tpu_custom_call.1} parent=1 // pred_fallthru
      _
    // Predicated region
    $region30: #{tpu_custom_call.1} parent=1 // pred_check
      _
    $region31: #{tpu_custom_call.1} parent=1 // pred_check_branch
      %96 = sbr.rel (0) target = $region33
    $region32: #{tpu_custom_call.1} parent=1 // pred_region
      %97 = dma.done [#allocation3], 768
    $region33: #{tpu_custom_call.1} parent=1 // pred_fallthru
      _
    // Predicated region
    $region34: #{tpu_custom_call.1} parent=1 // pred_check
      _
    $region35: #{tpu_custom_call.1} parent=1 // pred_check_branch
      %99 = sbr.rel (0) target = $region37
    $region36: #{tpu_custom_call.1} parent=1 // pred_region
      %100 = dma.done [#allocation6], 36864
    $region37: #{tpu_custom_call.1} parent=1 // pred_fallthru
      _
    // Predicated region
    $region38: #{tpu_custom_call.1} parent=1 // pred_check
      _
    $region39: #{tpu_custom_call.1} parent=1 // pred_check_branch
      %102 = sbr.rel (0) target = $region41
    $region40: #{tpu_custom_call.1} parent=1 // pred_region
      %103 = dma.done [#allocation6], 96
    $region41: #{tpu_custom_call.1} parent=1 // pred_fallthru
      _
    // Predicated region
    $region42: #{tpu_custom_call.1} parent=1 // pred_check
      _
    $region43: #{tpu_custom_call.1} parent=1 // pred_check_branch
      %105 = sbr.rel (0) target = $region45
    $region44: #{tpu_custom_call.1} parent=1 // pred_region
      %106 = dma.done [#allocation9], 24576
    $region45: #{tpu_custom_call.1} parent=1 // pred_fallthru
      _
    // Predicated region
    $region46: #{tpu_custom_call.1} parent=1 // pred_check
      _
    $region47: #{tpu_custom_call.1} parent=1 // pred_check_branch
      %108 = sbr.rel (0) target = $region49
    $region48: #{tpu_custom_call.1} parent=1 // pred_region
      %109 = dma.done [#allocation9], 64
    $region49: #{tpu_custom_call.1} parent=1 // pred_fallthru
      _
    // Predicated region
    $region50: #{tpu_custom_call.1} parent=1 // pred_check
      _
    $region51: #{tpu_custom_call.1} parent=1 // pred_check_branch
      %111 = sbr.rel (0) target = $region53
    $region52: #{tpu_custom_call.1} parent=1 // pred_region
      %112 = dma.done [#allocation12], 4096
    $region53: #{tpu_custom_call.1} parent=1 // pred_fallthru
      _
    // Predicated region
    $region54: #{tpu_custom_call.1} parent=1 // pred_check
      _
    $region55: #{tpu_custom_call.1} parent=1 // pred_check_branch
      %114 = sbr.rel (0) target = $region57
    $region56: #{tpu_custom_call.1} parent=1 // pred_region
      %115 = dma.done [#allocation12], 16
    $region57: #{tpu_custom_call.1} parent=1 // pred_fallthru
      _
    %v117 = vld [vmem:[#allocation2] sm:$0xff]
    %v118 = vld [vmem:[#allocation2 + $0x8] sm:$0xff]
    %v119 = vld [vmem:[#allocation2 + $0x10] sm:$0xff]
    %v120 = vld [vmem:[#allocation2 + $0x18] sm:$0xff]
    %v121 = vld [vmem:[#allocation2 + $0x20] sm:$0xff]
    %v122 = vld [vmem:[#allocation2 + $0x28] sm:$0xff]
    %v123 = vld [vmem:[#allocation5] sm:$0xff]
    %v124 = vld [vmem:[#allocation5 + $0x8] sm:$0xff]
    %v125 = vld [vmem:[#allocation5 + $0x10] sm:$0xff]
    %v126 = vld [vmem:[#allocation5 + $0x18] sm:$0xff]
    %v127 = vld [vmem:[#allocation5 + $0x20] sm:$0xff]
    %v128 = vld [vmem:[#allocation5 + $0x28] sm:$0xff]
    %v129 = vld [vmem:[#allocation5 + $0x30] sm:$0xff]
    %v130 = vld [vmem:[#allocation5 + $0x38] sm:$0xff]
    %v131 = vld [vmem:[#allocation5 + $0x40] sm:$0xff]
    %v132 = vld [vmem:[#allocation5 + $0x48] sm:$0xff]
    %v133 = vld [vmem:[#allocation5 + $0x50] sm:$0xff]
    %v134 = vld [vmem:[#allocation5 + $0x58] sm:$0xff]
    %v135 = vld [vmem:[#allocation5 + $0x60] sm:$0xff]
    %v136 = vld [vmem:[#allocation5 + $0x68] sm:$0xff]
    %v137 = vld [vmem:[#allocation5 + $0x70] sm:$0xff]
    %v138 = vld [vmem:[#allocation5 + $0x78] sm:$0xff]
    %v139 = vld [vmem:[#allocation5 + $0x80] sm:$0xff]
    %v140 = vld [vmem:[#allocation5 + $0x88] sm:$0xff]
    %v141 = vld [vmem:[#allocation5 + $0x90] sm:$0xff]
    %v142 = vld [vmem:[#allocation5 + $0x98] sm:$0xff]
    %v143 = vld [vmem:[#allocation5 + $0xa0] sm:$0xff]
    %v144 = vld [vmem:[#allocation5 + $0xa8] sm:$0xff]
    %v145 = vld [vmem:[#allocation5 + $0xb0] sm:$0xff]
    %v146 = vld [vmem:[#allocation5 + $0xb8] sm:$0xff]
    %v147 = vld [vmem:[#allocation5 + $0xc0] sm:$0xff]
    %v148 = vld [vmem:[#allocation5 + $0xc8] sm:$0xff]
    %v149 = vld [vmem:[#allocation5 + $0xd0] sm:$0xff]
    %v150 = vld [vmem:[#allocation5 + $0xd8] sm:$0xff]
    %v151 = vld [vmem:[#allocation5 + $0xe0] sm:$0xff]
    %v152 = vld [vmem:[#allocation5 + $0xe8] sm:$0xff]
    %v153 = vld [vmem:[#allocation5 + $0xf0] sm:$0xff]
    %v154 = vld [vmem:[#allocation5 + $0xf8] sm:$0xff]
    %v155 = vld [vmem:[#allocation5 + $0x100] sm:$0xff]
    %v156 = vld [vmem:[#allocation5 + $0x108] sm:$0xff]
    %v157 = vld [vmem:[#allocation5 + $0x110] sm:$0xff]
    %v158 = vld [vmem:[#allocation5 + $0x118] sm:$0xff]
    %v159 = vld [vmem:[#allocation5 + $0x120] sm:$0xff]
    %v160 = vld [vmem:[#allocation5 + $0x128] sm:$0xff]
    %v161 = vld [vmem:[#allocation5 + $0x130] sm:$0xff]
    %v162 = vld [vmem:[#allocation5 + $0x138] sm:$0xff]
    %v163 = vld [vmem:[#allocation5 + $0x140] sm:$0xff]
    %v164 = vld [vmem:[#allocation5 + $0x148] sm:$0xff]
    %v165 = vld [vmem:[#allocation5 + $0x150] sm:$0xff]
    %v166 = vld [vmem:[#allocation5 + $0x158] sm:$0xff]
    %v167 = vld [vmem:[#allocation5 + $0x160] sm:$0xff]
    %v168 = vld [vmem:[#allocation5 + $0x168] sm:$0xff]
    %v169 = vld [vmem:[#allocation5 + $0x170] sm:$0xff]
    %v170 = vld [vmem:[#allocation5 + $0x178] sm:$0xff]
    %v171 = vld [vmem:[#allocation5 + $0x180] sm:$0xff]
    %v172 = vld [vmem:[#allocation5 + $0x188] sm:$0xff]
    %v173 = vld [vmem:[#allocation5 + $0x190] sm:$0xff]
    %v174 = vld [vmem:[#allocation5 + $0x198] sm:$0xff]
    %v175 = vld [vmem:[#allocation5 + $0x1a0] sm:$0xff]
    %v176 = vld [vmem:[#allocation5 + $0x1a8] sm:$0xff]
    %v177 = vld [vmem:[#allocation5 + $0x1b0] sm:$0xff]
    %v178 = vld [vmem:[#allocation5 + $0x1b8] sm:$0xff]
    %v179 = vld [vmem:[#allocation5 + $0x1c0] sm:$0xff]
    %v180 = vld [vmem:[#allocation5 + $0x1c8] sm:$0xff]
    %v181 = vld [vmem:[#allocation5 + $0x1d0] sm:$0xff]
    %v182 = vld [vmem:[#allocation5 + $0x1d8] sm:$0xff]
    %v183 = vld [vmem:[#allocation5 + $0x1e0] sm:$0xff]
    %v184 = vld [vmem:[#allocation5 + $0x1e8] sm:$0xff]
    %v185 = vld [vmem:[#allocation5 + $0x1f0] sm:$0xff]
    %v186 = vld [vmem:[#allocation5 + $0x1f8] sm:$0xff]
    %v187 = vld [vmem:[#allocation5 + $0x200] sm:$0xff]
    %v188 = vld [vmem:[#allocation5 + $0x208] sm:$0xff]
    %v189 = vld [vmem:[#allocation5 + $0x210] sm:$0xff]
    %v190 = vld [vmem:[#allocation5 + $0x218] sm:$0xff]
    %v191 = vld [vmem:[#allocation5 + $0x220] sm:$0xff]
    %v192 = vld [vmem:[#allocation5 + $0x228] sm:$0xff]
    %v193 = vld [vmem:[#allocation5 + $0x230] sm:$0xff]
    %v194 = vld [vmem:[#allocation5 + $0x238] sm:$0xff]
    %v195 = vld [vmem:[#allocation5 + $0x240] sm:$0xff]
    %v196 = vld [vmem:[#allocation5 + $0x248] sm:$0xff]
    %v197 = vld [vmem:[#allocation5 + $0x250] sm:$0xff]
    %v198 = vld [vmem:[#allocation5 + $0x258] sm:$0xff]
    %v199 = vld [vmem:[#allocation5 + $0x260] sm:$0xff]
    %v200 = vld [vmem:[#allocation5 + $0x268] sm:$0xff]
    %v201 = vld [vmem:[#allocation5 + $0x270] sm:$0xff]
    %v202 = vld [vmem:[#allocation5 + $0x278] sm:$0xff]
    %v203 = vld [vmem:[#allocation5 + $0x280] sm:$0xff]
    %v204 = vld [vmem:[#allocation5 + $0x288] sm:$0xff]
    %v205 = vld [vmem:[#allocation5 + $0x290] sm:$0xff]
    %v206 = vld [vmem:[#allocation5 + $0x298] sm:$0xff]
    %v207 = vld [vmem:[#allocation5 + $0x2a0] sm:$0xff]
    %v208 = vld [vmem:[#allocation5 + $0x2a8] sm:$0xff]
    %v209 = vld [vmem:[#allocation5 + $0x2b0] sm:$0xff]
    %v210 = vld [vmem:[#allocation5 + $0x2b8] sm:$0xff]
    %v211 = vld [vmem:[#allocation5 + $0x2c0] sm:$0xff]
    %v212 = vld [vmem:[#allocation5 + $0x2c8] sm:$0xff]
    %v213 = vld [vmem:[#allocation5 + $0x2d0] sm:$0xff]
    %v214 = vld [vmem:[#allocation5 + $0x2d8] sm:$0xff]
    %v215 = vld [vmem:[#allocation5 + $0x2e0] sm:$0xff]
    %v216 = vld [vmem:[#allocation5 + $0x2e8] sm:$0xff]
    %v217 = vld [vmem:[#allocation5 + $0x2f0] sm:$0xff]
    %v218 = vld [vmem:[#allocation5 + $0x2f8] sm:$0xff]
    %v219 = vld [vmem:[#allocation5 + $0x300] sm:$0xff]
    %v220 = vld [vmem:[#allocation5 + $0x308] sm:$0xff]
    %v221 = vld [vmem:[#allocation5 + $0x310] sm:$0xff]
    %v222 = vld [vmem:[#allocation5 + $0x318] sm:$0xff]
    %v223 = vld [vmem:[#allocation5 + $0x320] sm:$0xff]
    %v224 = vld [vmem:[#allocation5 + $0x328] sm:$0xff]
    %v225 = vld [vmem:[#allocation5 + $0x330] sm:$0xff]
    %v226 = vld [vmem:[#allocation5 + $0x338] sm:$0xff]
    %v227 = vld [vmem:[#allocation5 + $0x340] sm:$0xff]
    %v228 = vld [vmem:[#allocation5 + $0x348] sm:$0xff]
    %v229 = vld [vmem:[#allocation5 + $0x350] sm:$0xff]
    %v230 = vld [vmem:[#allocation5 + $0x358] sm:$0xff]
    %v231 = vld [vmem:[#allocation5 + $0x360] sm:$0xff]
    %v232 = vld [vmem:[#allocation5 + $0x368] sm:$0xff]
    %v233 = vld [vmem:[#allocation5 + $0x370] sm:$0xff]
    %v234 = vld [vmem:[#allocation5 + $0x378] sm:$0xff]
    %v235 = vld [vmem:[#allocation5 + $0x380] sm:$0xff]
    %v236 = vld [vmem:[#allocation5 + $0x388] sm:$0xff]
    %v237 = vld [vmem:[#allocation5 + $0x390] sm:$0xff]
    %v238 = vld [vmem:[#allocation5 + $0x398] sm:$0xff]
    %v239 = vld [vmem:[#allocation5 + $0x3a0] sm:$0xff]
    %v240 = vld [vmem:[#allocation5 + $0x3a8] sm:$0xff]
    %v241 = vld [vmem:[#allocation5 + $0x3b0] sm:$0xff]
    %v242 = vld [vmem:[#allocation5 + $0x3b8] sm:$0xff]
    %v243 = vld [vmem:[#allocation5 + $0x3c0] sm:$0xff]
    %v244 = vld [vmem:[#allocation5 + $0x3c8] sm:$0xff]
    %v245 = vld [vmem:[#allocation5 + $0x3d0] sm:$0xff]
    %v246 = vld [vmem:[#allocation5 + $0x3d8] sm:$0xff]
    %v247 = vld [vmem:[#allocation5 + $0x3e0] sm:$0xff]
    %v248 = vld [vmem:[#allocation5 + $0x3e8] sm:$0xff]
    %v249 = vld [vmem:[#allocation5 + $0x3f0] sm:$0xff]
    %v250 = vld [vmem:[#allocation5 + $0x3f8] sm:$0xff]
    %v251 = vld [vmem:[#allocation5 + $0x400] sm:$0xff]
    %v252 = vld [vmem:[#allocation5 + $0x408] sm:$0xff]
    %v253 = vld [vmem:[#allocation5 + $0x410] sm:$0xff]
    %v254 = vld [vmem:[#allocation5 + $0x418] sm:$0xff]
    %v255 = vld [vmem:[#allocation5 + $0x420] sm:$0xff]
    %v256 = vld [vmem:[#allocation5 + $0x428] sm:$0xff]
    %v257 = vld [vmem:[#allocation5 + $0x430] sm:$0xff]
    %v258 = vld [vmem:[#allocation5 + $0x438] sm:$0xff]
    %v259 = vld [vmem:[#allocation5 + $0x440] sm:$0xff]
    %v260 = vld [vmem:[#allocation5 + $0x448] sm:$0xff]
    %v261 = vld [vmem:[#allocation5 + $0x450] sm:$0xff]
    %v262 = vld [vmem:[#allocation5 + $0x458] sm:$0xff]
    %v263 = vld [vmem:[#allocation5 + $0x460] sm:$0xff]
    %v264 = vld [vmem:[#allocation5 + $0x468] sm:$0xff]
    %v265 = vld [vmem:[#allocation5 + $0x470] sm:$0xff]
    %v266 = vld [vmem:[#allocation5 + $0x478] sm:$0xff]
    %v267 = vld [vmem:[#allocation5 + $0x480] sm:$0xff]
    %v268 = vld [vmem:[#allocation5 + $0x488] sm:$0xff]
    %v269 = vld [vmem:[#allocation5 + $0x490] sm:$0xff]
    %v270 = vld [vmem:[#allocation5 + $0x498] sm:$0xff]
    %v271 = vld [vmem:[#allocation5 + $0x4a0] sm:$0xff]
    %v272 = vld [vmem:[#allocation5 + $0x4a8] sm:$0xff]
    %v273 = vld [vmem:[#allocation5 + $0x4b0] sm:$0xff]
    %v274 = vld [vmem:[#allocation5 + $0x4b8] sm:$0xff]
    %v275 = vld [vmem:[#allocation5 + $0x4c0] sm:$0xff]
    %v276 = vld [vmem:[#allocation5 + $0x4c8] sm:$0xff]
    %v277 = vld [vmem:[#allocation5 + $0x4d0] sm:$0xff]
    %v278 = vld [vmem:[#allocation5 + $0x4d8] sm:$0xff]
    %v279 = vld [vmem:[#allocation5 + $0x4e0] sm:$0xff]
    %v280 = vld [vmem:[#allocation5 + $0x4e8] sm:$0xff]
    %v281 = vld [vmem:[#allocation5 + $0x4f0] sm:$0xff]
    %v282 = vld [vmem:[#allocation5 + $0x4f8] sm:$0xff]
    %v283 = vld [vmem:[#allocation5 + $0x500] sm:$0xff]
    %v284 = vld [vmem:[#allocation5 + $0x508] sm:$0xff]
    %v285 = vld [vmem:[#allocation5 + $0x510] sm:$0xff]
    %v286 = vld [vmem:[#allocation5 + $0x518] sm:$0xff]
    %v287 = vld [vmem:[#allocation5 + $0x520] sm:$0xff]
    %v288 = vld [vmem:[#allocation5 + $0x528] sm:$0xff]
    %v289 = vld [vmem:[#allocation5 + $0x530] sm:$0xff]
    %v290 = vld [vmem:[#allocation5 + $0x538] sm:$0xff]
    %v291 = vld [vmem:[#allocation5 + $0x540] sm:$0xff]
    %v292 = vld [vmem:[#allocation5 + $0x548] sm:$0xff]
    %v293 = vld [vmem:[#allocation5 + $0x550] sm:$0xff]
    %v294 = vld [vmem:[#allocation5 + $0x558] sm:$0xff]
    %v295 = vld [vmem:[#allocation5 + $0x560] sm:$0xff]
    %v296 = vld [vmem:[#allocation5 + $0x568] sm:$0xff]
    %v297 = vld [vmem:[#allocation5 + $0x570] sm:$0xff]
    %v298 = vld [vmem:[#allocation5 + $0x578] sm:$0xff]
    %v299 = vld [vmem:[#allocation5 + $0x580] sm:$0xff]
    %v300 = vld [vmem:[#allocation5 + $0x588] sm:$0xff]
    %v301 = vld [vmem:[#allocation5 + $0x590] sm:$0xff]
    %v302 = vld [vmem:[#allocation5 + $0x598] sm:$0xff]
    %v303 = vld [vmem:[#allocation5 + $0x5a0] sm:$0xff]
    %v304 = vld [vmem:[#allocation5 + $0x5a8] sm:$0xff]
    %v305 = vld [vmem:[#allocation5 + $0x5b0] sm:$0xff]
    %v306 = vld [vmem:[#allocation5 + $0x5b8] sm:$0xff]
    %v307 = vld [vmem:[#allocation5 + $0x5c0] sm:$0xff]
    %v308 = vld [vmem:[#allocation5 + $0x5c8] sm:$0xff]
    %v309 = vld [vmem:[#allocation5 + $0x5d0] sm:$0xff]
    %v310 = vld [vmem:[#allocation5 + $0x5d8] sm:$0xff]
    %v311 = vld [vmem:[#allocation5 + $0x5e0] sm:$0xff]
    %v312 = vld [vmem:[#allocation5 + $0x5e8] sm:$0xff]
    %v313 = vld [vmem:[#allocation5 + $0x5f0] sm:$0xff]
    %v314 = vld [vmem:[#allocation5 + $0x5f8] sm:$0xff]
    %v315 = vld [vmem:[#allocation5 + $0x600] sm:$0xff]
    %v316 = vld [vmem:[#allocation5 + $0x608] sm:$0xff]
    %v317 = vld [vmem:[#allocation5 + $0x610] sm:$0xff]
    %v318 = vld [vmem:[#allocation5 + $0x618] sm:$0xff]
    %v319 = vld [vmem:[#allocation5 + $0x620] sm:$0xff]
    %v320 = vld [vmem:[#allocation5 + $0x628] sm:$0xff]
    %v321 = vld [vmem:[#allocation5 + $0x630] sm:$0xff]
    %v322 = vld [vmem:[#allocation5 + $0x638] sm:$0xff]
    %v323 = vld [vmem:[#allocation5 + $0x640] sm:$0xff]
    %v324 = vld [vmem:[#allocation5 + $0x648] sm:$0xff]
    %v325 = vld [vmem:[#allocation5 + $0x650] sm:$0xff]
    %v326 = vld [vmem:[#allocation5 + $0x658] sm:$0xff]
    %v327 = vld [vmem:[#allocation5 + $0x660] sm:$0xff]
    %v328 = vld [vmem:[#allocation5 + $0x668] sm:$0xff]
    %v329 = vld [vmem:[#allocation5 + $0x670] sm:$0xff]
    %v330 = vld [vmem:[#allocation5 + $0x678] sm:$0xff]
    %v331 = vld [vmem:[#allocation5 + $0x680] sm:$0xff]
    %v332 = vld [vmem:[#allocation5 + $0x688] sm:$0xff]
    %v333 = vld [vmem:[#allocation5 + $0x690] sm:$0xff]
    %v334 = vld [vmem:[#allocation5 + $0x698] sm:$0xff]
    %v335 = vld [vmem:[#allocation5 + $0x6a0] sm:$0xff]
    %v336 = vld [vmem:[#allocation5 + $0x6a8] sm:$0xff]
    %v337 = vld [vmem:[#allocation5 + $0x6b0] sm:$0xff]
    %v338 = vld [vmem:[#allocation5 + $0x6b8] sm:$0xff]
    %v339 = vld [vmem:[#allocation5 + $0x6c0] sm:$0xff]
    %v340 = vld [vmem:[#allocation5 + $0x6c8] sm:$0xff]
    %v341 = vld [vmem:[#allocation5 + $0x6d0] sm:$0xff]
    %v342 = vld [vmem:[#allocation5 + $0x6d8] sm:$0xff]
    %v343 = vld [vmem:[#allocation5 + $0x6e0] sm:$0xff]
    %v344 = vld [vmem:[#allocation5 + $0x6e8] sm:$0xff]
    %v345 = vld [vmem:[#allocation5 + $0x6f0] sm:$0xff]
    %v346 = vld [vmem:[#allocation5 + $0x6f8] sm:$0xff]
    %v347 = vld [vmem:[#allocation5 + $0x700] sm:$0xff]
    %v348 = vld [vmem:[#allocation5 + $0x708] sm:$0xff]
    %v349 = vld [vmem:[#allocation5 + $0x710] sm:$0xff]
    %v350 = vld [vmem:[#allocation5 + $0x718] sm:$0xff]
    %v351 = vld [vmem:[#allocation5 + $0x720] sm:$0xff]
    %v352 = vld [vmem:[#allocation5 + $0x728] sm:$0xff]
    %v353 = vld [vmem:[#allocation5 + $0x730] sm:$0xff]
    %v354 = vld [vmem:[#allocation5 + $0x738] sm:$0xff]
    %v355 = vld [vmem:[#allocation5 + $0x740] sm:$0xff]
    %v356 = vld [vmem:[#allocation5 + $0x748] sm:$0xff]
    %v357 = vld [vmem:[#allocation5 + $0x750] sm:$0xff]
    %v358 = vld [vmem:[#allocation5 + $0x758] sm:$0xff]
    %v359 = vld [vmem:[#allocation5 + $0x760] sm:$0xff]
    %v360 = vld [vmem:[#allocation5 + $0x768] sm:$0xff]
    %v361 = vld [vmem:[#allocation5 + $0x770] sm:$0xff]
    %v362 = vld [vmem:[#allocation5 + $0x778] sm:$0xff]
    %v363 = vld [vmem:[#allocation5 + $0x780] sm:$0xff]
    %v364 = vld [vmem:[#allocation5 + $0x788] sm:$0xff]
    %v365 = vld [vmem:[#allocation5 + $0x790] sm:$0xff]
    %v366 = vld [vmem:[#allocation5 + $0x798] sm:$0xff]
    %v367 = vld [vmem:[#allocation5 + $0x7a0] sm:$0xff]
    %v368 = vld [vmem:[#allocation5 + $0x7a8] sm:$0xff]
    %v369 = vld [vmem:[#allocation5 + $0x7b0] sm:$0xff]
    %v370 = vld [vmem:[#allocation5 + $0x7b8] sm:$0xff]
    %v371 = vld [vmem:[#allocation5 + $0x7c0] sm:$0xff]
    %v372 = vld [vmem:[#allocation5 + $0x7c8] sm:$0xff]
    %v373 = vld [vmem:[#allocation5 + $0x7d0] sm:$0xff]
    %v374 = vld [vmem:[#allocation5 + $0x7d8] sm:$0xff]
    %v375 = vld [vmem:[#allocation5 + $0x7e0] sm:$0xff]
    %v376 = vld [vmem:[#allocation5 + $0x7e8] sm:$0xff]
    %v377 = vld [vmem:[#allocation5 + $0x7f0] sm:$0xff]
    %v378 = vld [vmem:[#allocation5 + $0x7f8] sm:$0xff]
    %v379 = vld [vmem:[#allocation5 + $0x800] sm:$0xff]
    %v380 = vld [vmem:[#allocation5 + $0x808] sm:$0xff]
    %v381 = vld [vmem:[#allocation5 + $0x810] sm:$0xff]
    %v382 = vld [vmem:[#allocation5 + $0x818] sm:$0xff]
    %v383 = vld [vmem:[#allocation5 + $0x820] sm:$0xff]
    %v384 = vld [vmem:[#allocation5 + $0x828] sm:$0xff]
    %v385 = vld [vmem:[#allocation5 + $0x830] sm:$0xff]
    %v386 = vld [vmem:[#allocation5 + $0x838] sm:$0xff]
    %v387 = vld [vmem:[#allocation5 + $0x840] sm:$0xff]
    %v388 = vld [vmem:[#allocation5 + $0x848] sm:$0xff]
    %v389 = vld [vmem:[#allocation5 + $0x850] sm:$0xff]
    %v390 = vld [vmem:[#allocation5 + $0x858] sm:$0xff]
    %v391 = vld [vmem:[#allocation5 + $0x860] sm:$0xff]
    %v392 = vld [vmem:[#allocation5 + $0x868] sm:$0xff]
    %v393 = vld [vmem:[#allocation5 + $0x870] sm:$0xff]
    %v394 = vld [vmem:[#allocation5 + $0x878] sm:$0xff]
    %v395 = vld [vmem:[#allocation5 + $0x880] sm:$0xff]
    %v396 = vld [vmem:[#allocation5 + $0x888] sm:$0xff]
    %v397 = vld [vmem:[#allocation5 + $0x890] sm:$0xff]
    %v398 = vld [vmem:[#allocation5 + $0x898] sm:$0xff]
    %v399 = vld [vmem:[#allocation5 + $0x8a0] sm:$0xff]
    %v400 = vld [vmem:[#allocation5 + $0x8a8] sm:$0xff]
    %v401 = vld [vmem:[#allocation5 + $0x8b0] sm:$0xff]
    %v402 = vld [vmem:[#allocation5 + $0x8b8] sm:$0xff]
    %v403 = vld [vmem:[#allocation5 + $0x8c0] sm:$0xff]
    %v404 = vld [vmem:[#allocation5 + $0x8c8] sm:$0xff]
    %v405 = vld [vmem:[#allocation5 + $0x8d0] sm:$0xff]
    %v406 = vld [vmem:[#allocation5 + $0x8d8] sm:$0xff]
    %v407 = vld [vmem:[#allocation5 + $0x8e0] sm:$0xff]
    %v408 = vld [vmem:[#allocation5 + $0x8e8] sm:$0xff]
    %v409 = vld [vmem:[#allocation5 + $0x8f0] sm:$0xff]
    %v410 = vld [vmem:[#allocation5 + $0x8f8] sm:$0xff]
    %v411 = vld [vmem:[#allocation7] sm:$0x3f]
    %v413 = vlaneseq
    %v414 = vshrl.u32 %v413, 7
    %v415 = vsub.s32 0, %v414
    %v416 = vrot.slane %v411, %v415
    %v417 = vlaneseq
    %v418 = vshrl.u32 %v417, 7
    %v419 = vsub.s32 1, %v418
    %v420 = vrot.slane %v411, %v419
    %v421 = vlaneseq
    %v422 = vshrl.u32 %v421, 7
    %v423 = vsub.s32 2, %v422
    %v424 = vrot.slane %v411, %v423
    %v425 = vlaneseq
    %v426 = vshrl.u32 %v425, 7
    %v427 = vsub.s32 3, %v426
    %v428 = vrot.slane %v411, %v427
    %v429 = vlaneseq
    %v430 = vshrl.u32 %v429, 7
    %v431 = vsub.s32 4, %v430
    %v432 = vrot.slane %v411, %v431
    %v433 = vlaneseq
    %v434 = vshrl.u32 %v433, 7
    %v435 = vsub.s32 5, %v434
    %v436 = vrot.slane %v411, %v435
    %v449 = vunpack.c.l.b16 %v117
    %v450 = vunpack.c.h.b16 %v117
    %v451 = vunpack.c.l.b16 %v118
    %v452 = vunpack.c.h.b16 %v118
    %v453 = vunpack.c.l.b16 %v119
    %v454 = vunpack.c.h.b16 %v119
    %v455 = vunpack.c.l.b16 %v120
    %v456 = vunpack.c.h.b16 %v120
    %v457 = vunpack.c.l.b16 %v121
    %v458 = vunpack.c.h.b16 %v121
    %v459 = vunpack.c.l.b16 %v122
    %v460 = vunpack.c.h.b16 %v122
    %v461 = vpack.c.b16 %v455, %v449
    %v462 = vpack.c.b16 %v456, %v450
    %v463 = vpack.c.b16 %v457, %v451
    %v464 = vpack.c.b16 %v458, %v452
    %v465 = vpack.c.b16 %v459, %v453
    %v466 = vpack.c.b16 %v460, %v454
    %v761 = vunpack.c.l.b16 %v123
    %v762 = vunpack.c.h.b16 %v123
    %v763 = vunpack.c.l.b16 %v124
    %v764 = vunpack.c.h.b16 %v124
    %v765 = vunpack.c.l.b16 %v125
    %v766 = vunpack.c.h.b16 %v125
    %v767 = vunpack.c.l.b16 %v126
    %v768 = vunpack.c.h.b16 %v126
    %v769 = vunpack.c.l.b16 %v127
    %v770 = vunpack.c.h.b16 %v127
    %v771 = vunpack.c.l.b16 %v128
    %v772 = vunpack.c.h.b16 %v128
    %v773 = vunpack.c.l.b16 %v129
    %v774 = vunpack.c.h.b16 %v129
    %v775 = vunpack.c.l.b16 %v130
    %v776 = vunpack.c.h.b16 %v130
    %v777 = vunpack.c.l.b16 %v131
    %v778 = vunpack.c.h.b16 %v131
    %v779 = vunpack.c.l.b16 %v132
    %v780 = vunpack.c.h.b16 %v132
    %v781 = vunpack.c.l.b16 %v133
    %v782 = vunpack.c.h.b16 %v133
    %v783 = vunpack.c.l.b16 %v134
    %v784 = vunpack.c.h.b16 %v134
    %v785 = vunpack.c.l.b16 %v135
    %v786 = vunpack.c.h.b16 %v135
    %v787 = vunpack.c.l.b16 %v136
    %v788 = vunpack.c.h.b16 %v136
    %v789 = vunpack.c.l.b16 %v137
    %v790 = vunpack.c.h.b16 %v137
    %v791 = vunpack.c.l.b16 %v138
    %v792 = vunpack.c.h.b16 %v138
    %v793 = vunpack.c.l.b16 %v139
    %v794 = vunpack.c.h.b16 %v139
    %v795 = vunpack.c.l.b16 %v140
    %v796 = vunpack.c.h.b16 %v140
    %v797 = vunpack.c.l.b16 %v141
    %v798 = vunpack.c.h.b16 %v141
    %v799 = vunpack.c.l.b16 %v142
    %v800 = vunpack.c.h.b16 %v142
    %v801 = vunpack.c.l.b16 %v143
    %v802 = vunpack.c.h.b16 %v143
    %v803 = vunpack.c.l.b16 %v144
    %v804 = vunpack.c.h.b16 %v144
    %v805 = vunpack.c.l.b16 %v145
    %v806 = vunpack.c.h.b16 %v145
    %v807 = vunpack.c.l.b16 %v146
    %v808 = vunpack.c.h.b16 %v146
    %v809 = vunpack.c.l.b16 %v147
    %v810 = vunpack.c.h.b16 %v147
    %v811 = vunpack.c.l.b16 %v148
    %v812 = vunpack.c.h.b16 %v148
    %v813 = vunpack.c.l.b16 %v149
    %v814 = vunpack.c.h.b16 %v149
    %v815 = vunpack.c.l.b16 %v150
    %v816 = vunpack.c.h.b16 %v150
    %v817 = vunpack.c.l.b16 %v151
    %v818 = vunpack.c.h.b16 %v151
    %v819 = vunpack.c.l.b16 %v152
    %v820 = vunpack.c.h.b16 %v152
    %v821 = vunpack.c.l.b16 %v153
    %v822 = vunpack.c.h.b16 %v153
    %v823 = vunpack.c.l.b16 %v154
    %v824 = vunpack.c.h.b16 %v154
    %v825 = vunpack.c.l.b16 %v155
    %v826 = vunpack.c.h.b16 %v155
    %v827 = vunpack.c.l.b16 %v156
    %v828 = vunpack.c.h.b16 %v156
    %v829 = vunpack.c.l.b16 %v157
    %v830 = vunpack.c.h.b16 %v157
    %v831 = vunpack.c.l.b16 %v158
    %v832 = vunpack.c.h.b16 %v158
    %v833 = vunpack.c.l.b16 %v159
    %v834 = vunpack.c.h.b16 %v159
    %v835 = vunpack.c.l.b16 %v160
    %v836 = vunpack.c.h.b16 %v160
    %v837 = vunpack.c.l.b16 %v161
    %v838 = vunpack.c.h.b16 %v161
    %v839 = vunpack.c.l.b16 %v162
    %v840 = vunpack.c.h.b16 %v162
    %v841 = vunpack.c.l.b16 %v163
    %v842 = vunpack.c.h.b16 %v163
    %v843 = vunpack.c.l.b16 %v164
    %v844 = vunpack.c.h.b16 %v164
    %v845 = vunpack.c.l.b16 %v165
    %v846 = vunpack.c.h.b16 %v165
    %v847 = vunpack.c.l.b16 %v166
    %v848 = vunpack.c.h.b16 %v166
    %v849 = vunpack.c.l.b16 %v167
    %v850 = vunpack.c.h.b16 %v167
    %v851 = vunpack.c.l.b16 %v168
    %v852 = vunpack.c.h.b16 %v168
    %v853 = vunpack.c.l.b16 %v169
    %v854 = vunpack.c.h.b16 %v169
    %v855 = vunpack.c.l.b16 %v170
    %v856 = vunpack.c.h.b16 %v170
    %v857 = vunpack.c.l.b16 %v171
    %v858 = vunpack.c.h.b16 %v171
    %v859 = vunpack.c.l.b16 %v172
    %v860 = vunpack.c.h.b16 %v172
    %v861 = vunpack.c.l.b16 %v173
    %v862 = vunpack.c.h.b16 %v173
    %v863 = vunpack.c.l.b16 %v174
    %v864 = vunpack.c.h.b16 %v174
    %v865 = vunpack.c.l.b16 %v175
    %v866 = vunpack.c.h.b16 %v175
    %v867 = vunpack.c.l.b16 %v176
    %v868 = vunpack.c.h.b16 %v176
    %v869 = vunpack.c.l.b16 %v177
    %v870 = vunpack.c.h.b16 %v177
    %v871 = vunpack.c.l.b16 %v178
    %v872 = vunpack.c.h.b16 %v178
    %v873 = vunpack.c.l.b16 %v179
    %v874 = vunpack.c.h.b16 %v179
    %v875 = vunpack.c.l.b16 %v180
    %v876 = vunpack.c.h.b16 %v180
    %v877 = vunpack.c.l.b16 %v181
    %v878 = vunpack.c.h.b16 %v181
    %v879 = vunpack.c.l.b16 %v182
    %v880 = vunpack.c.h.b16 %v182
    %v881 = vunpack.c.l.b16 %v183
    %v882 = vunpack.c.h.b16 %v183
    %v883 = vunpack.c.l.b16 %v184
    %v884 = vunpack.c.h.b16 %v184
    %v885 = vunpack.c.l.b16 %v185
    %v886 = vunpack.c.h.b16 %v185
    %v887 = vunpack.c.l.b16 %v186
    %v888 = vunpack.c.h.b16 %v186
    %v889 = vunpack.c.l.b16 %v187
    %v890 = vunpack.c.h.b16 %v187
    %v891 = vunpack.c.l.b16 %v188
    %v892 = vunpack.c.h.b16 %v188
    %v893 = vunpack.c.l.b16 %v189
    %v894 = vunpack.c.h.b16 %v189
    %v895 = vunpack.c.l.b16 %v190
    %v896 = vunpack.c.h.b16 %v190
    %v897 = vunpack.c.l.b16 %v191
    %v898 = vunpack.c.h.b16 %v191
    %v899 = vunpack.c.l.b16 %v192
    %v900 = vunpack.c.h.b16 %v192
    %v901 = vunpack.c.l.b16 %v193
    %v902 = vunpack.c.h.b16 %v193
    %v903 = vunpack.c.l.b16 %v194
    %v904 = vunpack.c.h.b16 %v194
    %v905 = vunpack.c.l.b16 %v195
    %v906 = vunpack.c.h.b16 %v195
    %v907 = vunpack.c.l.b16 %v196
    %v908 = vunpack.c.h.b16 %v196
    %v909 = vunpack.c.l.b16 %v197
    %v910 = vunpack.c.h.b16 %v197
    %v911 = vunpack.c.l.b16 %v198
    %v912 = vunpack.c.h.b16 %v198
    %v913 = vunpack.c.l.b16 %v199
    %v914 = vunpack.c.h.b16 %v199
    %v915 = vunpack.c.l.b16 %v200
    %v916 = vunpack.c.h.b16 %v200
    %v917 = vunpack.c.l.b16 %v201
    %v918 = vunpack.c.h.b16 %v201
    %v919 = vunpack.c.l.b16 %v202
    %v920 = vunpack.c.h.b16 %v202
    %v921 = vunpack.c.l.b16 %v203
    %v922 = vunpack.c.h.b16 %v203
    %v923 = vunpack.c.l.b16 %v204
    %v924 = vunpack.c.h.b16 %v204
    %v925 = vunpack.c.l.b16 %v205
    %v926 = vunpack.c.h.b16 %v205
    %v927 = vunpack.c.l.b16 %v206
    %v928 = vunpack.c.h.b16 %v206
    %v929 = vunpack.c.l.b16 %v207
    %v930 = vunpack.c.h.b16 %v207
    %v931 = vunpack.c.l.b16 %v208
    %v932 = vunpack.c.h.b16 %v208
    %v933 = vunpack.c.l.b16 %v209
    %v934 = vunpack.c.h.b16 %v209
    %v935 = vunpack.c.l.b16 %v210
    %v936 = vunpack.c.h.b16 %v210
    %v937 = vunpack.c.l.b16 %v211
    %v938 = vunpack.c.h.b16 %v211
    %v939 = vunpack.c.l.b16 %v212
    %v940 = vunpack.c.h.b16 %v212
    %v941 = vunpack.c.l.b16 %v213
    %v942 = vunpack.c.h.b16 %v213
    %v943 = vunpack.c.l.b16 %v214
    %v944 = vunpack.c.h.b16 %v214
    %v945 = vunpack.c.l.b16 %v215
    %v946 = vunpack.c.h.b16 %v215
    %v947 = vunpack.c.l.b16 %v216
    %v948 = vunpack.c.h.b16 %v216
    %v949 = vunpack.c.l.b16 %v217
    %v950 = vunpack.c.h.b16 %v217
    %v951 = vunpack.c.l.b16 %v218
    %v952 = vunpack.c.h.b16 %v218
    %v953 = vunpack.c.l.b16 %v219
    %v954 = vunpack.c.h.b16 %v219
    %v955 = vunpack.c.l.b16 %v220
    %v956 = vunpack.c.h.b16 %v220
    %v957 = vunpack.c.l.b16 %v221
    %v958 = vunpack.c.h.b16 %v221
    %v959 = vunpack.c.l.b16 %v222
    %v960 = vunpack.c.h.b16 %v222
    %v961 = vunpack.c.l.b16 %v223
    %v962 = vunpack.c.h.b16 %v223
    %v963 = vunpack.c.l.b16 %v224
    %v964 = vunpack.c.h.b16 %v224
    %v965 = vunpack.c.l.b16 %v225
    %v966 = vunpack.c.h.b16 %v225
    %v967 = vunpack.c.l.b16 %v226
    %v968 = vunpack.c.h.b16 %v226
    %v969 = vunpack.c.l.b16 %v227
    %v970 = vunpack.c.h.b16 %v227
    %v971 = vunpack.c.l.b16 %v228
    %v972 = vunpack.c.h.b16 %v228
    %v973 = vunpack.c.l.b16 %v229
    %v974 = vunpack.c.h.b16 %v229
    %v975 = vunpack.c.l.b16 %v230
    %v976 = vunpack.c.h.b16 %v230
    %v977 = vunpack.c.l.b16 %v231
    %v978 = vunpack.c.h.b16 %v231
    %v979 = vunpack.c.l.b16 %v232
    %v980 = vunpack.c.h.b16 %v232
    %v981 = vunpack.c.l.b16 %v233
    %v982 = vunpack.c.h.b16 %v233
    %v983 = vunpack.c.l.b16 %v234
    %v984 = vunpack.c.h.b16 %v234
    %v985 = vunpack.c.l.b16 %v235
    %v986 = vunpack.c.h.b16 %v235
    %v987 = vunpack.c.l.b16 %v236
    %v988 = vunpack.c.h.b16 %v236
    %v989 = vunpack.c.l.b16 %v237
    %v990 = vunpack.c.h.b16 %v237
    %v991 = vunpack.c.l.b16 %v238
    %v992 = vunpack.c.h.b16 %v238
    %v993 = vunpack.c.l.b16 %v239
    %v994 = vunpack.c.h.b16 %v239
    %v995 = vunpack.c.l.b16 %v240
    %v996 = vunpack.c.h.b16 %v240
    %v997 = vunpack.c.l.b16 %v241
    %v998 = vunpack.c.h.b16 %v241
    %v999 = vunpack.c.l.b16 %v242
    %v1000 = vunpack.c.h.b16 %v242
    %v1001 = vunpack.c.l.b16 %v243
    %v1002 = vunpack.c.h.b16 %v243
    %v1003 = vunpack.c.l.b16 %v244
    %v1004 = vunpack.c.h.b16 %v244
    %v1005 = vunpack.c.l.b16 %v245
    %v1006 = vunpack.c.h.b16 %v245
    %v1007 = vunpack.c.l.b16 %v246
    %v1008 = vunpack.c.h.b16 %v246
    %v1009 = vunpack.c.l.b16 %v247
    %v1010 = vunpack.c.h.b16 %v247
    %v1011 = vunpack.c.l.b16 %v248
    %v1012 = vunpack.c.h.b16 %v248
    %v1013 = vunpack.c.l.b16 %v249
    %v1014 = vunpack.c.h.b16 %v249
    %v1015 = vunpack.c.l.b16 %v250
    %v1016 = vunpack.c.h.b16 %v250
    %v1017 = vunpack.c.l.b16 %v251
    %v1018 = vunpack.c.h.b16 %v251
    %v1019 = vunpack.c.l.b16 %v252
    %v1020 = vunpack.c.h.b16 %v252
    %v1021 = vunpack.c.l.b16 %v253
    %v1022 = vunpack.c.h.b16 %v253
    %v1023 = vunpack.c.l.b16 %v254
    %v1024 = vunpack.c.h.b16 %v254
    %v1025 = vunpack.c.l.b16 %v255
    %v1026 = vunpack.c.h.b16 %v255
    %v1027 = vunpack.c.l.b16 %v256
    %v1028 = vunpack.c.h.b16 %v256
    %v1029 = vunpack.c.l.b16 %v257
    %v1030 = vunpack.c.h.b16 %v257
    %v1031 = vunpack.c.l.b16 %v258
    %v1032 = vunpack.c.h.b16 %v258
    %v1033 = vunpack.c.l.b16 %v259
    %v1034 = vunpack.c.h.b16 %v259
    %v1035 = vunpack.c.l.b16 %v260
    %v1036 = vunpack.c.h.b16 %v260
    %v1037 = vunpack.c.l.b16 %v261
    %v1038 = vunpack.c.h.b16 %v261
    %v1039 = vunpack.c.l.b16 %v262
    %v1040 = vunpack.c.h.b16 %v262
    %v1041 = vunpack.c.l.b16 %v263
    %v1042 = vunpack.c.h.b16 %v263
    %v1043 = vunpack.c.l.b16 %v264
    %v1044 = vunpack.c.h.b16 %v264
    %v1045 = vunpack.c.l.b16 %v265
    %v1046 = vunpack.c.h.b16 %v265
    %v1047 = vunpack.c.l.b16 %v266
    %v1048 = vunpack.c.h.b16 %v266
    %v1049 = vunpack.c.l.b16 %v267
    %v1050 = vunpack.c.h.b16 %v267
    %v1051 = vunpack.c.l.b16 %v268
    %v1052 = vunpack.c.h.b16 %v268
    %v1053 = vunpack.c.l.b16 %v269
    %v1054 = vunpack.c.h.b16 %v269
    %v1055 = vunpack.c.l.b16 %v270
    %v1056 = vunpack.c.h.b16 %v270
    %v1057 = vunpack.c.l.b16 %v271
    %v1058 = vunpack.c.h.b16 %v271
    %v1059 = vunpack.c.l.b16 %v272
    %v1060 = vunpack.c.h.b16 %v272
    %v1061 = vunpack.c.l.b16 %v273
    %v1062 = vunpack.c.h.b16 %v273
    %v1063 = vunpack.c.l.b16 %v274
    %v1064 = vunpack.c.h.b16 %v274
    %v1065 = vunpack.c.l.b16 %v275
    %v1066 = vunpack.c.h.b16 %v275
    %v1067 = vunpack.c.l.b16 %v276
    %v1068 = vunpack.c.h.b16 %v276
    %v1069 = vunpack.c.l.b16 %v277
    %v1070 = vunpack.c.h.b16 %v277
    %v1071 = vunpack.c.l.b16 %v278
    %v1072 = vunpack.c.h.b16 %v278
    %v1073 = vunpack.c.l.b16 %v279
    %v1074 = vunpack.c.h.b16 %v279
    %v1075 = vunpack.c.l.b16 %v280
    %v1076 = vunpack.c.h.b16 %v280
    %v1077 = vunpack.c.l.b16 %v281
    %v1078 = vunpack.c.h.b16 %v281
    %v1079 = vunpack.c.l.b16 %v282
    %v1080 = vunpack.c.h.b16 %v282
    %v1081 = vunpack.c.l.b16 %v283
    %v1082 = vunpack.c.h.b16 %v283
    %v1083 = vunpack.c.l.b16 %v284
    %v1084 = vunpack.c.h.b16 %v284
    %v1085 = vunpack.c.l.b16 %v285
    %v1086 = vunpack.c.h.b16 %v285
    %v1087 = vunpack.c.l.b16 %v286
    %v1088 = vunpack.c.h.b16 %v286
    %v1089 = vunpack.c.l.b16 %v287
    %v1090 = vunpack.c.h.b16 %v287
    %v1091 = vunpack.c.l.b16 %v288
    %v1092 = vunpack.c.h.b16 %v288
    %v1093 = vunpack.c.l.b16 %v289
    %v1094 = vunpack.c.h.b16 %v289
    %v1095 = vunpack.c.l.b16 %v290
    %v1096 = vunpack.c.h.b16 %v290
    %v1097 = vunpack.c.l.b16 %v291
    %v1098 = vunpack.c.h.b16 %v291
    %v1099 = vunpack.c.l.b16 %v292
    %v1100 = vunpack.c.h.b16 %v292
    %v1101 = vunpack.c.l.b16 %v293
    %v1102 = vunpack.c.h.b16 %v293
    %v1103 = vunpack.c.l.b16 %v294
    %v1104 = vunpack.c.h.b16 %v294
    %v1105 = vunpack.c.l.b16 %v295
    %v1106 = vunpack.c.h.b16 %v295
    %v1107 = vunpack.c.l.b16 %v296
    %v1108 = vunpack.c.h.b16 %v296
    %v1109 = vunpack.c.l.b16 %v297
    %v1110 = vunpack.c.h.b16 %v297
    %v1111 = vunpack.c.l.b16 %v298
    %v1112 = vunpack.c.h.b16 %v298
    %v1113 = vunpack.c.l.b16 %v299
    %v1114 = vunpack.c.h.b16 %v299
    %v1115 = vunpack.c.l.b16 %v300
    %v1116 = vunpack.c.h.b16 %v300
    %v1117 = vunpack.c.l.b16 %v301
    %v1118 = vunpack.c.h.b16 %v301
    %v1119 = vunpack.c.l.b16 %v302
    %v1120 = vunpack.c.h.b16 %v302
    %v1121 = vunpack.c.l.b16 %v303
    %v1122 = vunpack.c.h.b16 %v303
    %v1123 = vunpack.c.l.b16 %v304
    %v1124 = vunpack.c.h.b16 %v304
    %v1125 = vunpack.c.l.b16 %v305
    %v1126 = vunpack.c.h.b16 %v305
    %v1127 = vunpack.c.l.b16 %v306
    %v1128 = vunpack.c.h.b16 %v306
    %v1129 = vunpack.c.l.b16 %v307
    %v1130 = vunpack.c.h.b16 %v307
    %v1131 = vunpack.c.l.b16 %v308
    %v1132 = vunpack.c.h.b16 %v308
    %v1133 = vunpack.c.l.b16 %v309
    %v1134 = vunpack.c.h.b16 %v309
    %v1135 = vunpack.c.l.b16 %v310
    %v1136 = vunpack.c.h.b16 %v310
    %v1137 = vunpack.c.l.b16 %v311
    %v1138 = vunpack.c.h.b16 %v311
    %v1139 = vunpack.c.l.b16 %v312
    %v1140 = vunpack.c.h.b16 %v312
    %v1141 = vunpack.c.l.b16 %v313
    %v1142 = vunpack.c.h.b16 %v313
    %v1143 = vunpack.c.l.b16 %v314
    %v1144 = vunpack.c.h.b16 %v314
    %v1145 = vunpack.c.l.b16 %v315
    %v1146 = vunpack.c.h.b16 %v315
    %v1147 = vunpack.c.l.b16 %v316
    %v1148 = vunpack.c.h.b16 %v316
    %v1149 = vunpack.c.l.b16 %v317
    %v1150 = vunpack.c.h.b16 %v317
    %v1151 = vunpack.c.l.b16 %v318
    %v1152 = vunpack.c.h.b16 %v318
    %v1153 = vunpack.c.l.b16 %v319
    %v1154 = vunpack.c.h.b16 %v319
    %v1155 = vunpack.c.l.b16 %v320
    %v1156 = vunpack.c.h.b16 %v320
    %v1157 = vunpack.c.l.b16 %v321
    %v1158 = vunpack.c.h.b16 %v321
    %v1159 = vunpack.c.l.b16 %v322
    %v1160 = vunpack.c.h.b16 %v322
    %v1161 = vunpack.c.l.b16 %v323
    %v1162 = vunpack.c.h.b16 %v323
    %v1163 = vunpack.c.l.b16 %v324
    %v1164 = vunpack.c.h.b16 %v324
    %v1165 = vunpack.c.l.b16 %v325
    %v1166 = vunpack.c.h.b16 %v325
    %v1167 = vunpack.c.l.b16 %v326
    %v1168 = vunpack.c.h.b16 %v326
    %v1169 = vunpack.c.l.b16 %v327
    %v1170 = vunpack.c.h.b16 %v327
    %v1171 = vunpack.c.l.b16 %v328
    %v1172 = vunpack.c.h.b16 %v328
    %v1173 = vunpack.c.l.b16 %v329
    %v1174 = vunpack.c.h.b16 %v329
    %v1175 = vunpack.c.l.b16 %v330
    %v1176 = vunpack.c.h.b16 %v330
    %v1177 = vunpack.c.l.b16 %v331
    %v1178 = vunpack.c.h.b16 %v331
    %v1179 = vunpack.c.l.b16 %v332
    %v1180 = vunpack.c.h.b16 %v332
    %v1181 = vunpack.c.l.b16 %v333
    %v1182 = vunpack.c.h.b16 %v333
    %v1183 = vunpack.c.l.b16 %v334
    %v1184 = vunpack.c.h.b16 %v334
    %v1185 = vunpack.c.l.b16 %v335
    %v1186 = vunpack.c.h.b16 %v335
    %v1187 = vunpack.c.l.b16 %v336
    %v1188 = vunpack.c.h.b16 %v336
    %v1189 = vunpack.c.l.b16 %v337
    %v1190 = vunpack.c.h.b16 %v337
    %v1191 = vunpack.c.l.b16 %v338
    %v1192 = vunpack.c.h.b16 %v338
    %v1193 = vunpack.c.l.b16 %v339
    %v1194 = vunpack.c.h.b16 %v339
    %v1195 = vunpack.c.l.b16 %v340
    %v1196 = vunpack.c.h.b16 %v340
    %v1197 = vunpack.c.l.b16 %v341
    %v1198 = vunpack.c.h.b16 %v341
    %v1199 = vunpack.c.l.b16 %v342
    %v1200 = vunpack.c.h.b16 %v342
    %v1201 = vunpack.c.l.b16 %v343
    %v1202 = vunpack.c.h.b16 %v343
    %v1203 = vunpack.c.l.b16 %v344
    %v1204 = vunpack.c.h.b16 %v344
    %v1205 = vunpack.c.l.b16 %v345
    %v1206 = vunpack.c.h.b16 %v345
    %v1207 = vunpack.c.l.b16 %v346
    %v1208 = vunpack.c.h.b16 %v346
    %v1209 = vunpack.c.l.b16 %v347
    %v1210 = vunpack.c.h.b16 %v347
    %v1211 = vunpack.c.l.b16 %v348
    %v1212 = vunpack.c.h.b16 %v348
    %v1213 = vunpack.c.l.b16 %v349
    %v1214 = vunpack.c.h.b16 %v349
    %v1215 = vunpack.c.l.b16 %v350
    %v1216 = vunpack.c.h.b16 %v350
    %v1217 = vunpack.c.l.b16 %v351
    %v1218 = vunpack.c.h.b16 %v351
    %v1219 = vunpack.c.l.b16 %v352
    %v1220 = vunpack.c.h.b16 %v352
    %v1221 = vunpack.c.l.b16 %v353
    %v1222 = vunpack.c.h.b16 %v353
    %v1223 = vunpack.c.l.b16 %v354
    %v1224 = vunpack.c.h.b16 %v354
    %v1225 = vunpack.c.l.b16 %v355
    %v1226 = vunpack.c.h.b16 %v355
    %v1227 = vunpack.c.l.b16 %v356
    %v1228 = vunpack.c.h.b16 %v356
    %v1229 = vunpack.c.l.b16 %v357
    %v1230 = vunpack.c.h.b16 %v357
    %v1231 = vunpack.c.l.b16 %v358
    %v1232 = vunpack.c.h.b16 %v358
    %v1233 = vunpack.c.l.b16 %v359
    %v1234 = vunpack.c.h.b16 %v359
    %v1235 = vunpack.c.l.b16 %v360
    %v1236 = vunpack.c.h.b16 %v360
    %v1237 = vunpack.c.l.b16 %v361
    %v1238 = vunpack.c.h.b16 %v361
    %v1239 = vunpack.c.l.b16 %v362
    %v1240 = vunpack.c.h.b16 %v362
    %v1241 = vunpack.c.l.b16 %v363
    %v1242 = vunpack.c.h.b16 %v363
    %v1243 = vunpack.c.l.b16 %v364
    %v1244 = vunpack.c.h.b16 %v364
    %v1245 = vunpack.c.l.b16 %v365
    %v1246 = vunpack.c.h.b16 %v365
    %v1247 = vunpack.c.l.b16 %v366
    %v1248 = vunpack.c.h.b16 %v366
    %v1249 = vunpack.c.l.b16 %v367
    %v1250 = vunpack.c.h.b16 %v367
    %v1251 = vunpack.c.l.b16 %v368
    %v1252 = vunpack.c.h.b16 %v368
    %v1253 = vunpack.c.l.b16 %v369
    %v1254 = vunpack.c.h.b16 %v369
    %v1255 = vunpack.c.l.b16 %v370
    %v1256 = vunpack.c.h.b16 %v370
    %v1257 = vunpack.c.l.b16 %v371
    %v1258 = vunpack.c.h.b16 %v371
    %v1259 = vunpack.c.l.b16 %v372
    %v1260 = vunpack.c.h.b16 %v372
    %v1261 = vunpack.c.l.b16 %v373
    %v1262 = vunpack.c.h.b16 %v373
    %v1263 = vunpack.c.l.b16 %v374
    %v1264 = vunpack.c.h.b16 %v374
    %v1265 = vunpack.c.l.b16 %v375
    %v1266 = vunpack.c.h.b16 %v375
    %v1267 = vunpack.c.l.b16 %v376
    %v1268 = vunpack.c.h.b16 %v376
    %v1269 = vunpack.c.l.b16 %v377
    %v1270 = vunpack.c.h.b16 %v377
    %v1271 = vunpack.c.l.b16 %v378
    %v1272 = vunpack.c.h.b16 %v378
    %v1273 = vunpack.c.l.b16 %v379
    %v1274 = vunpack.c.h.b16 %v379
    %v1275 = vunpack.c.l.b16 %v380
    %v1276 = vunpack.c.h.b16 %v380
    %v1277 = vunpack.c.l.b16 %v381
    %v1278 = vunpack.c.h.b16 %v381
    %v1279 = vunpack.c.l.b16 %v382
    %v1280 = vunpack.c.h.b16 %v382
    %v1281 = vunpack.c.l.b16 %v383
    %v1282 = vunpack.c.h.b16 %v383
    %v1283 = vunpack.c.l.b16 %v384
    %v1284 = vunpack.c.h.b16 %v384
    %v1285 = vunpack.c.l.b16 %v385
    %v1286 = vunpack.c.h.b16 %v385
    %v1287 = vunpack.c.l.b16 %v386
    %v1288 = vunpack.c.h.b16 %v386
    %v1289 = vunpack.c.l.b16 %v387
    %v1290 = vunpack.c.h.b16 %v387
    %v1291 = vunpack.c.l.b16 %v388
    %v1292 = vunpack.c.h.b16 %v388
    %v1293 = vunpack.c.l.b16 %v389
    %v1294 = vunpack.c.h.b16 %v389
    %v1295 = vunpack.c.l.b16 %v390
    %v1296 = vunpack.c.h.b16 %v390
    %v1297 = vunpack.c.l.b16 %v391
    %v1298 = vunpack.c.h.b16 %v391
    %v1299 = vunpack.c.l.b16 %v392
    %v1300 = vunpack.c.h.b16 %v392
    %v1301 = vunpack.c.l.b16 %v393
    %v1302 = vunpack.c.h.b16 %v393
    %v1303 = vunpack.c.l.b16 %v394
    %v1304 = vunpack.c.h.b16 %v394
    %v1305 = vunpack.c.l.b16 %v395
    %v1306 = vunpack.c.h.b16 %v395
    %v1307 = vunpack.c.l.b16 %v396
    %v1308 = vunpack.c.h.b16 %v396
    %v1309 = vunpack.c.l.b16 %v397
    %v1310 = vunpack.c.h.b16 %v397
    %v1311 = vunpack.c.l.b16 %v398
    %v1312 = vunpack.c.h.b16 %v398
    %v1313 = vunpack.c.l.b16 %v399
    %v1314 = vunpack.c.h.b16 %v399
    %v1315 = vunpack.c.l.b16 %v400
    %v1316 = vunpack.c.h.b16 %v400
    %v1317 = vunpack.c.l.b16 %v401
    %v1318 = vunpack.c.h.b16 %v401
    %v1319 = vunpack.c.l.b16 %v402
    %v1320 = vunpack.c.h.b16 %v402
    %v1321 = vunpack.c.l.b16 %v403
    %v1322 = vunpack.c.h.b16 %v403
    %v1323 = vunpack.c.l.b16 %v404
    %v1324 = vunpack.c.h.b16 %v404
    %v1325 = vunpack.c.l.b16 %v405
    %v1326 = vunpack.c.h.b16 %v405
    %v1327 = vunpack.c.l.b16 %v406
    %v1328 = vunpack.c.h.b16 %v406
    %v1329 = vunpack.c.l.b16 %v407
    %v1330 = vunpack.c.h.b16 %v407
    %v1331 = vunpack.c.l.b16 %v408
    %v1332 = vunpack.c.h.b16 %v408
    %v1333 = vunpack.c.l.b16 %v409
    %v1334 = vunpack.c.h.b16 %v409
    %v1335 = vunpack.c.l.b16 %v410
    %v1336 = vunpack.c.h.b16 %v410
    %v1337 = vpack.c.b16 %v767, %v761
    %v1338 = vpack.c.b16 %v768, %v762
    %v1339 = vpack.c.b16 %v769, %v763
    %v1340 = vpack.c.b16 %v770, %v764
    %v1341 = vpack.c.b16 %v771, %v765
    %v1342 = vpack.c.b16 %v772, %v766
    %v1343 = vpack.c.b16 %v779, %v773
    %v1344 = vpack.c.b16 %v780, %v774
    %v1345 = vpack.c.b16 %v781, %v775
    %v1346 = vpack.c.b16 %v782, %v776
    %v1347 = vpack.c.b16 %v783, %v777
    %v1348 = vpack.c.b16 %v784, %v778
    %v1349 = vpack.c.b16 %v791, %v785
    %v1350 = vpack.c.b16 %v792, %v786
    %v1351 = vpack.c.b16 %v793, %v787
    %v1352 = vpack.c.b16 %v794, %v788
    %v1353 = vpack.c.b16 %v795, %v789
    %v1354 = vpack.c.b16 %v796, %v790
    %v1355 = vpack.c.b16 %v803, %v797
    %v1356 = vpack.c.b16 %v804, %v798
    %v1357 = vpack.c.b16 %v805, %v799
    %v1358 = vpack.c.b16 %v806, %v800
    %v1359 = vpack.c.b16 %v807, %v801
    %v1360 = vpack.c.b16 %v808, %v802
    %v1361 = vpack.c.b16 %v815, %v809
    %v1362 = vpack.c.b16 %v816, %v810
    %v1363 = vpack.c.b16 %v817, %v811
    %v1364 = vpack.c.b16 %v818, %v812
    %v1365 = vpack.c.b16 %v819, %v813
    %v1366 = vpack.c.b16 %v820, %v814
    %v1367 = vpack.c.b16 %v827, %v821
    %v1368 = vpack.c.b16 %v828, %v822
    %v1369 = vpack.c.b16 %v829, %v823
    %v1370 = vpack.c.b16 %v830, %v824
    %v1371 = vpack.c.b16 %v831, %v825
    %v1372 = vpack.c.b16 %v832, %v826
    %v1373 = vpack.c.b16 %v839, %v833
    %v1374 = vpack.c.b16 %v840, %v834
    %v1375 = vpack.c.b16 %v841, %v835
    %v1376 = vpack.c.b16 %v842, %v836
    %v1377 = vpack.c.b16 %v843, %v837
    %v1378 = vpack.c.b16 %v844, %v838
    %v1379 = vpack.c.b16 %v851, %v845
    %v1380 = vpack.c.b16 %v852, %v846
    %v1381 = vpack.c.b16 %v853, %v847
    %v1382 = vpack.c.b16 %v854, %v848
    %v1383 = vpack.c.b16 %v855, %v849
    %v1384 = vpack.c.b16 %v856, %v850
    %v1385 = vpack.c.b16 %v863, %v857
    %v1386 = vpack.c.b16 %v864, %v858
    %v1387 = vpack.c.b16 %v865, %v859
    %v1388 = vpack.c.b16 %v866, %v860
    %v1389 = vpack.c.b16 %v867, %v861
    %v1390 = vpack.c.b16 %v868, %v862
    %v1391 = vpack.c.b16 %v875, %v869
    %v1392 = vpack.c.b16 %v876, %v870
    %v1393 = vpack.c.b16 %v877, %v871
    %v1394 = vpack.c.b16 %v878, %v872
    %v1395 = vpack.c.b16 %v879, %v873
    %v1396 = vpack.c.b16 %v880, %v874
    %v1397 = vpack.c.b16 %v887, %v881
    %v1398 = vpack.c.b16 %v888, %v882
    %v1399 = vpack.c.b16 %v889, %v883
    %v1400 = vpack.c.b16 %v890, %v884
    %v1401 = vpack.c.b16 %v891, %v885
    %v1402 = vpack.c.b16 %v892, %v886
    %v1403 = vpack.c.b16 %v899, %v893
    %v1404 = vpack.c.b16 %v900, %v894
    %v1405 = vpack.c.b16 %v901, %v895
    %v1406 = vpack.c.b16 %v902, %v896
    %v1407 = vpack.c.b16 %v903, %v897
    %v1408 = vpack.c.b16 %v904, %v898
    %v1409 = vpack.c.b16 %v911, %v905
    %v1410 = vpack.c.b16 %v912, %v906
    %v1411 = vpack.c.b16 %v913, %v907
    %v1412 = vpack.c.b16 %v914, %v908
    %v1413 = vpack.c.b16 %v915, %v909
    %v1414 = vpack.c.b16 %v916, %v910
    %v1415 = vpack.c.b16 %v923, %v917
    %v1416 = vpack.c.b16 %v924, %v918
    %v1417 = vpack.c.b16 %v925, %v919
    %v1418 = vpack.c.b16 %v926, %v920
    %v1419 = vpack.c.b16 %v927, %v921
    %v1420 = vpack.c.b16 %v928, %v922
    %v1421 = vpack.c.b16 %v935, %v929
    %v1422 = vpack.c.b16 %v936, %v930
    %v1423 = vpack.c.b16 %v937, %v931
    %v1424 = vpack.c.b16 %v938, %v932
    %v1425 = vpack.c.b16 %v939, %v933
    %v1426 = vpack.c.b16 %v940, %v934
    %v1427 = vpack.c.b16 %v947, %v941
    %v1428 = vpack.c.b16 %v948, %v942
    %v1429 = vpack.c.b16 %v949, %v943
    %v1430 = vpack.c.b16 %v950, %v944
    %v1431 = vpack.c.b16 %v951, %v945
    %v1432 = vpack.c.b16 %v952, %v946
    %v1433 = vpack.c.b16 %v959, %v953
    %v1434 = vpack.c.b16 %v960, %v954
    %v1435 = vpack.c.b16 %v961, %v955
    %v1436 = vpack.c.b16 %v962, %v956
    %v1437 = vpack.c.b16 %v963, %v957
    %v1438 = vpack.c.b16 %v964, %v958
    %v1439 = vpack.c.b16 %v971, %v965
    %v1440 = vpack.c.b16 %v972, %v966
    %v1441 = vpack.c.b16 %v973, %v967
    %v1442 = vpack.c.b16 %v974, %v968
    %v1443 = vpack.c.b16 %v975, %v969
    %v1444 = vpack.c.b16 %v976, %v970
    %v1445 = vpack.c.b16 %v983, %v977
    %v1446 = vpack.c.b16 %v984, %v978
    %v1447 = vpack.c.b16 %v985, %v979
    %v1448 = vpack.c.b16 %v986, %v980
    %v1449 = vpack.c.b16 %v987, %v981
    %v1450 = vpack.c.b16 %v988, %v982
    %v1451 = vpack.c.b16 %v995, %v989
    %v1452 = vpack.c.b16 %v996, %v990
    %v1453 = vpack.c.b16 %v997, %v991
    %v1454 = vpack.c.b16 %v998, %v992
    %v1455 = vpack.c.b16 %v999, %v993
    %v1456 = vpack.c.b16 %v1000, %v994
    %v1457 = vpack.c.b16 %v1007, %v1001
    %v1458 = vpack.c.b16 %v1008, %v1002
    %v1459 = vpack.c.b16 %v1009, %v1003
    %v1460 = vpack.c.b16 %v1010, %v1004
    %v1461 = vpack.c.b16 %v1011, %v1005
    %v1462 = vpack.c.b16 %v1012, %v1006
    %v1463 = vpack.c.b16 %v1019, %v1013
    %v1464 = vpack.c.b16 %v1020, %v1014
    %v1465 = vpack.c.b16 %v1021, %v1015
    %v1466 = vpack.c.b16 %v1022, %v1016
    %v1467 = vpack.c.b16 %v1023, %v1017
    %v1468 = vpack.c.b16 %v1024, %v1018
    %v1469 = vpack.c.b16 %v1031, %v1025
    %v1470 = vpack.c.b16 %v1032, %v1026
    %v1471 = vpack.c.b16 %v1033, %v1027
    %v1472 = vpack.c.b16 %v1034, %v1028
    %v1473 = vpack.c.b16 %v1035, %v1029
    %v1474 = vpack.c.b16 %v1036, %v1030
    %v1475 = vpack.c.b16 %v1043, %v1037
    %v1476 = vpack.c.b16 %v1044, %v1038
    %v1477 = vpack.c.b16 %v1045, %v1039
    %v1478 = vpack.c.b16 %v1046, %v1040
    %v1479 = vpack.c.b16 %v1047, %v1041
    %v1480 = vpack.c.b16 %v1048, %v1042
    %v1481 = vpack.c.b16 %v1055, %v1049
    %v1482 = vpack.c.b16 %v1056, %v1050
    %v1483 = vpack.c.b16 %v1057, %v1051
    %v1484 = vpack.c.b16 %v1058, %v1052
    %v1485 = vpack.c.b16 %v1059, %v1053
    %v1486 = vpack.c.b16 %v1060, %v1054
    %v1487 = vpack.c.b16 %v1067, %v1061
    %v1488 = vpack.c.b16 %v1068, %v1062
    %v1489 = vpack.c.b16 %v1069, %v1063
    %v1490 = vpack.c.b16 %v1070, %v1064
    %v1491 = vpack.c.b16 %v1071, %v1065
    %v1492 = vpack.c.b16 %v1072, %v1066
    %v1493 = vpack.c.b16 %v1079, %v1073
    %v1494 = vpack.c.b16 %v1080, %v1074
    %v1495 = vpack.c.b16 %v1081, %v1075
    %v1496 = vpack.c.b16 %v1082, %v1076
    %v1497 = vpack.c.b16 %v1083, %v1077
    %v1498 = vpack.c.b16 %v1084, %v1078
    %v1499 = vpack.c.b16 %v1091, %v1085
    %v1500 = vpack.c.b16 %v1092, %v1086
    %v1501 = vpack.c.b16 %v1093, %v1087
    %v1502 = vpack.c.b16 %v1094, %v1088
    %v1503 = vpack.c.b16 %v1095, %v1089
    %v1504 = vpack.c.b16 %v1096, %v1090
    %v1505 = vpack.c.b16 %v1103, %v1097
    %v1506 = vpack.c.b16 %v1104, %v1098
    %v1507 = vpack.c.b16 %v1105, %v1099
    %v1508 = vpack.c.b16 %v1106, %v1100
    %v1509 = vpack.c.b16 %v1107, %v1101
    %v1510 = vpack.c.b16 %v1108, %v1102
    %v1511 = vpack.c.b16 %v1115, %v1109
    %v1512 = vpack.c.b16 %v1116, %v1110
    %v1513 = vpack.c.b16 %v1117, %v1111
    %v1514 = vpack.c.b16 %v1118, %v1112
    %v1515 = vpack.c.b16 %v1119, %v1113
    %v1516 = vpack.c.b16 %v1120, %v1114
    %v1517 = vpack.c.b16 %v1127, %v1121
    %v1518 = vpack.c.b16 %v1128, %v1122
    %v1519 = vpack.c.b16 %v1129, %v1123
    %v1520 = vpack.c.b16 %v1130, %v1124
    %v1521 = vpack.c.b16 %v1131, %v1125
    %v1522 = vpack.c.b16 %v1132, %v1126
    %v1523 = vpack.c.b16 %v1139, %v1133
    %v1524 = vpack.c.b16 %v1140, %v1134
    %v1525 = vpack.c.b16 %v1141, %v1135
    %v1526 = vpack.c.b16 %v1142, %v1136
    %v1527 = vpack.c.b16 %v1143, %v1137
    %v1528 = vpack.c.b16 %v1144, %v1138
    %v1529 = vpack.c.b16 %v1151, %v1145
    %v1530 = vpack.c.b16 %v1152, %v1146
    %v1531 = vpack.c.b16 %v1153, %v1147
    %v1532 = vpack.c.b16 %v1154, %v1148
    %v1533 = vpack.c.b16 %v1155, %v1149
    %v1534 = vpack.c.b16 %v1156, %v1150
    %v1535 = vpack.c.b16 %v1163, %v1157
    %v1536 = vpack.c.b16 %v1164, %v1158
    %v1537 = vpack.c.b16 %v1165, %v1159
    %v1538 = vpack.c.b16 %v1166, %v1160
    %v1539 = vpack.c.b16 %v1167, %v1161
    %v1540 = vpack.c.b16 %v1168, %v1162
    %v1541 = vpack.c.b16 %v1175, %v1169
    %v1542 = vpack.c.b16 %v1176, %v1170
    %v1543 = vpack.c.b16 %v1177, %v1171
    %v1544 = vpack.c.b16 %v1178, %v1172
    %v1545 = vpack.c.b16 %v1179, %v1173
    %v1546 = vpack.c.b16 %v1180, %v1174
    %v1547 = vpack.c.b16 %v1187, %v1181
    %v1548 = vpack.c.b16 %v1188, %v1182
    %v1549 = vpack.c.b16 %v1189, %v1183
    %v1550 = vpack.c.b16 %v1190, %v1184
    %v1551 = vpack.c.b16 %v1191, %v1185
    %v1552 = vpack.c.b16 %v1192, %v1186
    %v1553 = vpack.c.b16 %v1199, %v1193
    %v1554 = vpack.c.b16 %v1200, %v1194
    %v1555 = vpack.c.b16 %v1201, %v1195
    %v1556 = vpack.c.b16 %v1202, %v1196
    %v1557 = vpack.c.b16 %v1203, %v1197
    %v1558 = vpack.c.b16 %v1204, %v1198
    %v1559 = vpack.c.b16 %v1211, %v1205
    %v1560 = vpack.c.b16 %v1212, %v1206
    %v1561 = vpack.c.b16 %v1213, %v1207
    %v1562 = vpack.c.b16 %v1214, %v1208
    %v1563 = vpack.c.b16 %v1215, %v1209
    %v1564 = vpack.c.b16 %v1216, %v1210
    %v1565 = vpack.c.b16 %v1223, %v1217
    %v1566 = vpack.c.b16 %v1224, %v1218
    %v1567 = vpack.c.b16 %v1225, %v1219
    %v1568 = vpack.c.b16 %v1226, %v1220
    %v1569 = vpack.c.b16 %v1227, %v1221
    %v1570 = vpack.c.b16 %v1228, %v1222
    %v1571 = vpack.c.b16 %v1235, %v1229
    %v1572 = vpack.c.b16 %v1236, %v1230
    %v1573 = vpack.c.b16 %v1237, %v1231
    %v1574 = vpack.c.b16 %v1238, %v1232
    %v1575 = vpack.c.b16 %v1239, %v1233
    %v1576 = vpack.c.b16 %v1240, %v1234
    %v1577 = vpack.c.b16 %v1247, %v1241
    %v1578 = vpack.c.b16 %v1248, %v1242
    %v1579 = vpack.c.b16 %v1249, %v1243
    %v1580 = vpack.c.b16 %v1250, %v1244
    %v1581 = vpack.c.b16 %v1251, %v1245
    %v1582 = vpack.c.b16 %v1252, %v1246
    %v1583 = vpack.c.b16 %v1259, %v1253
    %v1584 = vpack.c.b16 %v1260, %v1254
    %v1585 = vpack.c.b16 %v1261, %v1255
    %v1586 = vpack.c.b16 %v1262, %v1256
    %v1587 = vpack.c.b16 %v1263, %v1257
    %v1588 = vpack.c.b16 %v1264, %v1258
    %v1589 = vpack.c.b16 %v1271, %v1265
    %v1590 = vpack.c.b16 %v1272, %v1266
    %v1591 = vpack.c.b16 %v1273, %v1267
    %v1592 = vpack.c.b16 %v1274, %v1268
    %v1593 = vpack.c.b16 %v1275, %v1269
    %v1594 = vpack.c.b16 %v1276, %v1270
    %v1595 = vpack.c.b16 %v1283, %v1277
    %v1596 = vpack.c.b16 %v1284, %v1278
    %v1597 = vpack.c.b16 %v1285, %v1279
    %v1598 = vpack.c.b16 %v1286, %v1280
    %v1599 = vpack.c.b16 %v1287, %v1281
    %v1600 = vpack.c.b16 %v1288, %v1282
    %v1601 = vpack.c.b16 %v1295, %v1289
    %v1602 = vpack.c.b16 %v1296, %v1290
    %v1603 = vpack.c.b16 %v1297, %v1291
    %v1604 = vpack.c.b16 %v1298, %v1292
    %v1605 = vpack.c.b16 %v1299, %v1293
    %v1606 = vpack.c.b16 %v1300, %v1294
    %v1607 = vpack.c.b16 %v1307, %v1301
    %v1608 = vpack.c.b16 %v1308, %v1302
    %v1609 = vpack.c.b16 %v1309, %v1303
    %v1610 = vpack.c.b16 %v1310, %v1304
    %v1611 = vpack.c.b16 %v1311, %v1305
    %v1612 = vpack.c.b16 %v1312, %v1306
    %v1613 = vpack.c.b16 %v1319, %v1313
    %v1614 = vpack.c.b16 %v1320, %v1314
    %v1615 = vpack.c.b16 %v1321, %v1315
    %v1616 = vpack.c.b16 %v1322, %v1316
    %v1617 = vpack.c.b16 %v1323, %v1317
    %v1618 = vpack.c.b16 %v1324, %v1318
    %v1619 = vpack.c.b16 %v1331, %v1325
    %v1620 = vpack.c.b16 %v1332, %v1326
    %v1621 = vpack.c.b16 %v1333, %v1327
    %v1622 = vpack.c.b16 %v1334, %v1328
    %v1623 = vpack.c.b16 %v1335, %v1329
    %v1624 = vpack.c.b16 %v1336, %v1330
    %1913 = vmatprep.subr.bf16.mxu0 %v1380
    %1914 = vmatpush1.bf16.msra.mxu0 %v1379
    %1915 = vmatprep.subr.bf16.mxu0 %v1374
    %1916 = vmatpush1.bf16.msra.mxu0 %v1373
    %1917 = vmatprep.subr.bf16.mxu0 %v1368
    %1918 = vmatpush1.bf16.msra.mxu0 %v1367
    %1919 = vmatprep.subr.bf16.mxu0 %v1362
    %1920 = vmatpush1.bf16.msra.mxu0 %v1361
    %1921 = vmatprep.subr.bf16.mxu0 %v1356
    %1922 = vmatpush1.bf16.msra.mxu0 %v1355
    %1923 = vmatprep.subr.bf16.mxu0 %v1350
    %1924 = vmatpush1.bf16.msra.mxu0 %v1349
    %1925 = vmatprep.subr.bf16.mxu0 %v1344
    %1926 = vmatpush1.bf16.msra.mxu0 %v1343
    %1927 = vmatprep.subr.bf16.mxu0 %v1338
    %1928 = vmatpush1.bf16.msra.mxu0 %v1337
    %1929 = vmatprep.subr.bf16.mxu0 %v1428
    %1930 = vmatpush2.bf16.msra.mxu0 %v1427
    %1931 = vmatprep.subr.bf16.mxu0 %v1422
    %1932 = vmatpush2.bf16.msra.mxu0 %v1421
    %1933 = vmatprep.subr.bf16.mxu0 %v1416
    %1934 = vmatpush2.bf16.msra.mxu0 %v1415
    %1935 = vmatprep.subr.bf16.mxu0 %v1410
    %1936 = vmatpush2.bf16.msra.mxu0 %v1409
    %1937 = vmatprep.subr.bf16.mxu0 %v1404
    %1938 = vmatpush2.bf16.msra.mxu0 %v1403
    %1939 = vmatprep.subr.bf16.mxu0 %v1398
    %1940 = vmatpush2.bf16.msra.mxu0 %v1397
    %1941 = vmatprep.subr.bf16.mxu0 %v1392
    %1942 = vmatpush2.bf16.msra.mxu0 %v1391
    %1943 = vmatprep.subr.bf16.mxu0 %v1386
    %1944 = vmatpush2.bf16.msra.mxu0 %v1385
    %1945 = vmatprep.mubr.bf16.mxu0 %v462
    %1946 = vmatmul.mubr.bf16.gmra.mxu0 %v461
    %v1947 = vpop.f32.mrf.mxu0
    %v1948 = vadd.f32 %v416, %v1947
    %v1949 = vpop.f32.mrf.mxu0
    %v1950 = vadd.f32 %v420, %v1949
    %v1951 = vpop.f32.mrf.mxu0
    %v1952 = vadd.f32 %v416, %v1951
    %v1953 = vpop.f32.mrf.mxu0
    %v1954 = vadd.f32 %v420, %v1953
    %1955 = vdwg.mxu0
    %1956 = vmatprep.subr.bf16.mxu0 %v1476
    %1957 = vmatpush1.bf16.msra.mxu0 %v1475
    %1958 = vmatprep.subr.bf16.mxu0 %v1470
    %1959 = vmatpush1.bf16.msra.mxu0 %v1469
    %1960 = vmatprep.subr.bf16.mxu0 %v1464
    %1961 = vmatpush1.bf16.msra.mxu0 %v1463
    %1962 = vmatprep.subr.bf16.mxu0 %v1458
    %1963 = vmatpush1.bf16.msra.mxu0 %v1457
    %1964 = vmatprep.subr.bf16.mxu0 %v1452
    %1965 = vmatpush1.bf16.msra.mxu0 %v1451
    %1966 = vmatprep.subr.bf16.mxu0 %v1446
    %1967 = vmatpush1.bf16.msra.mxu0 %v1445
    %1968 = vmatprep.subr.bf16.mxu0 %v1440
    %1969 = vmatpush1.bf16.msra.mxu0 %v1439
    %1970 = vmatprep.subr.bf16.mxu0 %v1434
    %1971 = vmatpush1.bf16.msra.mxu0 %v1433
    %1972 = vmatprep.subr.bf16.mxu0 %v1524
    %1973 = vmatpush2.bf16.msra.mxu0 %v1523
    %1974 = vmatprep.subr.bf16.mxu0 %v1518
    %1975 = vmatpush2.bf16.msra.mxu0 %v1517
    %1976 = vmatprep.subr.bf16.mxu0 %v1512
    %1977 = vmatpush2.bf16.msra.mxu0 %v1511
    %1978 = vmatprep.subr.bf16.mxu0 %v1506
    %1979 = vmatpush2.bf16.msra.mxu0 %v1505
    %1980 = vmatprep.subr.bf16.mxu0 %v1500
    %1981 = vmatpush2.bf16.msra.mxu0 %v1499
    %1982 = vmatprep.subr.bf16.mxu0 %v1494
    %1983 = vmatpush2.bf16.msra.mxu0 %v1493
    %1984 = vmatprep.subr.bf16.mxu0 %v1488
    %1985 = vmatpush2.bf16.msra.mxu0 %v1487
    %1986 = vmatprep.subr.bf16.mxu0 %v1482
    %1987 = vmatpush2.bf16.msra.mxu0 %v1481
    %1988 = vmatprep.mubr.bf16.mxu0 %v464
    %1989 = vmatmul.mubr.bf16.gmra.mxu0 %v463
    %v1990 = vpop.f32.mrf.mxu0
    %v1991 = vadd.f32 %v1948, %v1990
    %v1992 = vpop.f32.mrf.mxu0
    %v1993 = vadd.f32 %v1950, %v1992
    %v1994 = vpop.f32.mrf.mxu0
    %v1995 = vadd.f32 %v1952, %v1994
    %v1996 = vpop.f32.mrf.mxu0
    %v1997 = vadd.f32 %v1954, %v1996
    %1998 = vdwg.mxu0
    %1999 = vmatprep.subr.bf16.mxu0 %v1572
    %2000 = vmatpush1.bf16.msra.mxu0 %v1571
    %2001 = vmatprep.subr.bf16.mxu0 %v1566
    %2002 = vmatpush1.bf16.msra.mxu0 %v1565
    %2003 = vmatprep.subr.bf16.mxu0 %v1560
    %2004 = vmatpush1.bf16.msra.mxu0 %v1559
    %2005 = vmatprep.subr.bf16.mxu0 %v1554
    %2006 = vmatpush1.bf16.msra.mxu0 %v1553
    %2007 = vmatprep.subr.bf16.mxu0 %v1548
    %2008 = vmatpush1.bf16.msra.mxu0 %v1547
    %2009 = vmatprep.subr.bf16.mxu0 %v1542
    %2010 = vmatpush1.bf16.msra.mxu0 %v1541
    %2011 = vmatprep.subr.bf16.mxu0 %v1536
    %2012 = vmatpush1.bf16.msra.mxu0 %v1535
    %2013 = vmatprep.subr.bf16.mxu0 %v1530
    %2014 = vmatpush1.bf16.msra.mxu0 %v1529
    %2015 = vmatprep.subr.bf16.mxu0 %v1620
    %2016 = vmatpush2.bf16.msra.mxu0 %v1619
    %2017 = vmatprep.subr.bf16.mxu0 %v1614
    %2018 = vmatpush2.bf16.msra.mxu0 %v1613
    %2019 = vmatprep.subr.bf16.mxu0 %v1608
    %2020 = vmatpush2.bf16.msra.mxu0 %v1607
    %2021 = vmatprep.subr.bf16.mxu0 %v1602
    %2022 = vmatpush2.bf16.msra.mxu0 %v1601
    %2023 = vmatprep.subr.bf16.mxu0 %v1596
    %2024 = vmatpush2.bf16.msra.mxu0 %v1595
    %2025 = vmatprep.subr.bf16.mxu0 %v1590
    %2026 = vmatpush2.bf16.msra.mxu0 %v1589
    %2027 = vmatprep.subr.bf16.mxu0 %v1584
    %2028 = vmatpush2.bf16.msra.mxu0 %v1583
    %2029 = vmatprep.subr.bf16.mxu0 %v1578
    %2030 = vmatpush2.bf16.msra.mxu0 %v1577
    %2031 = vmatprep.mubr.bf16.mxu0 %v466
    %2032 = vmatmul.mubr.bf16.gmra.mxu0 %v465
    %v2033 = vpop.f32.mrf.mxu0
    %v2034 = vadd.f32 %v1991, %v2033
    %v2035 = vpop.f32.mrf.mxu0
    %v2036 = vadd.f32 %v1993, %v2035
    %v2037 = vpop.f32.mrf.mxu0
    %v2038 = vadd.f32 %v1995, %v2037
    %v2039 = vpop.f32.mrf.mxu0
    %v2040 = vadd.f32 %v1997, %v2039
    %2041 = vdwg.mxu0
    %2042 = vmatprep.subr.bf16.mxu0 %v1382
    %2043 = vmatpush1.bf16.msra.mxu0 %v1381
    %2044 = vmatprep.subr.bf16.mxu0 %v1376
    %2045 = vmatpush1.bf16.msra.mxu0 %v1375
    %2046 = vmatprep.subr.bf16.mxu0 %v1370
    %2047 = vmatpush1.bf16.msra.mxu0 %v1369
    %2048 = vmatprep.subr.bf16.mxu0 %v1364
    %2049 = vmatpush1.bf16.msra.mxu0 %v1363
    %2050 = vmatprep.subr.bf16.mxu0 %v1358
    %2051 = vmatpush1.bf16.msra.mxu0 %v1357
    %2052 = vmatprep.subr.bf16.mxu0 %v1352
    %2053 = vmatpush1.bf16.msra.mxu0 %v1351
    %2054 = vmatprep.subr.bf16.mxu0 %v1346
    %2055 = vmatpush1.bf16.msra.mxu0 %v1345
    %2056 = vmatprep.subr.bf16.mxu0 %v1340
    %2057 = vmatpush1.bf16.msra.mxu0 %v1339
    %2058 = vmatprep.subr.bf16.mxu0 %v1430
    %2059 = vmatpush2.bf16.msra.mxu0 %v1429
    %2060 = vmatprep.subr.bf16.mxu0 %v1424
    %2061 = vmatpush2.bf16.msra.mxu0 %v1423
    %2062 = vmatprep.subr.bf16.mxu0 %v1418
    %2063 = vmatpush2.bf16.msra.mxu0 %v1417
    %2064 = vmatprep.subr.bf16.mxu0 %v1412
    %2065 = vmatpush2.bf16.msra.mxu0 %v1411
    %2066 = vmatprep.subr.bf16.mxu0 %v1406
    %2067 = vmatpush2.bf16.msra.mxu0 %v1405
    %2068 = vmatprep.subr.bf16.mxu0 %v1400
    %2069 = vmatpush2.bf16.msra.mxu0 %v1399
    %2070 = vmatprep.subr.bf16.mxu0 %v1394
    %2071 = vmatpush2.bf16.msra.mxu0 %v1393
    %2072 = vmatprep.subr.bf16.mxu0 %v1388
    %2073 = vmatpush2.bf16.msra.mxu0 %v1387
    %2074 = vmatprep.mubr.bf16.mxu0 %v462
    %2075 = vmatmul.mubr.bf16.gmra.mxu0 %v461
    %v2076 = vpop.f32.mrf.mxu0
    %v2077 = vadd.f32 %v424, %v2076
    %v2078 = vpop.f32.mrf.mxu0
    %v2079 = vadd.f32 %v428, %v2078
    %v2080 = vpop.f32.mrf.mxu0
    %v2081 = vadd.f32 %v424, %v2080
    %v2082 = vpop.f32.mrf.mxu0
    %v2083 = vadd.f32 %v428, %v2082
    %2084 = vdwg.mxu0
    %2085 = vmatprep.subr.bf16.mxu0 %v1478
    %2086 = vmatpush1.bf16.msra.mxu0 %v1477
    %2087 = vmatprep.subr.bf16.mxu0 %v1472
    %2088 = vmatpush1.bf16.msra.mxu0 %v1471
    %2089 = vmatprep.subr.bf16.mxu0 %v1466
    %2090 = vmatpush1.bf16.msra.mxu0 %v1465
    %2091 = vmatprep.subr.bf16.mxu0 %v1460
    %2092 = vmatpush1.bf16.msra.mxu0 %v1459
    %2093 = vmatprep.subr.bf16.mxu0 %v1454
    %2094 = vmatpush1.bf16.msra.mxu0 %v1453
    %2095 = vmatprep.subr.bf16.mxu0 %v1448
    %2096 = vmatpush1.bf16.msra.mxu0 %v1447
    %2097 = vmatprep.subr.bf16.mxu0 %v1442
    %2098 = vmatpush1.bf16.msra.mxu0 %v1441
    %2099 = vmatprep.subr.bf16.mxu0 %v1436
    %2100 = vmatpush1.bf16.msra.mxu0 %v1435
    %2101 = vmatprep.subr.bf16.mxu0 %v1526
    %2102 = vmatpush2.bf16.msra.mxu0 %v1525
    %2103 = vmatprep.subr.bf16.mxu0 %v1520
    %2104 = vmatpush2.bf16.msra.mxu0 %v1519
    %2105 = vmatprep.subr.bf16.mxu0 %v1514
    %2106 = vmatpush2.bf16.msra.mxu0 %v1513
    %2107 = vmatprep.subr.bf16.mxu0 %v1508
    %2108 = vmatpush2.bf16.msra.mxu0 %v1507
    %2109 = vmatprep.subr.bf16.mxu0 %v1502
    %2110 = vmatpush2.bf16.msra.mxu0 %v1501
    %2111 = vmatprep.subr.bf16.mxu0 %v1496
    %2112 = vmatpush2.bf16.msra.mxu0 %v1495
    %2113 = vmatprep.subr.bf16.mxu0 %v1490
    %2114 = vmatpush2.bf16.msra.mxu0 %v1489
    %2115 = vmatprep.subr.bf16.mxu0 %v1484
    %2116 = vmatpush2.bf16.msra.mxu0 %v1483
    %2117 = vmatprep.mubr.bf16.mxu0 %v464
    %2118 = vmatmul.mubr.bf16.gmra.mxu0 %v463
    %v2119 = vpop.f32.mrf.mxu0
    %v2120 = vadd.f32 %v2077, %v2119
    %v2121 = vpop.f32.mrf.mxu0
    %v2122 = vadd.f32 %v2079, %v2121
    %v2123 = vpop.f32.mrf.mxu0
    %v2124 = vadd.f32 %v2081, %v2123
    %v2125 = vpop.f32.mrf.mxu0
    %v2126 = vadd.f32 %v2083, %v2125
    %2127 = vdwg.mxu0
    %2128 = vmatprep.subr.bf16.mxu0 %v1574
    %2129 = vmatpush1.bf16.msra.mxu0 %v1573
    %2130 = vmatprep.subr.bf16.mxu0 %v1568
    %2131 = vmatpush1.bf16.msra.mxu0 %v1567
    %2132 = vmatprep.subr.bf16.mxu0 %v1562
    %2133 = vmatpush1.bf16.msra.mxu0 %v1561
    %2134 = vmatprep.subr.bf16.mxu0 %v1556
    %2135 = vmatpush1.bf16.msra.mxu0 %v1555
    %2136 = vmatprep.subr.bf16.mxu0 %v1550
    %2137 = vmatpush1.bf16.msra.mxu0 %v1549
    %2138 = vmatprep.subr.bf16.mxu0 %v1544
    %2139 = vmatpush1.bf16.msra.mxu0 %v1543
    %2140 = vmatprep.subr.bf16.mxu0 %v1538
    %2141 = vmatpush1.bf16.msra.mxu0 %v1537
    %2142 = vmatprep.subr.bf16.mxu0 %v1532
    %2143 = vmatpush1.bf16.msra.mxu0 %v1531
    %2144 = vmatprep.subr.bf16.mxu0 %v1622
    %2145 = vmatpush2.bf16.msra.mxu0 %v1621
    %2146 = vmatprep.subr.bf16.mxu0 %v1616
    %2147 = vmatpush2.bf16.msra.mxu0 %v1615
    %2148 = vmatprep.subr.bf16.mxu0 %v1610
    %2149 = vmatpush2.bf16.msra.mxu0 %v1609
    %2150 = vmatprep.subr.bf16.mxu0 %v1604
    %2151 = vmatpush2.bf16.msra.mxu0 %v1603
    %2152 = vmatprep.subr.bf16.mxu0 %v1598
    %2153 = vmatpush2.bf16.msra.mxu0 %v1597
    %2154 = vmatprep.subr.bf16.mxu0 %v1592
    %2155 = vmatpush2.bf16.msra.mxu0 %v1591
    %2156 = vmatprep.subr.bf16.mxu0 %v1586
    %2157 = vmatpush2.bf16.msra.mxu0 %v1585
    %2158 = vmatprep.subr.bf16.mxu0 %v1580
    %2159 = vmatpush2.bf16.msra.mxu0 %v1579
    %2160 = vmatprep.mubr.bf16.mxu0 %v466
    %2161 = vmatmul.mubr.bf16.gmra.mxu0 %v465
    %v2162 = vpop.f32.mrf.mxu0
    %v2163 = vadd.f32 %v2120, %v2162
    %v2164 = vpop.f32.mrf.mxu0
    %v2165 = vadd.f32 %v2122, %v2164
    %v2166 = vpop.f32.mrf.mxu0
    %v2167 = vadd.f32 %v2124, %v2166
    %v2168 = vpop.f32.mrf.mxu0
    %v2169 = vadd.f32 %v2126, %v2168
    %2170 = vdwg.mxu0
    %2171 = vmatprep.subr.bf16.mxu0 %v1384
    %2172 = vmatpush1.bf16.msra.mxu0 %v1383
    %2173 = vmatprep.subr.bf16.mxu0 %v1378
    %2174 = vmatpush1.bf16.msra.mxu0 %v1377
    %2175 = vmatprep.subr.bf16.mxu0 %v1372
    %2176 = vmatpush1.bf16.msra.mxu0 %v1371
    %2177 = vmatprep.subr.bf16.mxu0 %v1366
    %2178 = vmatpush1.bf16.msra.mxu0 %v1365
    %2179 = vmatprep.subr.bf16.mxu0 %v1360
    %2180 = vmatpush1.bf16.msra.mxu0 %v1359
    %2181 = vmatprep.subr.bf16.mxu0 %v1354
    %2182 = vmatpush1.bf16.msra.mxu0 %v1353
    %2183 = vmatprep.subr.bf16.mxu0 %v1348
    %2184 = vmatpush1.bf16.msra.mxu0 %v1347
    %2185 = vmatprep.subr.bf16.mxu0 %v1342
    %2186 = vmatpush1.bf16.msra.mxu0 %v1341
    %2187 = vmatprep.subr.bf16.mxu0 %v1432
    %2188 = vmatpush2.bf16.msra.mxu0 %v1431
    %2189 = vmatprep.subr.bf16.mxu0 %v1426
    %2190 = vmatpush2.bf16.msra.mxu0 %v1425
    %2191 = vmatprep.subr.bf16.mxu0 %v1420
    %2192 = vmatpush2.bf16.msra.mxu0 %v1419
    %2193 = vmatprep.subr.bf16.mxu0 %v1414
    %2194 = vmatpush2.bf16.msra.mxu0 %v1413
    %2195 = vmatprep.subr.bf16.mxu0 %v1408
    %2196 = vmatpush2.bf16.msra.mxu0 %v1407
    %2197 = vmatprep.subr.bf16.mxu0 %v1402
    %2198 = vmatpush2.bf16.msra.mxu0 %v1401
    %2199 = vmatprep.subr.bf16.mxu0 %v1396
    %2200 = vmatpush2.bf16.msra.mxu0 %v1395
    %2201 = vmatprep.subr.bf16.mxu0 %v1390
    %2202 = vmatpush2.bf16.msra.mxu0 %v1389
    %2203 = vmatprep.mubr.bf16.mxu0 %v462
    %2204 = vmatmul.mubr.bf16.gmra.mxu0 %v461
    %v2205 = vpop.f32.mrf.mxu0
    %v2206 = vadd.f32 %v432, %v2205
    %v2207 = vpop.f32.mrf.mxu0
    %v2208 = vadd.f32 %v436, %v2207
    %v2209 = vpop.f32.mrf.mxu0
    %v2210 = vadd.f32 %v432, %v2209
    %v2211 = vpop.f32.mrf.mxu0
    %v2212 = vadd.f32 %v436, %v2211
    %2213 = vdwg.mxu0
    %2214 = vmatprep.subr.bf16.mxu0 %v1480
    %2215 = vmatpush1.bf16.msra.mxu0 %v1479
    %2216 = vmatprep.subr.bf16.mxu0 %v1474
    %2217 = vmatpush1.bf16.msra.mxu0 %v1473
    %2218 = vmatprep.subr.bf16.mxu0 %v1468
    %2219 = vmatpush1.bf16.msra.mxu0 %v1467
    %2220 = vmatprep.subr.bf16.mxu0 %v1462
    %2221 = vmatpush1.bf16.msra.mxu0 %v1461
    %2222 = vmatprep.subr.bf16.mxu0 %v1456
    %2223 = vmatpush1.bf16.msra.mxu0 %v1455
    %2224 = vmatprep.subr.bf16.mxu0 %v1450
    %2225 = vmatpush1.bf16.msra.mxu0 %v1449
    %2226 = vmatprep.subr.bf16.mxu0 %v1444
    %2227 = vmatpush1.bf16.msra.mxu0 %v1443
    %2228 = vmatprep.subr.bf16.mxu0 %v1438
    %2229 = vmatpush1.bf16.msra.mxu0 %v1437
    %2230 = vmatprep.subr.bf16.mxu0 %v1528
    %2231 = vmatpush2.bf16.msra.mxu0 %v1527
    %2232 = vmatprep.subr.bf16.mxu0 %v1522
    %2233 = vmatpush2.bf16.msra.mxu0 %v1521
    %2234 = vmatprep.subr.bf16.mxu0 %v1516
    %2235 = vmatpush2.bf16.msra.mxu0 %v1515
    %2236 = vmatprep.subr.bf16.mxu0 %v1510
    %2237 = vmatpush2.bf16.msra.mxu0 %v1509
    %2238 = vmatprep.subr.bf16.mxu0 %v1504
    %2239 = vmatpush2.bf16.msra.mxu0 %v1503
    %2240 = vmatprep.subr.bf16.mxu0 %v1498
    %2241 = vmatpush2.bf16.msra.mxu0 %v1497
    %2242 = vmatprep.subr.bf16.mxu0 %v1492
    %2243 = vmatpush2.bf16.msra.mxu0 %v1491
    %2244 = vmatprep.subr.bf16.mxu0 %v1486
    %2245 = vmatpush2.bf16.msra.mxu0 %v1485
    %2246 = vmatprep.mubr.bf16.mxu0 %v464
    %2247 = vmatmul.mubr.bf16.gmra.mxu0 %v463
    %v2248 = vpop.f32.mrf.mxu0
    %v2249 = vadd.f32 %v2206, %v2248
    %v2250 = vpop.f32.mrf.mxu0
    %v2251 = vadd.f32 %v2208, %v2250
    %v2252 = vpop.f32.mrf.mxu0
    %v2253 = vadd.f32 %v2210, %v2252
    %v2254 = vpop.f32.mrf.mxu0
    %v2255 = vadd.f32 %v2212, %v2254
    %2256 = vdwg.mxu0
    %2257 = vmatprep.subr.bf16.mxu0 %v1576
    %2258 = vmatpush1.bf16.msra.mxu0 %v1575
    %2259 = vmatprep.subr.bf16.mxu0 %v1570
    %2260 = vmatpush1.bf16.msra.mxu0 %v1569
    %2261 = vmatprep.subr.bf16.mxu0 %v1564
    %2262 = vmatpush1.bf16.msra.mxu0 %v1563
    %2263 = vmatprep.subr.bf16.mxu0 %v1558
    %2264 = vmatpush1.bf16.msra.mxu0 %v1557
    %2265 = vmatprep.subr.bf16.mxu0 %v1552
    %2266 = vmatpush1.bf16.msra.mxu0 %v1551
    %2267 = vmatprep.subr.bf16.mxu0 %v1546
    %2268 = vmatpush1.bf16.msra.mxu0 %v1545
    %2269 = vmatprep.subr.bf16.mxu0 %v1540
    %2270 = vmatpush1.bf16.msra.mxu0 %v1539
    %2271 = vmatprep.subr.bf16.mxu0 %v1534
    %2272 = vmatpush1.bf16.msra.mxu0 %v1533
    %2273 = vmatprep.subr.bf16.mxu0 %v1624
    %2274 = vmatpush2.bf16.msra.mxu0 %v1623
    %2275 = vmatprep.subr.bf16.mxu0 %v1618
    %2276 = vmatpush2.bf16.msra.mxu0 %v1617
    %2277 = vmatprep.subr.bf16.mxu0 %v1612
    %2278 = vmatpush2.bf16.msra.mxu0 %v1611
    %2279 = vmatprep.subr.bf16.mxu0 %v1606
    %2280 = vmatpush2.bf16.msra.mxu0 %v1605
    %2281 = vmatprep.subr.bf16.mxu0 %v1600
    %2282 = vmatpush2.bf16.msra.mxu0 %v1599
    %2283 = vmatprep.subr.bf16.mxu0 %v1594
    %2284 = vmatpush2.bf16.msra.mxu0 %v1593
    %2285 = vmatprep.subr.bf16.mxu0 %v1588
    %2286 = vmatpush2.bf16.msra.mxu0 %v1587
    %2287 = vmatprep.subr.bf16.mxu0 %v1582
    %2288 = vmatpush2.bf16.msra.mxu0 %v1581
    %2289 = vmatprep.mubr.bf16.mxu0 %v466
    %2290 = vmatmul.mubr.bf16.gmra.mxu0 %v465
    %v2291 = vpop.f32.mrf.mxu0
    %v2292 = vadd.f32 %v2249, %v2291
    %v2293 = vpop.f32.mrf.mxu0
    %v2294 = vadd.f32 %v2251, %v2293
    %v2295 = vpop.f32.mrf.mxu0
    %v2296 = vadd.f32 %v2253, %v2295
    %v2297 = vpop.f32.mrf.mxu0
    %v2298 = vadd.f32 %v2255, %v2297
    %2299 = vdwg.mxu0
    %v2300 = vtanh.pop %v2034
    %v2301 = vtanh.pop %v2036
    %v2302 = vtanh.pop %v2163
    %v2303 = vtanh.pop %v2165
    %v2304 = vtanh.pop %v2292
    %v2305 = vtanh.pop %v2294
    %v2306 = vtanh.pop %v2038
    %v2307 = vtanh.pop %v2040
    %v2308 = vtanh.pop %v2167
    %v2309 = vtanh.pop %v2169
    %v2310 = vtanh.pop %v2296
    %v2311 = vtanh.pop %v2298
    %v2312 = vpack.c.bf16 %v2306, %v2300
    %v2313 = vpack.c.bf16 %v2307, %v2301
    %v2314 = vpack.c.bf16 %v2308, %v2302
    %v2315 = vpack.c.bf16 %v2309, %v2303
    %v2316 = vpack.c.bf16 %v2310, %v2304
    %v2317 = vpack.c.bf16 %v2311, %v2305
    %v2318 = vld [vmem:[#allocation8] sm:$0xff]
    %v2319 = vld [vmem:[#allocation8 + $0x8] sm:$0xff]
    %v2320 = vld [vmem:[#allocation8 + $0x10] sm:$0xff]
    %v2321 = vld [vmem:[#allocation8 + $0x18] sm:$0xff]
    %v2322 = vld [vmem:[#allocation8 + $0x20] sm:$0xff]
    %v2323 = vld [vmem:[#allocation8 + $0x28] sm:$0xff]
    %v2324 = vld [vmem:[#allocation8 + $0x30] sm:$0xff]
    %v2325 = vld [vmem:[#allocation8 + $0x38] sm:$0xff]
    %v2326 = vld [vmem:[#allocation8 + $0x40] sm:$0xff]
    %v2327 = vld [vmem:[#allocation8 + $0x48] sm:$0xff]
    %v2328 = vld [vmem:[#allocation8 + $0x50] sm:$0xff]
    %v2329 = vld [vmem:[#allocation8 + $0x58] sm:$0xff]
    %v2330 = vld [vmem:[#allocation8 + $0x60] sm:$0xff]
    %v2331 = vld [vmem:[#allocation8 + $0x68] sm:$0xff]
    %v2332 = vld [vmem:[#allocation8 + $0x70] sm:$0xff]
    %v2333 = vld [vmem:[#allocation8 + $0x78] sm:$0xff]
    %v2334 = vld [vmem:[#allocation8 + $0x80] sm:$0xff]
    %v2335 = vld [vmem:[#allocation8 + $0x88] sm:$0xff]
    %v2336 = vld [vmem:[#allocation8 + $0x90] sm:$0xff]
    %v2337 = vld [vmem:[#allocation8 + $0x98] sm:$0xff]
    %v2338 = vld [vmem:[#allocation8 + $0xa0] sm:$0xff]
    %v2339 = vld [vmem:[#allocation8 + $0xa8] sm:$0xff]
    %v2340 = vld [vmem:[#allocation8 + $0xb0] sm:$0xff]
    %v2341 = vld [vmem:[#allocation8 + $0xb8] sm:$0xff]
    %v2342 = vld [vmem:[#allocation8 + $0xc0] sm:$0xff]
    %v2343 = vld [vmem:[#allocation8 + $0xc8] sm:$0xff]
    %v2344 = vld [vmem:[#allocation8 + $0xd0] sm:$0xff]
    %v2345 = vld [vmem:[#allocation8 + $0xd8] sm:$0xff]
    %v2346 = vld [vmem:[#allocation8 + $0xe0] sm:$0xff]
    %v2347 = vld [vmem:[#allocation8 + $0xe8] sm:$0xff]
    %v2348 = vld [vmem:[#allocation8 + $0xf0] sm:$0xff]
    %v2349 = vld [vmem:[#allocation8 + $0xf8] sm:$0xff]
    %v2350 = vld [vmem:[#allocation8 + $0x100] sm:$0xff]
    %v2351 = vld [vmem:[#allocation8 + $0x108] sm:$0xff]
    %v2352 = vld [vmem:[#allocation8 + $0x110] sm:$0xff]
    %v2353 = vld [vmem:[#allocation8 + $0x118] sm:$0xff]
    %v2354 = vld [vmem:[#allocation8 + $0x120] sm:$0xff]
    %v2355 = vld [vmem:[#allocation8 + $0x128] sm:$0xff]
    %v2356 = vld [vmem:[#allocation8 + $0x130] sm:$0xff]
    %v2357 = vld [vmem:[#allocation8 + $0x138] sm:$0xff]
    %v2358 = vld [vmem:[#allocation8 + $0x140] sm:$0xff]
    %v2359 = vld [vmem:[#allocation8 + $0x148] sm:$0xff]
    %v2360 = vld [vmem:[#allocation8 + $0x150] sm:$0xff]
    %v2361 = vld [vmem:[#allocation8 + $0x158] sm:$0xff]
    %v2362 = vld [vmem:[#allocation8 + $0x160] sm:$0xff]
    %v2363 = vld [vmem:[#allocation8 + $0x168] sm:$0xff]
    %v2364 = vld [vmem:[#allocation8 + $0x170] sm:$0xff]
    %v2365 = vld [vmem:[#allocation8 + $0x178] sm:$0xff]
    %v2366 = vld [vmem:[#allocation8 + $0x180] sm:$0xff]
    %v2367 = vld [vmem:[#allocation8 + $0x188] sm:$0xff]
    %v2368 = vld [vmem:[#allocation8 + $0x190] sm:$0xff]
    %v2369 = vld [vmem:[#allocation8 + $0x198] sm:$0xff]
    %v2370 = vld [vmem:[#allocation8 + $0x1a0] sm:$0xff]
    %v2371 = vld [vmem:[#allocation8 + $0x1a8] sm:$0xff]
    %v2372 = vld [vmem:[#allocation8 + $0x1b0] sm:$0xff]
    %v2373 = vld [vmem:[#allocation8 + $0x1b8] sm:$0xff]
    %v2374 = vld [vmem:[#allocation8 + $0x1c0] sm:$0xff]
    %v2375 = vld [vmem:[#allocation8 + $0x1c8] sm:$0xff]
    %v2376 = vld [vmem:[#allocation8 + $0x1d0] sm:$0xff]
    %v2377 = vld [vmem:[#allocation8 + $0x1d8] sm:$0xff]
    %v2378 = vld [vmem:[#allocation8 + $0x1e0] sm:$0xff]
    %v2379 = vld [vmem:[#allocation8 + $0x1e8] sm:$0xff]
    %v2380 = vld [vmem:[#allocation8 + $0x1f0] sm:$0xff]
    %v2381 = vld [vmem:[#allocation8 + $0x1f8] sm:$0xff]
    %v2382 = vld [vmem:[#allocation8 + $0x200] sm:$0xff]
    %v2383 = vld [vmem:[#allocation8 + $0x208] sm:$0xff]
    %v2384 = vld [vmem:[#allocation8 + $0x210] sm:$0xff]
    %v2385 = vld [vmem:[#allocation8 + $0x218] sm:$0xff]
    %v2386 = vld [vmem:[#allocation8 + $0x220] sm:$0xff]
    %v2387 = vld [vmem:[#allocation8 + $0x228] sm:$0xff]
    %v2388 = vld [vmem:[#allocation8 + $0x230] sm:$0xff]
    %v2389 = vld [vmem:[#allocation8 + $0x238] sm:$0xff]
    %v2390 = vld [vmem:[#allocation8 + $0x240] sm:$0xff]
    %v2391 = vld [vmem:[#allocation8 + $0x248] sm:$0xff]
    %v2392 = vld [vmem:[#allocation8 + $0x250] sm:$0xff]
    %v2393 = vld [vmem:[#allocation8 + $0x258] sm:$0xff]
    %v2394 = vld [vmem:[#allocation8 + $0x260] sm:$0xff]
    %v2395 = vld [vmem:[#allocation8 + $0x268] sm:$0xff]
    %v2396 = vld [vmem:[#allocation8 + $0x270] sm:$0xff]
    %v2397 = vld [vmem:[#allocation8 + $0x278] sm:$0xff]
    %v2398 = vld [vmem:[#allocation8 + $0x280] sm:$0xff]
    %v2399 = vld [vmem:[#allocation8 + $0x288] sm:$0xff]
    %v2400 = vld [vmem:[#allocation8 + $0x290] sm:$0xff]
    %v2401 = vld [vmem:[#allocation8 + $0x298] sm:$0xff]
    %v2402 = vld [vmem:[#allocation8 + $0x2a0] sm:$0xff]
    %v2403 = vld [vmem:[#allocation8 + $0x2a8] sm:$0xff]
    %v2404 = vld [vmem:[#allocation8 + $0x2b0] sm:$0xff]
    %v2405 = vld [vmem:[#allocation8 + $0x2b8] sm:$0xff]
    %v2406 = vld [vmem:[#allocation8 + $0x2c0] sm:$0xff]
    %v2407 = vld [vmem:[#allocation8 + $0x2c8] sm:$0xff]
    %v2408 = vld [vmem:[#allocation8 + $0x2d0] sm:$0xff]
    %v2409 = vld [vmem:[#allocation8 + $0x2d8] sm:$0xff]
    %v2410 = vld [vmem:[#allocation8 + $0x2e0] sm:$0xff]
    %v2411 = vld [vmem:[#allocation8 + $0x2e8] sm:$0xff]
    %v2412 = vld [vmem:[#allocation8 + $0x2f0] sm:$0xff]
    %v2413 = vld [vmem:[#allocation8 + $0x2f8] sm:$0xff]
    %v2414 = vld [vmem:[#allocation8 + $0x300] sm:$0xff]
    %v2415 = vld [vmem:[#allocation8 + $0x308] sm:$0xff]
    %v2416 = vld [vmem:[#allocation8 + $0x310] sm:$0xff]
    %v2417 = vld [vmem:[#allocation8 + $0x318] sm:$0xff]
    %v2418 = vld [vmem:[#allocation8 + $0x320] sm:$0xff]
    %v2419 = vld [vmem:[#allocation8 + $0x328] sm:$0xff]
    %v2420 = vld [vmem:[#allocation8 + $0x330] sm:$0xff]
    %v2421 = vld [vmem:[#allocation8 + $0x338] sm:$0xff]
    %v2422 = vld [vmem:[#allocation8 + $0x340] sm:$0xff]
    %v2423 = vld [vmem:[#allocation8 + $0x348] sm:$0xff]
    %v2424 = vld [vmem:[#allocation8 + $0x350] sm:$0xff]
    %v2425 = vld [vmem:[#allocation8 + $0x358] sm:$0xff]
    %v2426 = vld [vmem:[#allocation8 + $0x360] sm:$0xff]
    %v2427 = vld [vmem:[#allocation8 + $0x368] sm:$0xff]
    %v2428 = vld [vmem:[#allocation8 + $0x370] sm:$0xff]
    %v2429 = vld [vmem:[#allocation8 + $0x378] sm:$0xff]
    %v2430 = vld [vmem:[#allocation8 + $0x380] sm:$0xff]
    %v2431 = vld [vmem:[#allocation8 + $0x388] sm:$0xff]
    %v2432 = vld [vmem:[#allocation8 + $0x390] sm:$0xff]
    %v2433 = vld [vmem:[#allocation8 + $0x398] sm:$0xff]
    %v2434 = vld [vmem:[#allocation8 + $0x3a0] sm:$0xff]
    %v2435 = vld [vmem:[#allocation8 + $0x3a8] sm:$0xff]
    %v2436 = vld [vmem:[#allocation8 + $0x3b0] sm:$0xff]
    %v2437 = vld [vmem:[#allocation8 + $0x3b8] sm:$0xff]
    %v2438 = vld [vmem:[#allocation8 + $0x3c0] sm:$0xff]
    %v2439 = vld [vmem:[#allocation8 + $0x3c8] sm:$0xff]
    %v2440 = vld [vmem:[#allocation8 + $0x3d0] sm:$0xff]
    %v2441 = vld [vmem:[#allocation8 + $0x3d8] sm:$0xff]
    %v2442 = vld [vmem:[#allocation8 + $0x3e0] sm:$0xff]
    %v2443 = vld [vmem:[#allocation8 + $0x3e8] sm:$0xff]
    %v2444 = vld [vmem:[#allocation8 + $0x3f0] sm:$0xff]
    %v2445 = vld [vmem:[#allocation8 + $0x3f8] sm:$0xff]
    %v2446 = vld [vmem:[#allocation8 + $0x400] sm:$0xff]
    %v2447 = vld [vmem:[#allocation8 + $0x408] sm:$0xff]
    %v2448 = vld [vmem:[#allocation8 + $0x410] sm:$0xff]
    %v2449 = vld [vmem:[#allocation8 + $0x418] sm:$0xff]
    %v2450 = vld [vmem:[#allocation8 + $0x420] sm:$0xff]
    %v2451 = vld [vmem:[#allocation8 + $0x428] sm:$0xff]
    %v2452 = vld [vmem:[#allocation8 + $0x430] sm:$0xff]
    %v2453 = vld [vmem:[#allocation8 + $0x438] sm:$0xff]
    %v2454 = vld [vmem:[#allocation8 + $0x440] sm:$0xff]
    %v2455 = vld [vmem:[#allocation8 + $0x448] sm:$0xff]
    %v2456 = vld [vmem:[#allocation8 + $0x450] sm:$0xff]
    %v2457 = vld [vmem:[#allocation8 + $0x458] sm:$0xff]
    %v2458 = vld [vmem:[#allocation8 + $0x460] sm:$0xff]
    %v2459 = vld [vmem:[#allocation8 + $0x468] sm:$0xff]
    %v2460 = vld [vmem:[#allocation8 + $0x470] sm:$0xff]
    %v2461 = vld [vmem:[#allocation8 + $0x478] sm:$0xff]
    %v2462 = vld [vmem:[#allocation8 + $0x480] sm:$0xff]
    %v2463 = vld [vmem:[#allocation8 + $0x488] sm:$0xff]
    %v2464 = vld [vmem:[#allocation8 + $0x490] sm:$0xff]
    %v2465 = vld [vmem:[#allocation8 + $0x498] sm:$0xff]
    %v2466 = vld [vmem:[#allocation8 + $0x4a0] sm:$0xff]
    %v2467 = vld [vmem:[#allocation8 + $0x4a8] sm:$0xff]
    %v2468 = vld [vmem:[#allocation8 + $0x4b0] sm:$0xff]
    %v2469 = vld [vmem:[#allocation8 + $0x4b8] sm:$0xff]
    %v2470 = vld [vmem:[#allocation8 + $0x4c0] sm:$0xff]
    %v2471 = vld [vmem:[#allocation8 + $0x4c8] sm:$0xff]
    %v2472 = vld [vmem:[#allocation8 + $0x4d0] sm:$0xff]
    %v2473 = vld [vmem:[#allocation8 + $0x4d8] sm:$0xff]
    %v2474 = vld [vmem:[#allocation8 + $0x4e0] sm:$0xff]
    %v2475 = vld [vmem:[#allocation8 + $0x4e8] sm:$0xff]
    %v2476 = vld [vmem:[#allocation8 + $0x4f0] sm:$0xff]
    %v2477 = vld [vmem:[#allocation8 + $0x4f8] sm:$0xff]
    %v2478 = vld [vmem:[#allocation8 + $0x500] sm:$0xff]
    %v2479 = vld [vmem:[#allocation8 + $0x508] sm:$0xff]
    %v2480 = vld [vmem:[#allocation8 + $0x510] sm:$0xff]
    %v2481 = vld [vmem:[#allocation8 + $0x518] sm:$0xff]
    %v2482 = vld [vmem:[#allocation8 + $0x520] sm:$0xff]
    %v2483 = vld [vmem:[#allocation8 + $0x528] sm:$0xff]
    %v2484 = vld [vmem:[#allocation8 + $0x530] sm:$0xff]
    %v2485 = vld [vmem:[#allocation8 + $0x538] sm:$0xff]
    %v2486 = vld [vmem:[#allocation8 + $0x540] sm:$0xff]
    %v2487 = vld [vmem:[#allocation8 + $0x548] sm:$0xff]
    %v2488 = vld [vmem:[#allocation8 + $0x550] sm:$0xff]
    %v2489 = vld [vmem:[#allocation8 + $0x558] sm:$0xff]
    %v2490 = vld [vmem:[#allocation8 + $0x560] sm:$0xff]
    %v2491 = vld [vmem:[#allocation8 + $0x568] sm:$0xff]
    %v2492 = vld [vmem:[#allocation8 + $0x570] sm:$0xff]
    %v2493 = vld [vmem:[#allocation8 + $0x578] sm:$0xff]
    %v2494 = vld [vmem:[#allocation8 + $0x580] sm:$0xff]
    %v2495 = vld [vmem:[#allocation8 + $0x588] sm:$0xff]
    %v2496 = vld [vmem:[#allocation8 + $0x590] sm:$0xff]
    %v2497 = vld [vmem:[#allocation8 + $0x598] sm:$0xff]
    %v2498 = vld [vmem:[#allocation8 + $0x5a0] sm:$0xff]
    %v2499 = vld [vmem:[#allocation8 + $0x5a8] sm:$0xff]
    %v2500 = vld [vmem:[#allocation8 + $0x5b0] sm:$0xff]
    %v2501 = vld [vmem:[#allocation8 + $0x5b8] sm:$0xff]
    %v2502 = vld [vmem:[#allocation8 + $0x5c0] sm:$0xff]
    %v2503 = vld [vmem:[#allocation8 + $0x5c8] sm:$0xff]
    %v2504 = vld [vmem:[#allocation8 + $0x5d0] sm:$0xff]
    %v2505 = vld [vmem:[#allocation8 + $0x5d8] sm:$0xff]
    %v2506 = vld [vmem:[#allocation8 + $0x5e0] sm:$0xff]
    %v2507 = vld [vmem:[#allocation8 + $0x5e8] sm:$0xff]
    %v2508 = vld [vmem:[#allocation8 + $0x5f0] sm:$0xff]
    %v2509 = vld [vmem:[#allocation8 + $0x5f8] sm:$0xff]
    %v2510 = vld [vmem:[#allocation10] sm:$0xf]
    %v2512 = vlaneseq
    %v2513 = vshrl.u32 %v2512, 7
    %v2514 = vsub.s32 0, %v2513
    %v2515 = vrot.slane %v2510, %v2514
    %v2516 = vlaneseq
    %v2517 = vshrl.u32 %v2516, 7
    %v2518 = vsub.s32 1, %v2517
    %v2519 = vrot.slane %v2510, %v2518
    %v2520 = vlaneseq
    %v2521 = vshrl.u32 %v2520, 7
    %v2522 = vsub.s32 2, %v2521
    %v2523 = vrot.slane %v2510, %v2522
    %v2524 = vlaneseq
    %v2525 = vshrl.u32 %v2524, 7
    %v2526 = vsub.s32 3, %v2525
    %v2527 = vrot.slane %v2510, %v2526
    %v2724 = vunpack.c.l.b16 %v2318
    %v2725 = vunpack.c.h.b16 %v2318
    %v2726 = vunpack.c.l.b16 %v2319
    %v2727 = vunpack.c.h.b16 %v2319
    %v2728 = vunpack.c.l.b16 %v2320
    %v2729 = vunpack.c.h.b16 %v2320
    %v2730 = vunpack.c.l.b16 %v2321
    %v2731 = vunpack.c.h.b16 %v2321
    %v2732 = vunpack.c.l.b16 %v2322
    %v2733 = vunpack.c.h.b16 %v2322
    %v2734 = vunpack.c.l.b16 %v2323
    %v2735 = vunpack.c.h.b16 %v2323
    %v2736 = vunpack.c.l.b16 %v2324
    %v2737 = vunpack.c.h.b16 %v2324
    %v2738 = vunpack.c.l.b16 %v2325
    %v2739 = vunpack.c.h.b16 %v2325
    %v2740 = vunpack.c.l.b16 %v2326
    %v2741 = vunpack.c.h.b16 %v2326
    %v2742 = vunpack.c.l.b16 %v2327
    %v2743 = vunpack.c.h.b16 %v2327
    %v2744 = vunpack.c.l.b16 %v2328
    %v2745 = vunpack.c.h.b16 %v2328
    %v2746 = vunpack.c.l.b16 %v2329
    %v2747 = vunpack.c.h.b16 %v2329
    %v2748 = vunpack.c.l.b16 %v2330
    %v2749 = vunpack.c.h.b16 %v2330
    %v2750 = vunpack.c.l.b16 %v2331
    %v2751 = vunpack.c.h.b16 %v2331
    %v2752 = vunpack.c.l.b16 %v2332
    %v2753 = vunpack.c.h.b16 %v2332
    %v2754 = vunpack.c.l.b16 %v2333
    %v2755 = vunpack.c.h.b16 %v2333
    %v2756 = vunpack.c.l.b16 %v2334
    %v2757 = vunpack.c.h.b16 %v2334
    %v2758 = vunpack.c.l.b16 %v2335
    %v2759 = vunpack.c.h.b16 %v2335
    %v2760 = vunpack.c.l.b16 %v2336
    %v2761 = vunpack.c.h.b16 %v2336
    %v2762 = vunpack.c.l.b16 %v2337
    %v2763 = vunpack.c.h.b16 %v2337
    %v2764 = vunpack.c.l.b16 %v2338
    %v2765 = vunpack.c.h.b16 %v2338
    %v2766 = vunpack.c.l.b16 %v2339
    %v2767 = vunpack.c.h.b16 %v2339
    %v2768 = vunpack.c.l.b16 %v2340
    %v2769 = vunpack.c.h.b16 %v2340
    %v2770 = vunpack.c.l.b16 %v2341
    %v2771 = vunpack.c.h.b16 %v2341
    %v2772 = vunpack.c.l.b16 %v2342
    %v2773 = vunpack.c.h.b16 %v2342
    %v2774 = vunpack.c.l.b16 %v2343
    %v2775 = vunpack.c.h.b16 %v2343
    %v2776 = vunpack.c.l.b16 %v2344
    %v2777 = vunpack.c.h.b16 %v2344
    %v2778 = vunpack.c.l.b16 %v2345
    %v2779 = vunpack.c.h.b16 %v2345
    %v2780 = vunpack.c.l.b16 %v2346
    %v2781 = vunpack.c.h.b16 %v2346
    %v2782 = vunpack.c.l.b16 %v2347
    %v2783 = vunpack.c.h.b16 %v2347
    %v2784 = vunpack.c.l.b16 %v2348
    %v2785 = vunpack.c.h.b16 %v2348
    %v2786 = vunpack.c.l.b16 %v2349
    %v2787 = vunpack.c.h.b16 %v2349
    %v2788 = vunpack.c.l.b16 %v2350
    %v2789 = vunpack.c.h.b16 %v2350
    %v2790 = vunpack.c.l.b16 %v2351
    %v2791 = vunpack.c.h.b16 %v2351
    %v2792 = vunpack.c.l.b16 %v2352
    %v2793 = vunpack.c.h.b16 %v2352
    %v2794 = vunpack.c.l.b16 %v2353
    %v2795 = vunpack.c.h.b16 %v2353
    %v2796 = vunpack.c.l.b16 %v2354
    %v2797 = vunpack.c.h.b16 %v2354
    %v2798 = vunpack.c.l.b16 %v2355
    %v2799 = vunpack.c.h.b16 %v2355
    %v2800 = vunpack.c.l.b16 %v2356
    %v2801 = vunpack.c.h.b16 %v2356
    %v2802 = vunpack.c.l.b16 %v2357
    %v2803 = vunpack.c.h.b16 %v2357
    %v2804 = vunpack.c.l.b16 %v2358
    %v2805 = vunpack.c.h.b16 %v2358
    %v2806 = vunpack.c.l.b16 %v2359
    %v2807 = vunpack.c.h.b16 %v2359
    %v2808 = vunpack.c.l.b16 %v2360
    %v2809 = vunpack.c.h.b16 %v2360
    %v2810 = vunpack.c.l.b16 %v2361
    %v2811 = vunpack.c.h.b16 %v2361
    %v2812 = vunpack.c.l.b16 %v2362
    %v2813 = vunpack.c.h.b16 %v2362
    %v2814 = vunpack.c.l.b16 %v2363
    %v2815 = vunpack.c.h.b16 %v2363
    %v2816 = vunpack.c.l.b16 %v2364
    %v2817 = vunpack.c.h.b16 %v2364
    %v2818 = vunpack.c.l.b16 %v2365
    %v2819 = vunpack.c.h.b16 %v2365
    %v2820 = vunpack.c.l.b16 %v2366
    %v2821 = vunpack.c.h.b16 %v2366
    %v2822 = vunpack.c.l.b16 %v2367
    %v2823 = vunpack.c.h.b16 %v2367
    %v2824 = vunpack.c.l.b16 %v2368
    %v2825 = vunpack.c.h.b16 %v2368
    %v2826 = vunpack.c.l.b16 %v2369
    %v2827 = vunpack.c.h.b16 %v2369
    %v2828 = vunpack.c.l.b16 %v2370
    %v2829 = vunpack.c.h.b16 %v2370
    %v2830 = vunpack.c.l.b16 %v2371
    %v2831 = vunpack.c.h.b16 %v2371
    %v2832 = vunpack.c.l.b16 %v2372
    %v2833 = vunpack.c.h.b16 %v2372
    %v2834 = vunpack.c.l.b16 %v2373
    %v2835 = vunpack.c.h.b16 %v2373
    %v2836 = vunpack.c.l.b16 %v2374
    %v2837 = vunpack.c.h.b16 %v2374
    %v2838 = vunpack.c.l.b16 %v2375
    %v2839 = vunpack.c.h.b16 %v2375
    %v2840 = vunpack.c.l.b16 %v2376
    %v2841 = vunpack.c.h.b16 %v2376
    %v2842 = vunpack.c.l.b16 %v2377
    %v2843 = vunpack.c.h.b16 %v2377
    %v2844 = vunpack.c.l.b16 %v2378
    %v2845 = vunpack.c.h.b16 %v2378
    %v2846 = vunpack.c.l.b16 %v2379
    %v2847 = vunpack.c.h.b16 %v2379
    %v2848 = vunpack.c.l.b16 %v2380
    %v2849 = vunpack.c.h.b16 %v2380
    %v2850 = vunpack.c.l.b16 %v2381
    %v2851 = vunpack.c.h.b16 %v2381
    %v2852 = vunpack.c.l.b16 %v2382
    %v2853 = vunpack.c.h.b16 %v2382
    %v2854 = vunpack.c.l.b16 %v2383
    %v2855 = vunpack.c.h.b16 %v2383
    %v2856 = vunpack.c.l.b16 %v2384
    %v2857 = vunpack.c.h.b16 %v2384
    %v2858 = vunpack.c.l.b16 %v2385
    %v2859 = vunpack.c.h.b16 %v2385
    %v2860 = vunpack.c.l.b16 %v2386
    %v2861 = vunpack.c.h.b16 %v2386
    %v2862 = vunpack.c.l.b16 %v2387
    %v2863 = vunpack.c.h.b16 %v2387
    %v2864 = vunpack.c.l.b16 %v2388
    %v2865 = vunpack.c.h.b16 %v2388
    %v2866 = vunpack.c.l.b16 %v2389
    %v2867 = vunpack.c.h.b16 %v2389
    %v2868 = vunpack.c.l.b16 %v2390
    %v2869 = vunpack.c.h.b16 %v2390
    %v2870 = vunpack.c.l.b16 %v2391
    %v2871 = vunpack.c.h.b16 %v2391
    %v2872 = vunpack.c.l.b16 %v2392
    %v2873 = vunpack.c.h.b16 %v2392
    %v2874 = vunpack.c.l.b16 %v2393
    %v2875 = vunpack.c.h.b16 %v2393
    %v2876 = vunpack.c.l.b16 %v2394
    %v2877 = vunpack.c.h.b16 %v2394
    %v2878 = vunpack.c.l.b16 %v2395
    %v2879 = vunpack.c.h.b16 %v2395
    %v2880 = vunpack.c.l.b16 %v2396
    %v2881 = vunpack.c.h.b16 %v2396
    %v2882 = vunpack.c.l.b16 %v2397
    %v2883 = vunpack.c.h.b16 %v2397
    %v2884 = vunpack.c.l.b16 %v2398
    %v2885 = vunpack.c.h.b16 %v2398
    %v2886 = vunpack.c.l.b16 %v2399
    %v2887 = vunpack.c.h.b16 %v2399
    %v2888 = vunpack.c.l.b16 %v2400
    %v2889 = vunpack.c.h.b16 %v2400
    %v2890 = vunpack.c.l.b16 %v2401
    %v2891 = vunpack.c.h.b16 %v2401
    %v2892 = vunpack.c.l.b16 %v2402
    %v2893 = vunpack.c.h.b16 %v2402
    %v2894 = vunpack.c.l.b16 %v2403
    %v2895 = vunpack.c.h.b16 %v2403
    %v2896 = vunpack.c.l.b16 %v2404
    %v2897 = vunpack.c.h.b16 %v2404
    %v2898 = vunpack.c.l.b16 %v2405
    %v2899 = vunpack.c.h.b16 %v2405
    %v2900 = vunpack.c.l.b16 %v2406
    %v2901 = vunpack.c.h.b16 %v2406
    %v2902 = vunpack.c.l.b16 %v2407
    %v2903 = vunpack.c.h.b16 %v2407
    %v2904 = vunpack.c.l.b16 %v2408
    %v2905 = vunpack.c.h.b16 %v2408
    %v2906 = vunpack.c.l.b16 %v2409
    %v2907 = vunpack.c.h.b16 %v2409
    %v2908 = vunpack.c.l.b16 %v2410
    %v2909 = vunpack.c.h.b16 %v2410
    %v2910 = vunpack.c.l.b16 %v2411
    %v2911 = vunpack.c.h.b16 %v2411
    %v2912 = vunpack.c.l.b16 %v2412
    %v2913 = vunpack.c.h.b16 %v2412
    %v2914 = vunpack.c.l.b16 %v2413
    %v2915 = vunpack.c.h.b16 %v2413
    %v2916 = vunpack.c.l.b16 %v2414
    %v2917 = vunpack.c.h.b16 %v2414
    %v2918 = vunpack.c.l.b16 %v2415
    %v2919 = vunpack.c.h.b16 %v2415
    %v2920 = vunpack.c.l.b16 %v2416
    %v2921 = vunpack.c.h.b16 %v2416
    %v2922 = vunpack.c.l.b16 %v2417
    %v2923 = vunpack.c.h.b16 %v2417
    %v2924 = vunpack.c.l.b16 %v2418
    %v2925 = vunpack.c.h.b16 %v2418
    %v2926 = vunpack.c.l.b16 %v2419
    %v2927 = vunpack.c.h.b16 %v2419
    %v2928 = vunpack.c.l.b16 %v2420
    %v2929 = vunpack.c.h.b16 %v2420
    %v2930 = vunpack.c.l.b16 %v2421
    %v2931 = vunpack.c.h.b16 %v2421
    %v2932 = vunpack.c.l.b16 %v2422
    %v2933 = vunpack.c.h.b16 %v2422
    %v2934 = vunpack.c.l.b16 %v2423
    %v2935 = vunpack.c.h.b16 %v2423
    %v2936 = vunpack.c.l.b16 %v2424
    %v2937 = vunpack.c.h.b16 %v2424
    %v2938 = vunpack.c.l.b16 %v2425
    %v2939 = vunpack.c.h.b16 %v2425
    %v2940 = vunpack.c.l.b16 %v2426
    %v2941 = vunpack.c.h.b16 %v2426
    %v2942 = vunpack.c.l.b16 %v2427
    %v2943 = vunpack.c.h.b16 %v2427
    %v2944 = vunpack.c.l.b16 %v2428
    %v2945 = vunpack.c.h.b16 %v2428
    %v2946 = vunpack.c.l.b16 %v2429
    %v2947 = vunpack.c.h.b16 %v2429
    %v2948 = vunpack.c.l.b16 %v2430
    %v2949 = vunpack.c.h.b16 %v2430
    %v2950 = vunpack.c.l.b16 %v2431
    %v2951 = vunpack.c.h.b16 %v2431
    %v2952 = vunpack.c.l.b16 %v2432
    %v2953 = vunpack.c.h.b16 %v2432
    %v2954 = vunpack.c.l.b16 %v2433
    %v2955 = vunpack.c.h.b16 %v2433
    %v2956 = vunpack.c.l.b16 %v2434
    %v2957 = vunpack.c.h.b16 %v2434
    %v2958 = vunpack.c.l.b16 %v2435
    %v2959 = vunpack.c.h.b16 %v2435
    %v2960 = vunpack.c.l.b16 %v2436
    %v2961 = vunpack.c.h.b16 %v2436
    %v2962 = vunpack.c.l.b16 %v2437
    %v2963 = vunpack.c.h.b16 %v2437
    %v2964 = vunpack.c.l.b16 %v2438
    %v2965 = vunpack.c.h.b16 %v2438
    %v2966 = vunpack.c.l.b16 %v2439
    %v2967 = vunpack.c.h.b16 %v2439
    %v2968 = vunpack.c.l.b16 %v2440
    %v2969 = vunpack.c.h.b16 %v2440
    %v2970 = vunpack.c.l.b16 %v2441
    %v2971 = vunpack.c.h.b16 %v2441
    %v2972 = vunpack.c.l.b16 %v2442
    %v2973 = vunpack.c.h.b16 %v2442
    %v2974 = vunpack.c.l.b16 %v2443
    %v2975 = vunpack.c.h.b16 %v2443
    %v2976 = vunpack.c.l.b16 %v2444
    %v2977 = vunpack.c.h.b16 %v2444
    %v2978 = vunpack.c.l.b16 %v2445
    %v2979 = vunpack.c.h.b16 %v2445
    %v2980 = vunpack.c.l.b16 %v2446
    %v2981 = vunpack.c.h.b16 %v2446
    %v2982 = vunpack.c.l.b16 %v2447
    %v2983 = vunpack.c.h.b16 %v2447
    %v2984 = vunpack.c.l.b16 %v2448
    %v2985 = vunpack.c.h.b16 %v2448
    %v2986 = vunpack.c.l.b16 %v2449
    %v2987 = vunpack.c.h.b16 %v2449
    %v2988 = vunpack.c.l.b16 %v2450
    %v2989 = vunpack.c.h.b16 %v2450
    %v2990 = vunpack.c.l.b16 %v2451
    %v2991 = vunpack.c.h.b16 %v2451
    %v2992 = vunpack.c.l.b16 %v2452
    %v2993 = vunpack.c.h.b16 %v2452
    %v2994 = vunpack.c.l.b16 %v2453
    %v2995 = vunpack.c.h.b16 %v2453
    %v2996 = vunpack.c.l.b16 %v2454
    %v2997 = vunpack.c.h.b16 %v2454
    %v2998 = vunpack.c.l.b16 %v2455
    %v2999 = vunpack.c.h.b16 %v2455
    %v3000 = vunpack.c.l.b16 %v2456
    %v3001 = vunpack.c.h.b16 %v2456
    %v3002 = vunpack.c.l.b16 %v2457
    %v3003 = vunpack.c.h.b16 %v2457
    %v3004 = vunpack.c.l.b16 %v2458
    %v3005 = vunpack.c.h.b16 %v2458
    %v3006 = vunpack.c.l.b16 %v2459
    %v3007 = vunpack.c.h.b16 %v2459
    %v3008 = vunpack.c.l.b16 %v2460
    %v3009 = vunpack.c.h.b16 %v2460
    %v3010 = vunpack.c.l.b16 %v2461
    %v3011 = vunpack.c.h.b16 %v2461
    %v3012 = vunpack.c.l.b16 %v2462
    %v3013 = vunpack.c.h.b16 %v2462
    %v3014 = vunpack.c.l.b16 %v2463
    %v3015 = vunpack.c.h.b16 %v2463
    %v3016 = vunpack.c.l.b16 %v2464
    %v3017 = vunpack.c.h.b16 %v2464
    %v3018 = vunpack.c.l.b16 %v2465
    %v3019 = vunpack.c.h.b16 %v2465
    %v3020 = vunpack.c.l.b16 %v2466
    %v3021 = vunpack.c.h.b16 %v2466
    %v3022 = vunpack.c.l.b16 %v2467
    %v3023 = vunpack.c.h.b16 %v2467
    %v3024 = vunpack.c.l.b16 %v2468
    %v3025 = vunpack.c.h.b16 %v2468
    %v3026 = vunpack.c.l.b16 %v2469
    %v3027 = vunpack.c.h.b16 %v2469
    %v3028 = vunpack.c.l.b16 %v2470
    %v3029 = vunpack.c.h.b16 %v2470
    %v3030 = vunpack.c.l.b16 %v2471
    %v3031 = vunpack.c.h.b16 %v2471
    %v3032 = vunpack.c.l.b16 %v2472
    %v3033 = vunpack.c.h.b16 %v2472
    %v3034 = vunpack.c.l.b16 %v2473
    %v3035 = vunpack.c.h.b16 %v2473
    %v3036 = vunpack.c.l.b16 %v2474
    %v3037 = vunpack.c.h.b16 %v2474
    %v3038 = vunpack.c.l.b16 %v2475
    %v3039 = vunpack.c.h.b16 %v2475
    %v3040 = vunpack.c.l.b16 %v2476
    %v3041 = vunpack.c.h.b16 %v2476
    %v3042 = vunpack.c.l.b16 %v2477
    %v3043 = vunpack.c.h.b16 %v2477
    %v3044 = vunpack.c.l.b16 %v2478
    %v3045 = vunpack.c.h.b16 %v2478
    %v3046 = vunpack.c.l.b16 %v2479
    %v3047 = vunpack.c.h.b16 %v2479
    %v3048 = vunpack.c.l.b16 %v2480
    %v3049 = vunpack.c.h.b16 %v2480
    %v3050 = vunpack.c.l.b16 %v2481
    %v3051 = vunpack.c.h.b16 %v2481
    %v3052 = vunpack.c.l.b16 %v2482
    %v3053 = vunpack.c.h.b16 %v2482
    %v3054 = vunpack.c.l.b16 %v2483
    %v3055 = vunpack.c.h.b16 %v2483
    %v3056 = vunpack.c.l.b16 %v2484
    %v3057 = vunpack.c.h.b16 %v2484
    %v3058 = vunpack.c.l.b16 %v2485
    %v3059 = vunpack.c.h.b16 %v2485
    %v3060 = vunpack.c.l.b16 %v2486
    %v3061 = vunpack.c.h.b16 %v2486
    %v3062 = vunpack.c.l.b16 %v2487
    %v3063 = vunpack.c.h.b16 %v2487
    %v3064 = vunpack.c.l.b16 %v2488
    %v3065 = vunpack.c.h.b16 %v2488
    %v3066 = vunpack.c.l.b16 %v2489
    %v3067 = vunpack.c.h.b16 %v2489
    %v3068 = vunpack.c.l.b16 %v2490
    %v3069 = vunpack.c.h.b16 %v2490
    %v3070 = vunpack.c.l.b16 %v2491
    %v3071 = vunpack.c.h.b16 %v2491
    %v3072 = vunpack.c.l.b16 %v2492
    %v3073 = vunpack.c.h.b16 %v2492
    %v3074 = vunpack.c.l.b16 %v2493
    %v3075 = vunpack.c.h.b16 %v2493
    %v3076 = vunpack.c.l.b16 %v2494
    %v3077 = vunpack.c.h.b16 %v2494
    %v3078 = vunpack.c.l.b16 %v2495
    %v3079 = vunpack.c.h.b16 %v2495
    %v3080 = vunpack.c.l.b16 %v2496
    %v3081 = vunpack.c.h.b16 %v2496
    %v3082 = vunpack.c.l.b16 %v2497
    %v3083 = vunpack.c.h.b16 %v2497
    %v3084 = vunpack.c.l.b16 %v2498
    %v3085 = vunpack.c.h.b16 %v2498
    %v3086 = vunpack.c.l.b16 %v2499
    %v3087 = vunpack.c.h.b16 %v2499
    %v3088 = vunpack.c.l.b16 %v2500
    %v3089 = vunpack.c.h.b16 %v2500
    %v3090 = vunpack.c.l.b16 %v2501
    %v3091 = vunpack.c.h.b16 %v2501
    %v3092 = vunpack.c.l.b16 %v2502
    %v3093 = vunpack.c.h.b16 %v2502
    %v3094 = vunpack.c.l.b16 %v2503
    %v3095 = vunpack.c.h.b16 %v2503
    %v3096 = vunpack.c.l.b16 %v2504
    %v3097 = vunpack.c.h.b16 %v2504
    %v3098 = vunpack.c.l.b16 %v2505
    %v3099 = vunpack.c.h.b16 %v2505
    %v3100 = vunpack.c.l.b16 %v2506
    %v3101 = vunpack.c.h.b16 %v2506
    %v3102 = vunpack.c.l.b16 %v2507
    %v3103 = vunpack.c.h.b16 %v2507
    %v3104 = vunpack.c.l.b16 %v2508
    %v3105 = vunpack.c.h.b16 %v2508
    %v3106 = vunpack.c.l.b16 %v2509
    %v3107 = vunpack.c.h.b16 %v2509
    %v3108 = vpack.c.b16 %v2728, %v2724
    %v3109 = vpack.c.b16 %v2729, %v2725
    %v3110 = vpack.c.b16 %v2730, %v2726
    %v3111 = vpack.c.b16 %v2731, %v2727
    %v3112 = vpack.c.b16 %v2736, %v2732
    %v3113 = vpack.c.b16 %v2737, %v2733
    %v3114 = vpack.c.b16 %v2738, %v2734
    %v3115 = vpack.c.b16 %v2739, %v2735
    %v3116 = vpack.c.b16 %v2744, %v2740
    %v3117 = vpack.c.b16 %v2745, %v2741
    %v3118 = vpack.c.b16 %v2746, %v2742
    %v3119 = vpack.c.b16 %v2747, %v2743
    %v3120 = vpack.c.b16 %v2752, %v2748
    %v3121 = vpack.c.b16 %v2753, %v2749
    %v3122 = vpack.c.b16 %v2754, %v2750
    %v3123 = vpack.c.b16 %v2755, %v2751
    %v3124 = vpack.c.b16 %v2760, %v2756
    %v3125 = vpack.c.b16 %v2761, %v2757
    %v3126 = vpack.c.b16 %v2762, %v2758
    %v3127 = vpack.c.b16 %v2763, %v2759
    %v3128 = vpack.c.b16 %v2768, %v2764
    %v3129 = vpack.c.b16 %v2769, %v2765
    %v3130 = vpack.c.b16 %v2770, %v2766
    %v3131 = vpack.c.b16 %v2771, %v2767
    %v3132 = vpack.c.b16 %v2776, %v2772
    %v3133 = vpack.c.b16 %v2777, %v2773
    %v3134 = vpack.c.b16 %v2778, %v2774
    %v3135 = vpack.c.b16 %v2779, %v2775
    %v3136 = vpack.c.b16 %v2784, %v2780
    %v3137 = vpack.c.b16 %v2785, %v2781
    %v3138 = vpack.c.b16 %v2786, %v2782
    %v3139 = vpack.c.b16 %v2787, %v2783
    %v3140 = vpack.c.b16 %v2792, %v2788
    %v3141 = vpack.c.b16 %v2793, %v2789
    %v3142 = vpack.c.b16 %v2794, %v2790
    %v3143 = vpack.c.b16 %v2795, %v2791
    %v3144 = vpack.c.b16 %v2800, %v2796
    %v3145 = vpack.c.b16 %v2801, %v2797
    %v3146 = vpack.c.b16 %v2802, %v2798
    %v3147 = vpack.c.b16 %v2803, %v2799
    %v3148 = vpack.c.b16 %v2808, %v2804
    %v3149 = vpack.c.b16 %v2809, %v2805
    %v3150 = vpack.c.b16 %v2810, %v2806
    %v3151 = vpack.c.b16 %v2811, %v2807
    %v3152 = vpack.c.b16 %v2816, %v2812
    %v3153 = vpack.c.b16 %v2817, %v2813
    %v3154 = vpack.c.b16 %v2818, %v2814
    %v3155 = vpack.c.b16 %v2819, %v2815
    %v3156 = vpack.c.b16 %v2824, %v2820
    %v3157 = vpack.c.b16 %v2825, %v2821
    %v3158 = vpack.c.b16 %v2826, %v2822
    %v3159 = vpack.c.b16 %v2827, %v2823
    %v3160 = vpack.c.b16 %v2832, %v2828
    %v3161 = vpack.c.b16 %v2833, %v2829
    %v3162 = vpack.c.b16 %v2834, %v2830
    %v3163 = vpack.c.b16 %v2835, %v2831
    %v3164 = vpack.c.b16 %v2840, %v2836
    %v3165 = vpack.c.b16 %v2841, %v2837
    %v3166 = vpack.c.b16 %v2842, %v2838
    %v3167 = vpack.c.b16 %v2843, %v2839
    %v3168 = vpack.c.b16 %v2848, %v2844
    %v3169 = vpack.c.b16 %v2849, %v2845
    %v3170 = vpack.c.b16 %v2850, %v2846
    %v3171 = vpack.c.b16 %v2851, %v2847
    %v3172 = vpack.c.b16 %v2856, %v2852
    %v3173 = vpack.c.b16 %v2857, %v2853
    %v3174 = vpack.c.b16 %v2858, %v2854
    %v3175 = vpack.c.b16 %v2859, %v2855
    %v3176 = vpack.c.b16 %v2864, %v2860
    %v3177 = vpack.c.b16 %v2865, %v2861
    %v3178 = vpack.c.b16 %v2866, %v2862
    %v3179 = vpack.c.b16 %v2867, %v2863
    %v3180 = vpack.c.b16 %v2872, %v2868
    %v3181 = vpack.c.b16 %v2873, %v2869
    %v3182 = vpack.c.b16 %v2874, %v2870
    %v3183 = vpack.c.b16 %v2875, %v2871
    %v3184 = vpack.c.b16 %v2880, %v2876
    %v3185 = vpack.c.b16 %v2881, %v2877
    %v3186 = vpack.c.b16 %v2882, %v2878
    %v3187 = vpack.c.b16 %v2883, %v2879
    %v3188 = vpack.c.b16 %v2888, %v2884
    %v3189 = vpack.c.b16 %v2889, %v2885
    %v3190 = vpack.c.b16 %v2890, %v2886
    %v3191 = vpack.c.b16 %v2891, %v2887
    %v3192 = vpack.c.b16 %v2896, %v2892
    %v3193 = vpack.c.b16 %v2897, %v2893
    %v3194 = vpack.c.b16 %v2898, %v2894
    %v3195 = vpack.c.b16 %v2899, %v2895
    %v3196 = vpack.c.b16 %v2904, %v2900
    %v3197 = vpack.c.b16 %v2905, %v2901
    %v3198 = vpack.c.b16 %v2906, %v2902
    %v3199 = vpack.c.b16 %v2907, %v2903
    %v3200 = vpack.c.b16 %v2912, %v2908
    %v3201 = vpack.c.b16 %v2913, %v2909
    %v3202 = vpack.c.b16 %v2914, %v2910
    %v3203 = vpack.c.b16 %v2915, %v2911
    %v3204 = vpack.c.b16 %v2920, %v2916
    %v3205 = vpack.c.b16 %v2921, %v2917
    %v3206 = vpack.c.b16 %v2922, %v2918
    %v3207 = vpack.c.b16 %v2923, %v2919
    %v3208 = vpack.c.b16 %v2928, %v2924
    %v3209 = vpack.c.b16 %v2929, %v2925
    %v3210 = vpack.c.b16 %v2930, %v2926
    %v3211 = vpack.c.b16 %v2931, %v2927
    %v3212 = vpack.c.b16 %v2936, %v2932
    %v3213 = vpack.c.b16 %v2937, %v2933
    %v3214 = vpack.c.b16 %v2938, %v2934
    %v3215 = vpack.c.b16 %v2939, %v2935
    %v3216 = vpack.c.b16 %v2944, %v2940
    %v3217 = vpack.c.b16 %v2945, %v2941
    %v3218 = vpack.c.b16 %v2946, %v2942
    %v3219 = vpack.c.b16 %v2947, %v2943
    %v3220 = vpack.c.b16 %v2952, %v2948
    %v3221 = vpack.c.b16 %v2953, %v2949
    %v3222 = vpack.c.b16 %v2954, %v2950
    %v3223 = vpack.c.b16 %v2955, %v2951
    %v3224 = vpack.c.b16 %v2960, %v2956
    %v3225 = vpack.c.b16 %v2961, %v2957
    %v3226 = vpack.c.b16 %v2962, %v2958
    %v3227 = vpack.c.b16 %v2963, %v2959
    %v3228 = vpack.c.b16 %v2968, %v2964
    %v3229 = vpack.c.b16 %v2969, %v2965
    %v3230 = vpack.c.b16 %v2970, %v2966
    %v3231 = vpack.c.b16 %v2971, %v2967
    %v3232 = vpack.c.b16 %v2976, %v2972
    %v3233 = vpack.c.b16 %v2977, %v2973
    %v3234 = vpack.c.b16 %v2978, %v2974
    %v3235 = vpack.c.b16 %v2979, %v2975
    %v3236 = vpack.c.b16 %v2984, %v2980
    %v3237 = vpack.c.b16 %v2985, %v2981
    %v3238 = vpack.c.b16 %v2986, %v2982
    %v3239 = vpack.c.b16 %v2987, %v2983
    %v3240 = vpack.c.b16 %v2992, %v2988
    %v3241 = vpack.c.b16 %v2993, %v2989
    %v3242 = vpack.c.b16 %v2994, %v2990
    %v3243 = vpack.c.b16 %v2995, %v2991
    %v3244 = vpack.c.b16 %v3000, %v2996
    %v3245 = vpack.c.b16 %v3001, %v2997
    %v3246 = vpack.c.b16 %v3002, %v2998
    %v3247 = vpack.c.b16 %v3003, %v2999
    %v3248 = vpack.c.b16 %v3008, %v3004
    %v3249 = vpack.c.b16 %v3009, %v3005
    %v3250 = vpack.c.b16 %v3010, %v3006
    %v3251 = vpack.c.b16 %v3011, %v3007
    %v3252 = vpack.c.b16 %v3016, %v3012
    %v3253 = vpack.c.b16 %v3017, %v3013
    %v3254 = vpack.c.b16 %v3018, %v3014
    %v3255 = vpack.c.b16 %v3019, %v3015
    %v3256 = vpack.c.b16 %v3024, %v3020
    %v3257 = vpack.c.b16 %v3025, %v3021
    %v3258 = vpack.c.b16 %v3026, %v3022
    %v3259 = vpack.c.b16 %v3027, %v3023
    %v3260 = vpack.c.b16 %v3032, %v3028
    %v3261 = vpack.c.b16 %v3033, %v3029
    %v3262 = vpack.c.b16 %v3034, %v3030
    %v3263 = vpack.c.b16 %v3035, %v3031
    %v3264 = vpack.c.b16 %v3040, %v3036
    %v3265 = vpack.c.b16 %v3041, %v3037
    %v3266 = vpack.c.b16 %v3042, %v3038
    %v3267 = vpack.c.b16 %v3043, %v3039
    %v3268 = vpack.c.b16 %v3048, %v3044
    %v3269 = vpack.c.b16 %v3049, %v3045
    %v3270 = vpack.c.b16 %v3050, %v3046
    %v3271 = vpack.c.b16 %v3051, %v3047
    %v3272 = vpack.c.b16 %v3056, %v3052
    %v3273 = vpack.c.b16 %v3057, %v3053
    %v3274 = vpack.c.b16 %v3058, %v3054
    %v3275 = vpack.c.b16 %v3059, %v3055
    %v3276 = vpack.c.b16 %v3064, %v3060
    %v3277 = vpack.c.b16 %v3065, %v3061
    %v3278 = vpack.c.b16 %v3066, %v3062
    %v3279 = vpack.c.b16 %v3067, %v3063
    %v3280 = vpack.c.b16 %v3072, %v3068
    %v3281 = vpack.c.b16 %v3073, %v3069
    %v3282 = vpack.c.b16 %v3074, %v3070
    %v3283 = vpack.c.b16 %v3075, %v3071
    %v3284 = vpack.c.b16 %v3080, %v3076
    %v3285 = vpack.c.b16 %v3081, %v3077
    %v3286 = vpack.c.b16 %v3082, %v3078
    %v3287 = vpack.c.b16 %v3083, %v3079
    %v3288 = vpack.c.b16 %v3088, %v3084
    %v3289 = vpack.c.b16 %v3089, %v3085
    %v3290 = vpack.c.b16 %v3090, %v3086
    %v3291 = vpack.c.b16 %v3091, %v3087
    %v3292 = vpack.c.b16 %v3096, %v3092
    %v3293 = vpack.c.b16 %v3097, %v3093
    %v3294 = vpack.c.b16 %v3098, %v3094
    %v3295 = vpack.c.b16 %v3099, %v3095
    %v3296 = vpack.c.b16 %v3104, %v3100
    %v3297 = vpack.c.b16 %v3105, %v3101
    %v3298 = vpack.c.b16 %v3106, %v3102
    %v3299 = vpack.c.b16 %v3107, %v3103
    %3492 = vmatprep.subr.bf16.mxu0 %v3137
    %3493 = vmatpush1.bf16.msra.mxu0 %v3136
    %3494 = vmatprep.subr.bf16.mxu0 %v3133
    %3495 = vmatpush1.bf16.msra.mxu0 %v3132
    %3496 = vmatprep.subr.bf16.mxu0 %v3129
    %3497 = vmatpush1.bf16.msra.mxu0 %v3128
    %3498 = vmatprep.subr.bf16.mxu0 %v3125
    %3499 = vmatpush1.bf16.msra.mxu0 %v3124
    %3500 = vmatprep.subr.bf16.mxu0 %v3121
    %3501 = vmatpush1.bf16.msra.mxu0 %v3120
    %3502 = vmatprep.subr.bf16.mxu0 %v3117
    %3503 = vmatpush1.bf16.msra.mxu0 %v3116
    %3504 = vmatprep.subr.bf16.mxu0 %v3113
    %3505 = vmatpush1.bf16.msra.mxu0 %v3112
    %3506 = vmatprep.subr.bf16.mxu0 %v3109
    %3507 = vmatpush1.bf16.msra.mxu0 %v3108
    %3508 = vmatprep.subr.bf16.mxu0 %v3169
    %3509 = vmatpush2.bf16.msra.mxu0 %v3168
    %3510 = vmatprep.subr.bf16.mxu0 %v3165
    %3511 = vmatpush2.bf16.msra.mxu0 %v3164
    %3512 = vmatprep.subr.bf16.mxu0 %v3161
    %3513 = vmatpush2.bf16.msra.mxu0 %v3160
    %3514 = vmatprep.subr.bf16.mxu0 %v3157
    %3515 = vmatpush2.bf16.msra.mxu0 %v3156
    %3516 = vmatprep.subr.bf16.mxu0 %v3153
    %3517 = vmatpush2.bf16.msra.mxu0 %v3152
    %3518 = vmatprep.subr.bf16.mxu0 %v3149
    %3519 = vmatpush2.bf16.msra.mxu0 %v3148
    %3520 = vmatprep.subr.bf16.mxu0 %v3145
    %3521 = vmatpush2.bf16.msra.mxu0 %v3144
    %3522 = vmatprep.subr.bf16.mxu0 %v3141
    %3523 = vmatpush2.bf16.msra.mxu0 %v3140
    %3524 = vmatprep.mubr.bf16.mxu0 %v2313
    %3525 = vmatmul.mubr.bf16.gmra.mxu0 %v2312
    %v3526 = vpop.f32.mrf.mxu0
    %v3527 = vadd.f32 %v2515, %v3526
    %v3528 = vpop.f32.mrf.mxu0
    %v3529 = vadd.f32 %v2519, %v3528
    %v3530 = vpop.f32.mrf.mxu0
    %v3531 = vadd.f32 %v2515, %v3530
    %v3532 = vpop.f32.mrf.mxu0
    %v3533 = vadd.f32 %v2519, %v3532
    %3534 = vdwg.mxu0
    %3535 = vmatprep.subr.bf16.mxu0 %v3201
    %3536 = vmatpush1.bf16.msra.mxu0 %v3200
    %3537 = vmatprep.subr.bf16.mxu0 %v3197
    %3538 = vmatpush1.bf16.msra.mxu0 %v3196
    %3539 = vmatprep.subr.bf16.mxu0 %v3193
    %3540 = vmatpush1.bf16.msra.mxu0 %v3192
    %3541 = vmatprep.subr.bf16.mxu0 %v3189
    %3542 = vmatpush1.bf16.msra.mxu0 %v3188
    %3543 = vmatprep.subr.bf16.mxu0 %v3185
    %3544 = vmatpush1.bf16.msra.mxu0 %v3184
    %3545 = vmatprep.subr.bf16.mxu0 %v3181
    %3546 = vmatpush1.bf16.msra.mxu0 %v3180
    %3547 = vmatprep.subr.bf16.mxu0 %v3177
    %3548 = vmatpush1.bf16.msra.mxu0 %v3176
    %3549 = vmatprep.subr.bf16.mxu0 %v3173
    %3550 = vmatpush1.bf16.msra.mxu0 %v3172
    %3551 = vmatprep.subr.bf16.mxu0 %v3233
    %3552 = vmatpush2.bf16.msra.mxu0 %v3232
    %3553 = vmatprep.subr.bf16.mxu0 %v3229
    %3554 = vmatpush2.bf16.msra.mxu0 %v3228
    %3555 = vmatprep.subr.bf16.mxu0 %v3225
    %3556 = vmatpush2.bf16.msra.mxu0 %v3224
    %3557 = vmatprep.subr.bf16.mxu0 %v3221
    %3558 = vmatpush2.bf16.msra.mxu0 %v3220
    %3559 = vmatprep.subr.bf16.mxu0 %v3217
    %3560 = vmatpush2.bf16.msra.mxu0 %v3216
    %3561 = vmatprep.subr.bf16.mxu0 %v3213
    %3562 = vmatpush2.bf16.msra.mxu0 %v3212
    %3563 = vmatprep.subr.bf16.mxu0 %v3209
    %3564 = vmatpush2.bf16.msra.mxu0 %v3208
    %3565 = vmatprep.subr.bf16.mxu0 %v3205
    %3566 = vmatpush2.bf16.msra.mxu0 %v3204
    %3567 = vmatprep.mubr.bf16.mxu0 %v2315
    %3568 = vmatmul.mubr.bf16.gmra.mxu0 %v2314
    %v3569 = vpop.f32.mrf.mxu0
    %v3570 = vadd.f32 %v3527, %v3569
    %v3571 = vpop.f32.mrf.mxu0
    %v3572 = vadd.f32 %v3529, %v3571
    %v3573 = vpop.f32.mrf.mxu0
    %v3574 = vadd.f32 %v3531, %v3573
    %v3575 = vpop.f32.mrf.mxu0
    %v3576 = vadd.f32 %v3533, %v3575
    %3577 = vdwg.mxu0
    %3578 = vmatprep.subr.bf16.mxu0 %v3265
    %3579 = vmatpush1.bf16.msra.mxu0 %v3264
    %3580 = vmatprep.subr.bf16.mxu0 %v3261
    %3581 = vmatpush1.bf16.msra.mxu0 %v3260
    %3582 = vmatprep.subr.bf16.mxu0 %v3257
    %3583 = vmatpush1.bf16.msra.mxu0 %v3256
    %3584 = vmatprep.subr.bf16.mxu0 %v3253
    %3585 = vmatpush1.bf16.msra.mxu0 %v3252
    %3586 = vmatprep.subr.bf16.mxu0 %v3249
    %3587 = vmatpush1.bf16.msra.mxu0 %v3248
    %3588 = vmatprep.subr.bf16.mxu0 %v3245
    %3589 = vmatpush1.bf16.msra.mxu0 %v3244
    %3590 = vmatprep.subr.bf16.mxu0 %v3241
    %3591 = vmatpush1.bf16.msra.mxu0 %v3240
    %3592 = vmatprep.subr.bf16.mxu0 %v3237
    %3593 = vmatpush1.bf16.msra.mxu0 %v3236
    %3594 = vmatprep.subr.bf16.mxu0 %v3297
    %3595 = vmatpush2.bf16.msra.mxu0 %v3296
    %3596 = vmatprep.subr.bf16.mxu0 %v3293
    %3597 = vmatpush2.bf16.msra.mxu0 %v3292
    %3598 = vmatprep.subr.bf16.mxu0 %v3289
    %3599 = vmatpush2.bf16.msra.mxu0 %v3288
    %3600 = vmatprep.subr.bf16.mxu0 %v3285
    %3601 = vmatpush2.bf16.msra.mxu0 %v3284
    %3602 = vmatprep.subr.bf16.mxu0 %v3281
    %3603 = vmatpush2.bf16.msra.mxu0 %v3280
    %3604 = vmatprep.subr.bf16.mxu0 %v3277
    %3605 = vmatpush2.bf16.msra.mxu0 %v3276
    %3606 = vmatprep.subr.bf16.mxu0 %v3273
    %3607 = vmatpush2.bf16.msra.mxu0 %v3272
    %3608 = vmatprep.subr.bf16.mxu0 %v3269
    %3609 = vmatpush2.bf16.msra.mxu0 %v3268
    %3610 = vmatprep.mubr.bf16.mxu0 %v2317
    %3611 = vmatmul.mubr.bf16.gmra.mxu0 %v2316
    %v3612 = vpop.f32.mrf.mxu0
    %v3613 = vadd.f32 %v3570, %v3612
    %v3614 = vpop.f32.mrf.mxu0
    %v3615 = vadd.f32 %v3572, %v3614
    %v3616 = vpop.f32.mrf.mxu0
    %v3617 = vadd.f32 %v3574, %v3616
    %v3618 = vpop.f32.mrf.mxu0
    %v3619 = vadd.f32 %v3576, %v3618
    %3620 = vdwg.mxu0
    %3621 = vmatprep.subr.bf16.mxu0 %v3139
    %3622 = vmatpush1.bf16.msra.mxu0 %v3138
    %3623 = vmatprep.subr.bf16.mxu0 %v3135
    %3624 = vmatpush1.bf16.msra.mxu0 %v3134
    %3625 = vmatprep.subr.bf16.mxu0 %v3131
    %3626 = vmatpush1.bf16.msra.mxu0 %v3130
    %3627 = vmatprep.subr.bf16.mxu0 %v3127
    %3628 = vmatpush1.bf16.msra.mxu0 %v3126
    %3629 = vmatprep.subr.bf16.mxu0 %v3123
    %3630 = vmatpush1.bf16.msra.mxu0 %v3122
    %3631 = vmatprep.subr.bf16.mxu0 %v3119
    %3632 = vmatpush1.bf16.msra.mxu0 %v3118
    %3633 = vmatprep.subr.bf16.mxu0 %v3115
    %3634 = vmatpush1.bf16.msra.mxu0 %v3114
    %3635 = vmatprep.subr.bf16.mxu0 %v3111
    %3636 = vmatpush1.bf16.msra.mxu0 %v3110
    %3637 = vmatprep.subr.bf16.mxu0 %v3171
    %3638 = vmatpush2.bf16.msra.mxu0 %v3170
    %3639 = vmatprep.subr.bf16.mxu0 %v3167
    %3640 = vmatpush2.bf16.msra.mxu0 %v3166
    %3641 = vmatprep.subr.bf16.mxu0 %v3163
    %3642 = vmatpush2.bf16.msra.mxu0 %v3162
    %3643 = vmatprep.subr.bf16.mxu0 %v3159
    %3644 = vmatpush2.bf16.msra.mxu0 %v3158
    %3645 = vmatprep.subr.bf16.mxu0 %v3155
    %3646 = vmatpush2.bf16.msra.mxu0 %v3154
    %3647 = vmatprep.subr.bf16.mxu0 %v3151
    %3648 = vmatpush2.bf16.msra.mxu0 %v3150
    %3649 = vmatprep.subr.bf16.mxu0 %v3147
    %3650 = vmatpush2.bf16.msra.mxu0 %v3146
    %3651 = vmatprep.subr.bf16.mxu0 %v3143
    %3652 = vmatpush2.bf16.msra.mxu0 %v3142
    %3653 = vmatprep.mubr.bf16.mxu0 %v2313
    %3654 = vmatmul.mubr.bf16.gmra.mxu0 %v2312
    %v3655 = vpop.f32.mrf.mxu0
    %v3656 = vadd.f32 %v2523, %v3655
    %v3657 = vpop.f32.mrf.mxu0
    %v3658 = vadd.f32 %v2527, %v3657
    %v3659 = vpop.f32.mrf.mxu0
    %v3660 = vadd.f32 %v2523, %v3659
    %v3661 = vpop.f32.mrf.mxu0
    %v3662 = vadd.f32 %v2527, %v3661
    %3663 = vdwg.mxu0
    %3664 = vmatprep.subr.bf16.mxu0 %v3203
    %3665 = vmatpush1.bf16.msra.mxu0 %v3202
    %3666 = vmatprep.subr.bf16.mxu0 %v3199
    %3667 = vmatpush1.bf16.msra.mxu0 %v3198
    %3668 = vmatprep.subr.bf16.mxu0 %v3195
    %3669 = vmatpush1.bf16.msra.mxu0 %v3194
    %3670 = vmatprep.subr.bf16.mxu0 %v3191
    %3671 = vmatpush1.bf16.msra.mxu0 %v3190
    %3672 = vmatprep.subr.bf16.mxu0 %v3187
    %3673 = vmatpush1.bf16.msra.mxu0 %v3186
    %3674 = vmatprep.subr.bf16.mxu0 %v3183
    %3675 = vmatpush1.bf16.msra.mxu0 %v3182
    %3676 = vmatprep.subr.bf16.mxu0 %v3179
    %3677 = vmatpush1.bf16.msra.mxu0 %v3178
    %3678 = vmatprep.subr.bf16.mxu0 %v3175
    %3679 = vmatpush1.bf16.msra.mxu0 %v3174
    %3680 = vmatprep.subr.bf16.mxu0 %v3235
    %3681 = vmatpush2.bf16.msra.mxu0 %v3234
    %3682 = vmatprep.subr.bf16.mxu0 %v3231
    %3683 = vmatpush2.bf16.msra.mxu0 %v3230
    %3684 = vmatprep.subr.bf16.mxu0 %v3227
    %3685 = vmatpush2.bf16.msra.mxu0 %v3226
    %3686 = vmatprep.subr.bf16.mxu0 %v3223
    %3687 = vmatpush2.bf16.msra.mxu0 %v3222
    %3688 = vmatprep.subr.bf16.mxu0 %v3219
    %3689 = vmatpush2.bf16.msra.mxu0 %v3218
    %3690 = vmatprep.subr.bf16.mxu0 %v3215
    %3691 = vmatpush2.bf16.msra.mxu0 %v3214
    %3692 = vmatprep.subr.bf16.mxu0 %v3211
    %3693 = vmatpush2.bf16.msra.mxu0 %v3210
    %3694 = vmatprep.subr.bf16.mxu0 %v3207
    %3695 = vmatpush2.bf16.msra.mxu0 %v3206
    %3696 = vmatprep.mubr.bf16.mxu0 %v2315
    %3697 = vmatmul.mubr.bf16.gmra.mxu0 %v2314
    %v3698 = vpop.f32.mrf.mxu0
    %v3699 = vadd.f32 %v3656, %v3698
    %v3700 = vpop.f32.mrf.mxu0
    %v3701 = vadd.f32 %v3658, %v3700
    %v3702 = vpop.f32.mrf.mxu0
    %v3703 = vadd.f32 %v3660, %v3702
    %v3704 = vpop.f32.mrf.mxu0
    %v3705 = vadd.f32 %v3662, %v3704
    %3706 = vdwg.mxu0
    %3707 = vmatprep.subr.bf16.mxu0 %v3267
    %3708 = vmatpush1.bf16.msra.mxu0 %v3266
    %3709 = vmatprep.subr.bf16.mxu0 %v3263
    %3710 = vmatpush1.bf16.msra.mxu0 %v3262
    %3711 = vmatprep.subr.bf16.mxu0 %v3259
    %3712 = vmatpush1.bf16.msra.mxu0 %v3258
    %3713 = vmatprep.subr.bf16.mxu0 %v3255
    %3714 = vmatpush1.bf16.msra.mxu0 %v3254
    %3715 = vmatprep.subr.bf16.mxu0 %v3251
    %3716 = vmatpush1.bf16.msra.mxu0 %v3250
    %3717 = vmatprep.subr.bf16.mxu0 %v3247
    %3718 = vmatpush1.bf16.msra.mxu0 %v3246
    %3719 = vmatprep.subr.bf16.mxu0 %v3243
    %3720 = vmatpush1.bf16.msra.mxu0 %v3242
    %3721 = vmatprep.subr.bf16.mxu0 %v3239
    %3722 = vmatpush1.bf16.msra.mxu0 %v3238
    %3723 = vmatprep.subr.bf16.mxu0 %v3299
    %3724 = vmatpush2.bf16.msra.mxu0 %v3298
    %3725 = vmatprep.subr.bf16.mxu0 %v3295
    %3726 = vmatpush2.bf16.msra.mxu0 %v3294
    %3727 = vmatprep.subr.bf16.mxu0 %v3291
    %3728 = vmatpush2.bf16.msra.mxu0 %v3290
    %3729 = vmatprep.subr.bf16.mxu0 %v3287
    %3730 = vmatpush2.bf16.msra.mxu0 %v3286
    %3731 = vmatprep.subr.bf16.mxu0 %v3283
    %3732 = vmatpush2.bf16.msra.mxu0 %v3282
    %3733 = vmatprep.subr.bf16.mxu0 %v3279
    %3734 = vmatpush2.bf16.msra.mxu0 %v3278
    %3735 = vmatprep.subr.bf16.mxu0 %v3275
    %3736 = vmatpush2.bf16.msra.mxu0 %v3274
    %3737 = vmatprep.subr.bf16.mxu0 %v3271
    %3738 = vmatpush2.bf16.msra.mxu0 %v3270
    %3739 = vmatprep.mubr.bf16.mxu0 %v2317
    %3740 = vmatmul.mubr.bf16.gmra.mxu0 %v2316
    %v3741 = vpop.f32.mrf.mxu0
    %v3742 = vadd.f32 %v3699, %v3741
    %v3743 = vpop.f32.mrf.mxu0
    %v3744 = vadd.f32 %v3701, %v3743
    %v3745 = vpop.f32.mrf.mxu0
    %v3746 = vadd.f32 %v3703, %v3745
    %v3747 = vpop.f32.mrf.mxu0
    %v3748 = vadd.f32 %v3705, %v3747
    %3749 = vdwg.mxu0
    %v3750 = vmax.f32 %v3613, 0.0
    %v3751 = vmax.f32 %v3615, 0.0
    %v3752 = vmax.f32 %v3742, 0.0
    %v3753 = vmax.f32 %v3744, 0.0
    %v3754 = vmax.f32 %v3617, 0.0
    %v3755 = vmax.f32 %v3619, 0.0
    %v3756 = vmax.f32 %v3746, 0.0
    %v3757 = vmax.f32 %v3748, 0.0
    %v3758 = vpack.c.bf16 %v3754, %v3750
    %v3759 = vpack.c.bf16 %v3755, %v3751
    %v3760 = vpack.c.bf16 %v3756, %v3752
    %v3761 = vpack.c.bf16 %v3757, %v3753
    %v3762 = vld [vmem:[#allocation11] sm:$0xf]
    %v3763 = vld [vmem:[#allocation11 + $0x4] sm:$0xf]
    %v3764 = vld [vmem:[#allocation11 + $0x8] sm:$0xf]
    %v3765 = vld [vmem:[#allocation11 + $0xc] sm:$0xf]
    %v3766 = vld [vmem:[#allocation11 + $0x10] sm:$0xf]
    %v3767 = vld [vmem:[#allocation11 + $0x14] sm:$0xf]
    %v3768 = vld [vmem:[#allocation11 + $0x18] sm:$0xf]
    %v3769 = vld [vmem:[#allocation11 + $0x1c] sm:$0xf]
    %v3770 = vld [vmem:[#allocation11 + $0x20] sm:$0xf]
    %v3771 = vld [vmem:[#allocation11 + $0x24] sm:$0xf]
    %v3772 = vld [vmem:[#allocation11 + $0x28] sm:$0xf]
    %v3773 = vld [vmem:[#allocation11 + $0x2c] sm:$0xf]
    %v3774 = vld [vmem:[#allocation11 + $0x30] sm:$0xf]
    %v3775 = vld [vmem:[#allocation11 + $0x34] sm:$0xf]
    %v3776 = vld [vmem:[#allocation11 + $0x38] sm:$0xf]
    %v3777 = vld [vmem:[#allocation11 + $0x3c] sm:$0xf]
    %v3778 = vld [vmem:[#allocation11 + $0x40] sm:$0xf]
    %v3779 = vld [vmem:[#allocation11 + $0x44] sm:$0xf]
    %v3780 = vld [vmem:[#allocation11 + $0x48] sm:$0xf]
    %v3781 = vld [vmem:[#allocation11 + $0x4c] sm:$0xf]
    %v3782 = vld [vmem:[#allocation11 + $0x50] sm:$0xf]
    %v3783 = vld [vmem:[#allocation11 + $0x54] sm:$0xf]
    %v3784 = vld [vmem:[#allocation11 + $0x58] sm:$0xf]
    %v3785 = vld [vmem:[#allocation11 + $0x5c] sm:$0xf]
    %v3786 = vld [vmem:[#allocation11 + $0x60] sm:$0xf]
    %v3787 = vld [vmem:[#allocation11 + $0x64] sm:$0xf]
    %v3788 = vld [vmem:[#allocation11 + $0x68] sm:$0xf]
    %v3789 = vld [vmem:[#allocation11 + $0x6c] sm:$0xf]
    %v3790 = vld [vmem:[#allocation11 + $0x70] sm:$0xf]
    %v3791 = vld [vmem:[#allocation11 + $0x74] sm:$0xf]
    %v3792 = vld [vmem:[#allocation11 + $0x78] sm:$0xf]
    %v3793 = vld [vmem:[#allocation11 + $0x7c] sm:$0xf]
    %v3794 = vld [vmem:[#allocation11 + $0x80] sm:$0xf]
    %v3795 = vld [vmem:[#allocation11 + $0x84] sm:$0xf]
    %v3796 = vld [vmem:[#allocation11 + $0x88] sm:$0xf]
    %v3797 = vld [vmem:[#allocation11 + $0x8c] sm:$0xf]
    %v3798 = vld [vmem:[#allocation11 + $0x90] sm:$0xf]
    %v3799 = vld [vmem:[#allocation11 + $0x94] sm:$0xf]
    %v3800 = vld [vmem:[#allocation11 + $0x98] sm:$0xf]
    %v3801 = vld [vmem:[#allocation11 + $0x9c] sm:$0xf]
    %v3802 = vld [vmem:[#allocation11 + $0xa0] sm:$0xf]
    %v3803 = vld [vmem:[#allocation11 + $0xa4] sm:$0xf]
    %v3804 = vld [vmem:[#allocation11 + $0xa8] sm:$0xf]
    %v3805 = vld [vmem:[#allocation11 + $0xac] sm:$0xf]
    %v3806 = vld [vmem:[#allocation11 + $0xb0] sm:$0xf]
    %v3807 = vld [vmem:[#allocation11 + $0xb4] sm:$0xf]
    %v3808 = vld [vmem:[#allocation11 + $0xb8] sm:$0xf]
    %v3809 = vld [vmem:[#allocation11 + $0xbc] sm:$0xf]
    %v3810 = vld [vmem:[#allocation11 + $0xc0] sm:$0xf]
    %v3811 = vld [vmem:[#allocation11 + $0xc4] sm:$0xf]
    %v3812 = vld [vmem:[#allocation11 + $0xc8] sm:$0xf]
    %v3813 = vld [vmem:[#allocation11 + $0xcc] sm:$0xf]
    %v3814 = vld [vmem:[#allocation11 + $0xd0] sm:$0xf]
    %v3815 = vld [vmem:[#allocation11 + $0xd4] sm:$0xf]
    %v3816 = vld [vmem:[#allocation11 + $0xd8] sm:$0xf]
    %v3817 = vld [vmem:[#allocation11 + $0xdc] sm:$0xf]
    %v3818 = vld [vmem:[#allocation11 + $0xe0] sm:$0xf]
    %v3819 = vld [vmem:[#allocation11 + $0xe4] sm:$0xf]
    %v3820 = vld [vmem:[#allocation11 + $0xe8] sm:$0xf]
    %v3821 = vld [vmem:[#allocation11 + $0xec] sm:$0xf]
    %v3822 = vld [vmem:[#allocation11 + $0xf0] sm:$0xf]
    %v3823 = vld [vmem:[#allocation11 + $0xf4] sm:$0xf]
    %v3824 = vld [vmem:[#allocation11 + $0xf8] sm:$0xf]
    %v3825 = vld [vmem:[#allocation11 + $0xfc] sm:$0xf]
    %v3826 = vld [vmem:[#allocation13] sm:$0x1]
    %v3828 = vlaneseq
    %v3829 = vshrl.u32 %v3828, 7
    %v3830 = vsub.s32 0, %v3829
    %v3831 = vrot.slane %v3826, %v3830
    %v3897 = vunpack.c.l.b16 %v3762
    %v3898 = vunpack.c.l.b16 %v3763
    %v3899 = vunpack.c.l.b16 %v3764
    %v3900 = vunpack.c.l.b16 %v3765
    %v3901 = vunpack.c.l.b16 %v3766
    %v3902 = vunpack.c.l.b16 %v3767
    %v3903 = vunpack.c.l.b16 %v3768
    %v3904 = vunpack.c.l.b16 %v3769
    %v3905 = vunpack.c.l.b16 %v3770
    %v3906 = vunpack.c.l.b16 %v3771
    %v3907 = vunpack.c.l.b16 %v3772
    %v3908 = vunpack.c.l.b16 %v3773
    %v3909 = vunpack.c.l.b16 %v3774
    %v3910 = vunpack.c.l.b16 %v3775
    %v3911 = vunpack.c.l.b16 %v3776
    %v3912 = vunpack.c.l.b16 %v3777
    %v3913 = vunpack.c.l.b16 %v3778
    %v3914 = vunpack.c.l.b16 %v3779
    %v3915 = vunpack.c.l.b16 %v3780
    %v3916 = vunpack.c.l.b16 %v3781
    %v3917 = vunpack.c.l.b16 %v3782
    %v3918 = vunpack.c.l.b16 %v3783
    %v3919 = vunpack.c.l.b16 %v3784
    %v3920 = vunpack.c.l.b16 %v3785
    %v3921 = vunpack.c.l.b16 %v3786
    %v3922 = vunpack.c.l.b16 %v3787
    %v3923 = vunpack.c.l.b16 %v3788
    %v3924 = vunpack.c.l.b16 %v3789
    %v3925 = vunpack.c.l.b16 %v3790
    %v3926 = vunpack.c.l.b16 %v3791
    %v3927 = vunpack.c.l.b16 %v3792
    %v3928 = vunpack.c.l.b16 %v3793
    %v3929 = vunpack.c.l.b16 %v3794
    %v3930 = vunpack.c.l.b16 %v3795
    %v3931 = vunpack.c.l.b16 %v3796
    %v3932 = vunpack.c.l.b16 %v3797
    %v3933 = vunpack.c.l.b16 %v3798
    %v3934 = vunpack.c.l.b16 %v3799
    %v3935 = vunpack.c.l.b16 %v3800
    %v3936 = vunpack.c.l.b16 %v3801
    %v3937 = vunpack.c.l.b16 %v3802
    %v3938 = vunpack.c.l.b16 %v3803
    %v3939 = vunpack.c.l.b16 %v3804
    %v3940 = vunpack.c.l.b16 %v3805
    %v3941 = vunpack.c.l.b16 %v3806
    %v3942 = vunpack.c.l.b16 %v3807
    %v3943 = vunpack.c.l.b16 %v3808
    %v3944 = vunpack.c.l.b16 %v3809
    %v3945 = vunpack.c.l.b16 %v3810
    %v3946 = vunpack.c.l.b16 %v3811
    %v3947 = vunpack.c.l.b16 %v3812
    %v3948 = vunpack.c.l.b16 %v3813
    %v3949 = vunpack.c.l.b16 %v3814
    %v3950 = vunpack.c.l.b16 %v3815
    %v3951 = vunpack.c.l.b16 %v3816
    %v3952 = vunpack.c.l.b16 %v3817
    %v3953 = vunpack.c.l.b16 %v3818
    %v3954 = vunpack.c.l.b16 %v3819
    %v3955 = vunpack.c.l.b16 %v3820
    %v3956 = vunpack.c.l.b16 %v3821
    %v3957 = vunpack.c.l.b16 %v3822
    %v3958 = vunpack.c.l.b16 %v3823
    %v3959 = vunpack.c.l.b16 %v3824
    %v3960 = vunpack.c.l.b16 %v3825
    %v3961 = vpack.c.b16 %v3898, %v3897
    %v3962 = vpack.c.b16 %v3900, %v3899
    %v3963 = vpack.c.b16 %v3902, %v3901
    %v3964 = vpack.c.b16 %v3904, %v3903
    %v3965 = vpack.c.b16 %v3906, %v3905
    %v3966 = vpack.c.b16 %v3908, %v3907
    %v3967 = vpack.c.b16 %v3910, %v3909
    %v3968 = vpack.c.b16 %v3912, %v3911
    %v3969 = vpack.c.b16 %v3914, %v3913
    %v3970 = vpack.c.b16 %v3916, %v3915
    %v3971 = vpack.c.b16 %v3918, %v3917
    %v3972 = vpack.c.b16 %v3920, %v3919
    %v3973 = vpack.c.b16 %v3922, %v3921
    %v3974 = vpack.c.b16 %v3924, %v3923
    %v3975 = vpack.c.b16 %v3926, %v3925
    %v3976 = vpack.c.b16 %v3928, %v3927
    %v3977 = vpack.c.b16 %v3930, %v3929
    %v3978 = vpack.c.b16 %v3932, %v3931
    %v3979 = vpack.c.b16 %v3934, %v3933
    %v3980 = vpack.c.b16 %v3936, %v3935
    %v3981 = vpack.c.b16 %v3938, %v3937
    %v3982 = vpack.c.b16 %v3940, %v3939
    %v3983 = vpack.c.b16 %v3942, %v3941
    %v3984 = vpack.c.b16 %v3944, %v3943
    %v3985 = vpack.c.b16 %v3946, %v3945
    %v3986 = vpack.c.b16 %v3948, %v3947
    %v3987 = vpack.c.b16 %v3950, %v3949
    %v3988 = vpack.c.b16 %v3952, %v3951
    %v3989 = vpack.c.b16 %v3954, %v3953
    %v3990 = vpack.c.b16 %v3956, %v3955
    %v3991 = vpack.c.b16 %v3958, %v3957
    %v3992 = vpack.c.b16 %v3960, %v3959
    %4025 = vmatprep.subr.bf16.mxu0 0
    %4026 = vmatpush1.bf16.msra.mxu0 %v3968
    %4027 = vmatprep.subr.bf16.mxu0 0
    %4028 = vmatpush1.bf16.msra.mxu0 %v3967
    %4029 = vmatprep.subr.bf16.mxu0 0
    %4030 = vmatpush1.bf16.msra.mxu0 %v3966
    %4031 = vmatprep.subr.bf16.mxu0 0
    %4032 = vmatpush1.bf16.msra.mxu0 %v3965
    %4033 = vmatprep.subr.bf16.mxu0 0
    %4034 = vmatpush1.bf16.msra.mxu0 %v3964
    %4035 = vmatprep.subr.bf16.mxu0 0
    %4036 = vmatpush1.bf16.msra.mxu0 %v3963
    %4037 = vmatprep.subr.bf16.mxu0 0
    %4038 = vmatpush1.bf16.msra.mxu0 %v3962
    %4039 = vmatprep.subr.bf16.mxu0 0
    %4040 = vmatpush1.bf16.msra.mxu0 %v3961
    %4041 = vmatprep.subr.bf16.mxu0 0
    %4042 = vmatpush2.bf16.msra.mxu0 %v3976
    %4043 = vmatprep.subr.bf16.mxu0 0
    %4044 = vmatpush2.bf16.msra.mxu0 %v3975
    %4045 = vmatprep.subr.bf16.mxu0 0
    %4046 = vmatpush2.bf16.msra.mxu0 %v3974
    %4047 = vmatprep.subr.bf16.mxu0 0
    %4048 = vmatpush2.bf16.msra.mxu0 %v3973
    %4049 = vmatprep.subr.bf16.mxu0 0
    %4050 = vmatpush2.bf16.msra.mxu0 %v3972
    %4051 = vmatprep.subr.bf16.mxu0 0
    %4052 = vmatpush2.bf16.msra.mxu0 %v3971
    %4053 = vmatprep.subr.bf16.mxu0 0
    %4054 = vmatpush2.bf16.msra.mxu0 %v3970
    %4055 = vmatprep.subr.bf16.mxu0 0
    %4056 = vmatpush2.bf16.msra.mxu0 %v3969
    %4057 = vmatprep.mubr.bf16.mxu0 %v3759
    %4058 = vmatmul.mubr.bf16.gmra.mxu0 %v3758
    %v4059 = vpop.f32.mrf.mxu0
    %v4060 = vadd.f32 %v3831, %v4059
    %v4061 = vpop.f32.mrf.mxu0
    %v4062 = vpop.f32.mrf.mxu0
    %v4063 = vadd.f32 %v3831, %v4062
    %v4064 = vpop.f32.mrf.mxu0
    %4065 = vdwg.mxu0
    %4066 = vmatprep.subr.bf16.mxu0 0
    %4067 = vmatpush1.bf16.msra.mxu0 %v3984
    %4068 = vmatprep.subr.bf16.mxu0 0
    %4069 = vmatpush1.bf16.msra.mxu0 %v3983
    %4070 = vmatprep.subr.bf16.mxu0 0
    %4071 = vmatpush1.bf16.msra.mxu0 %v3982
    %4072 = vmatprep.subr.bf16.mxu0 0
    %4073 = vmatpush1.bf16.msra.mxu0 %v3981
    %4074 = vmatprep.subr.bf16.mxu0 0
    %4075 = vmatpush1.bf16.msra.mxu0 %v3980
    %4076 = vmatprep.subr.bf16.mxu0 0
    %4077 = vmatpush1.bf16.msra.mxu0 %v3979
    %4078 = vmatprep.subr.bf16.mxu0 0
    %4079 = vmatpush1.bf16.msra.mxu0 %v3978
    %4080 = vmatprep.subr.bf16.mxu0 0
    %4081 = vmatpush1.bf16.msra.mxu0 %v3977
    %4082 = vmatprep.subr.bf16.mxu0 0
    %4083 = vmatpush2.bf16.msra.mxu0 %v3992
    %4084 = vmatprep.subr.bf16.mxu0 0
    %4085 = vmatpush2.bf16.msra.mxu0 %v3991
    %4086 = vmatprep.subr.bf16.mxu0 0
    %4087 = vmatpush2.bf16.msra.mxu0 %v3990
    %4088 = vmatprep.subr.bf16.mxu0 0
    %4089 = vmatpush2.bf16.msra.mxu0 %v3989
    %4090 = vmatprep.subr.bf16.mxu0 0
    %4091 = vmatpush2.bf16.msra.mxu0 %v3988
    %4092 = vmatprep.subr.bf16.mxu0 0
    %4093 = vmatpush2.bf16.msra.mxu0 %v3987
    %4094 = vmatprep.subr.bf16.mxu0 0
    %4095 = vmatpush2.bf16.msra.mxu0 %v3986
    %4096 = vmatprep.subr.bf16.mxu0 0
    %4097 = vmatpush2.bf16.msra.mxu0 %v3985
    %4098 = vmatprep.mubr.bf16.mxu0 %v3761
    %4099 = vmatmul.mubr.bf16.gmra.mxu0 %v3760
    %v4100 = vpop.f32.mrf.mxu0
    %v4101 = vadd.f32 %v4060, %v4100
    %v4102 = vpop.f32.mrf.mxu0
    %v4103 = vpop.f32.mrf.mxu0
    %v4104 = vadd.f32 %v4063, %v4103
    %v4105 = vpop.f32.mrf.mxu0
    %4106 = vdwg.mxu0
    %4107 = vmax.xlane.f32.xlu0 %v4101
    %v4108 = vpop.xlane.xlu0 %4107
    %4109 = vmax.xlane.f32.xlu0 %v4104
    %v4110 = vpop.xlane.xlu0 %4109
    %v4111 = vsub.f32 %v4101, %v4108
    %v4112 = vsub.f32 %v4104, %v4110
    %v4113 = vmul.f32 %v4111, 1.442695
    %v4114 = vpow.pop %v4113
    %v4115 = vmul.f32 %v4112, 1.442695
    %v4116 = vpow.pop %v4115
    %4117 = vadd.xlane.f32.xlu0 %v4114
    %v4118 = vpop.xlane.xlu0 %4117
    %4119 = vadd.xlane.f32.xlu0 %v4116
    %v4120 = vpop.xlane.xlu0 %4119
    %v4121 = vlog2.pop %v4118
    %v4122 = vmul.f32 %v4121, 0.6931472
    %v4123 = vlog2.pop %v4120
    %v4124 = vmul.f32 %v4123, 0.6931472
    %v4125 = vsub.f32 %v4111, %v4122
    %v4126 = vsub.f32 %v4112, %v4124
    %4127 = vst [vmem:[#allocation14] sm:$0xff] %v4125
    %4128 = vst [vmem:[#allocation14 + $0x8] sm:$0xff] %v4126
    // Predicated region
    $region58: #{tpu_custom_call.1} parent=1 // pred_check
      _
    $region59: #{tpu_custom_call.1} parent=1 // pred_check_branch
      %4130 = sbr.rel (0) target = $region61
    $region60: #{tpu_custom_call.1} parent=1 // pred_region
      %s4132 = ssub.s32 256, 256
      %4133 = vsyncadd [#allocation4], %s4132
      %s4134 = sshll.u32 [#allocation14], 4
      %s4135 = int_to_ptr.vmem [resolvable:$true] %s4134
      %4140 = dma.vmem_to_hbm [thread:$0]  %s4135, 256, %s7, [#allocation4], 128, 128, 8
    $region61: #{tpu_custom_call.1} parent=1 // pred_fallthru
      _
    // Predicated region
    $region62: #{tpu_custom_call.1} parent=1 // pred_check
      _
    $region63: #{tpu_custom_call.1} parent=1 // pred_check_branch
      %4142 = sbr.rel (0) target = $region65
    $region64: #{tpu_custom_call.1} parent=1 // pred_region
      %4143 = dma.done [#allocation4], 256
    $region65: #{tpu_custom_call.1} parent=1 // pred_fallthru
      _
    %4144 = vsyncpa [#allocation3], 1
    %4145 = vsyncpa [#allocation6], 1
    %4146 = vsyncpa [#allocation9], 1
    %4147 = vsyncpa [#allocation12], 1
    %4148 = vsyncpa [#allocation4], 1

</llo_original>
